<compile_context>
chip_gen: v5e
topology: v5e:2x2
jax: 0.10.0
libtpu: 0.0.40
codegen_flags: <defaults>
</compile_context>

<pallas_src>
import functools

import numpy as np
import jax
import jax.numpy as jnp
from jax.experimental import pallas as pl
from jax.experimental.pallas import tpu as pltpu

# ----------------------------- configuration --------------------------------
B = 2
N_LATENT = 32
HIDDEN = 32
N_VERTS = 16                      # n_vert_out = 3 * N_VERTS
VIEW_IN, VIEW_OUT = 3, 8
C0 = 16                           # texmod2 reshapes to (C0, 4, 4)
# (cin, cout, h_in, w_in, leaky_relu_after)
CONV_CFG = [
    (16, 16, 4, 4, True),
    (16, 8, 8, 8, True),
    (8, 3, 16, 16, False),        # last conv: no LeakyReLU (matches texmod[-1])
]
TEX_SHP = (32, 32)


# ------------------------------- fused kernel --------------------------------
def _fused_kernel(*refs, conv_cfg):
    """Entire FaceDecoderFrontal forward, fully VMEM-resident.

    Ref order: [face_embs, view,
                wenc, benc, wgeom, bgeom, wview, bview, wtex2, btex2,
                per conv layer: rhs00, rhs01, rhs10, rhs11, P0, P1, bias,
                texbias]
               outputs: [geom, tex_raw(NCHW), tex(NCHW)]
               scratch: [pad_l for each conv layer]
    Activation layout inside the conv stack: rows = (batch, image row),
    lanes = (pixel x, channel).  Last layer: lanes = (channel, pixel x).
    """
    it = iter(refs)
    x_ref, view_ref = next(it), next(it)
    wenc, benc = next(it), next(it)
    wgeom, bgeom = next(it), next(it)
    wview, bview = next(it), next(it)
    wtex2, btex2 = next(it), next(it)
    conv_p = []
    for _ in conv_cfg:
        rhs = [next(it) for _ in range(4)]        # parity order (0,0),(0,1),(1,0),(1,1)
        p0, p1, bias = next(it), next(it), next(it)
        conv_p.append((rhs, p0, p1, bias))
    texbias = next(it)
    geom_ref, raw_ref, tex_ref = next(it), next(it), next(it)
    pads = [next(it) for _ in conv_cfg]

    def dot(a, b):
        return jnp.dot(a, b, preferred_element_type=jnp.float32)

    def lrelu(v):
        return jnp.where(v >= 0.0, v, 0.2 * v)

    x = x_ref[...]
    Bn = x.shape[0]

    # ----------------------------- linear stack ------------------------------
    encout = lrelu(dot(x, wenc[...]) + benc[...])                   # (B, hidden)
    geom_ref[...] = dot(encout, wgeom[...]) + bgeom[...]            # (B, 3*n_verts)
    vout = lrelu(dot(view_ref[...], wview[...]) + bview[...])       # (1, 8)
    encview = jnp.concatenate(
        [encout, jnp.broadcast_to(vout, (Bn, vout.shape[1]))], axis=1)
    # texmod2 weights are column-permuted so t2 lanes are already (y, x, ci)
    t2 = lrelu(dot(encview, wtex2[...]) + btex2[...])               # (B, H0*W0*C0)

    # ------------------- seed layer-1 padded input in VMEM -------------------
    cin0, _, h0, w0, _ = conv_cfg[0]
    pad0 = pads[0]
    pad0[...] = jnp.zeros(pad0.shape, pad0.dtype)
    row_lanes = w0 * cin0
    for b in range(Bn):
        for y in range(h0):
            r = b * (h0 + 2) + 1 + y
            pad0[r:r + 1, cin0:cin0 + row_lanes] = \
                t2[b:b + 1, y * row_lanes:(y + 1) * row_lanes]

    # --------------------------- transposed convs ----------------------------
    cur = None
    for li, (cin, cout, hin, win, leaky) in enumerate(conv_cfg):
        rhs, p0, p1, bias = conv_p[li]
        pad = pads[li]
        if li > 0:
            pad[...] = jnp.zeros(pad.shape, pad.dtype)
            for b in range(Bn):
                pad[b * (hin + 2) + 1:b * (hin + 2) + 1 + hin,
                    cin:cin + win * cin] = cur[b * hin:(b + 1) * hin, :]

        cache = {}

        def patch(ry, rx, pad=pad, hin=hin, win=win, cin=cin, cache=cache):
            key = (ry, rx)
            if key not in cache:
                pieces = [pad[b * (hin + 2) + ry:b * (hin + 2) + ry + hin,
                              rx * cin:rx * cin + win * cin]
                          for b in range(Bn)]
                cache[key] = (pieces[0] if Bn == 1
                              else jnp.concatenate(pieces, axis=0))
            return cache[key]

        rows = []
        for py in range(2):
            acc = None
            for px in range(2):
                taps = []
                for a in range(2):                      # vertical tap
                    ry = 1 if a == 0 else 2 * py
                    for c in range(2):                  # horizontal tap
                        rx = 1 if c == 0 else 2 * px
                        taps.append(patch(ry, rx))
                lhs = jnp.concatenate(taps, axis=1)     # (B*hin, 4*win*cin)
                contrib = dot(lhs, rhs[py * 2 + px][...])
                acc = contrib if acc is None else acc + contrib
            rows.append(acc)                            # (B*hin, out lanes)
        # row interleave (even/odd output rows) via tiny 0/1 matmuls
        nxt = dot(p0[...], rows[0]) + dot(p1[...], rows[1])   # (B*2hin, out lanes)
        nxt = nxt + bias[...]
        if leaky:
            nxt = lrelu(nxt)
        cur = nxt

    # ---------- outputs: last layer lanes are channel-planar (co, x) ---------
    _, cf, hl, wl, _ = conv_cfg[-1]
    hf, wf = 2 * hl, 2 * wl
    texv = 255.0 * (cur + texbias[...] + 0.5)
    for b in range(Bn):
        for co in range(cf):
            raw_ref[b, co, :, :] = cur[b * hf:(b + 1) * hf, co * wf:(co + 1) * wf]
            tex_ref[b, co, :, :] = texv[b * hf:(b + 1) * hf, co * wf:(co + 1) * wf]


# ------------------------- one-time parameter prep ---------------------------
def _build_conv_rhs(w_eff, py, px, win, planar):
    """Per-parity transposed-conv matrix: (4*win*cin, 2*win*cout).

    Column-interleave of the two x-parities is folded in.  `planar=True` emits
    channel-planar output lanes (co, x2) for the last layer; otherwise (x2, co)
    so the result directly feeds the next layer's (pixel, channel) lanes.
    """
    cin, cout = w_eff.shape[0], w_eff.shape[1]
    n_out = 2 * win * cout
    blocks = []
    for a in range(2):
        ky = 1 + py if a == 0 else 3 - 3 * py
        for c in range(2):
            kx = 1 + px if c == 0 else 3 - 3 * px
            wk = np.asarray(w_eff[:, :, ky, kx], np.float32)      # (cin, cout)
            m = np.zeros((win * cin, n_out), np.float32)
            for xx in range(win):
                x2 = 2 * xx + px
                if planar:
                    for co in range(cout):
                        m[xx * cin:(xx + 1) * cin, co * 2 * win + x2] = wk[:, co]
                else:
                    m[xx * cin:(xx + 1) * cin, x2 * cout:(x2 + 1) * cout] = wk
            blocks.append(m)
    return np.concatenate(blocks, axis=0)


def prepare_fused_params(params):
    """Fold/relayout all weights once; returns (view2d, flat tuple of kernel args)."""
    flat = []

    def add(a):
        flat.append(jnp.asarray(a, jnp.float32))

    h0, w0 = CONV_CFG[0][2], CONV_CFG[0][3]
    # texmod2 column permutation: new lane (y, x, ci)  <-  old lane (ci, y, x)
    perm = np.empty(C0 * h0 * w0, np.int32)
    for y in range(h0):
        for xx in range(w0):
            for ci in range(C0):
                perm[y * w0 * C0 + xx * C0 + ci] = ci * h0 * w0 + y * w0 + xx

    for name, p in (("enc", None), ("geom", None), ("view", None), ("tex2", perm)):
        w, bvec = params[name]
        wt = np.asarray(w, np.float32).T
        bb = np.asarray(bvec, np.float32).reshape(1, -1)
        if p is not None:
            wt = wt[:, p]
            bb = bb[:, p]
        add(wt)
        add(bb)

    n_layers = len(CONV_CFG)
    for li, ((w_eff, ub), (cin, cout, hin, win, _)) in enumerate(
            zip(params["convs"], CONV_CFG)):
        planar = (li == n_layers - 1)
        w_np = np.asarray(w_eff, np.float32)
        for py in range(2):
            for px in range(2):
                add(_build_conv_rhs(w_np, py, px, win, planar))
        for py in range(2):                      # 0/1 row-interleave matrices
            pmat = np.zeros((B * 2 * hin, B * hin), np.float32)
            for b in range(B):
                for y in range(hin):
                    pmat[b * 2 * hin + 2 * y + py, b * hin + y] = 1.0
            add(pmat)
        ub_np = np.asarray(ub, np.float32)       # (cout, 2h, 2w) untied bias
        if planar:
            bfull = np.transpose(ub_np, (1, 0, 2)).reshape(2 * hin, cout * 2 * win)
        else:
            bfull = np.transpose(ub_np, (1, 2, 0)).reshape(2 * hin, 2 * win * cout)
        add(np.tile(bfull, (B, 1)))

    bias_np = np.asarray(params["bias"], np.float32)              # (3, 32, 32)
    add(np.tile(np.transpose(bias_np, (1, 0, 2)).reshape(TEX_SHP[0], -1), (B, 1)))

    view2d = jnp.asarray(params["frontal_view"], jnp.float32).reshape(1, VIEW_IN)
    return view2d, tuple(flat)


# ------------------------------ fused forward --------------------------------
@jax.jit
def face_decoder_frontal(face_embs, view2d, flat_params):
    bn = face_embs.shape[0]
    cfg = tuple(CONV_CFG)
    cout_l, hl, wl = cfg[-1][1], 2 * cfg[-1][2], 2 * cfg[-1][3]
    kern = functools.partial(_fused_kernel, conv_cfg=cfg)
    geom, raw, tex = pl.pallas_call(
        kern,
        out_shape=(
            jax.ShapeDtypeStruct((bn, 3 * N_VERTS), jnp.float32),
            jax.ShapeDtypeStruct((bn, cout_l, hl, wl), jnp.float32),   # NCHW
            jax.ShapeDtypeStruct((bn, cout_l, hl, wl), jnp.float32),   # NCHW
        ),
        scratch_shapes=[
            pltpu.VMEM((bn * (h + 2), (w + 2) * cin), jnp.float32)     # padded inputs
            for (cin, _, h, w, _) in cfg
        ],
        # TODO(synk): on v7x a 2-TensorCore split of the final 32x32 rows would be
        # possible, but the workload is dispatch-bound so it is intentionally omitted.
    )(face_embs, view2d, *flat_params)
    return {
        "face_geom": geom.reshape(bn, -1, 3),
        "face_tex_raw": raw,
        "face_tex": tex,
    }


# --------------------------- deterministic params -----------------------------
def make_linear_params(key, in_dim, out_dim, gain):
    k1, k2, k3 = jax.random.split(key, 3)
    lim = gain * np.sqrt(6.0 / (in_dim + out_dim))
    v = jax.random.uniform(k1, (out_dim, in_dim), jnp.float32, -lim, lim)
    g = jax.random.uniform(k2, (out_dim,), jnp.float32, 0.5, 1.5)
    b = 0.01 * jax.random.normal(k3, (out_dim,), jnp.float32)
    # LinearWN: per-output-row weight normalization (folded to effective weight)
    w = g[:, None] * v / jnp.linalg.norm(v, axis=1, keepdims=True)
    return w, b


def make_convt_params(key, cin, cout, hout, wout, gain):
    k1, k2, k3 = jax.random.split(key, 3)
    fan_in, fan_out = cin * 16, cout * 16
    lim = gain * np.sqrt(6.0 / (fan_in + fan_out))
    v = jax.random.uniform(k1, (cin, cout, 4, 4), jnp.float32, -lim, lim)
    g = jax.random.uniform(k2, (cout,), jnp.float32, 0.5, 1.5)
    # ConvTranspose2dWNUB: per-output-channel weight normalization
    nrm = jnp.sqrt(jnp.sum(v * v, axis=(0, 2, 3)))
    w = g[None, :, None, None] * v / nrm[None, :, None, None]
    ub = 0.01 * jax.random.normal(k3, (cout, hout, wout), jnp.float32)   # untied bias
    return w, ub


# ------------------------------ pure-JAX reference ----------------------------
def _leaky(x, s):
    return jnp.where(x >= 0, x, s * x)


def reference_forward(face_embs, params):
    bn = face_embs.shape[0]
    view = jnp.broadcast_to(params["frontal_view"][None], (bn, VIEW_IN))

    def lin(x, w, b):
        return x @ w.T + b

    encout = _leaky(lin(face_embs, *params["enc"]), 0.2)
    geomout = lin(encout, *params["geom"])
    viewout = _leaky(lin(view, *params["view"]), 0.2)
    encview = jnp.concatenate([encout, viewout], axis=1)
    t = _leaky(lin(encview, *params["tex2"]), 0.2)
    t = t.reshape(bn, C0, 4, 4).transpose(0, 2, 3, 1)
    for (w_pt, ub), (_, _, _, _, leaky) in zip(params["convs"], CONV_CFG):
        rhs = jnp.transpose(w_pt[:, :, ::-1, ::-1], (2, 3, 0, 1))        # HWIO, flipped
        t = jax.lax.conv_general_dilated(
            t, rhs, window_strides=(1, 1), padding=((2, 2), (2, 2)),
            lhs_dilation=(2, 2), dimension_numbers=("NHWC", "HWIO", "NHWC"))
        t = t + jnp.transpose(ub, (1, 2, 0))[None]
        if leaky:
            t = _leaky(t, 0.2)
    tex_raw = jnp.transpose(t, (0, 3, 1, 2))
    tex = 255.0 * (tex_raw + params["bias"][None] + 0.5)
    return {"face_geom": geomout.reshape(bn, -1, 3),
            "face_tex_raw": tex_raw, "face_tex": tex}


def _check(a, b, name):
    err = float(jnp.max(jnp.abs(a - b)))
    scale = float(jnp.max(jnp.abs(b))) + 1e-6
    assert err <= 2e-2 * scale, f"{name}: max_err={err} scale={scale}"


# ---------------------------------- main --------------------------------------
if __name__ == "__main__":
    key = jax.random.PRNGKey(0)
    keys = jax.random.split(key, 13)
    gain = float(np.sqrt(2.0 / (1.0 + 0.2 ** 2)))     # leaky_relu(0.2) glorot gain

    params = {
        "enc": make_linear_params(keys[0], N_LATENT, HIDDEN, gain),
        "geom": make_linear_params(keys[1], HIDDEN, 3 * N_VERTS, gain),
        "view": make_linear_params(keys[2], VIEW_IN, VIEW_OUT, gain),
        "tex2": make_linear_params(keys[3], HIDDEN + VIEW_OUT, C0 * 4 * 4, gain),
        "convs": [
            make_convt_params(keys[4 + i], cin, cout, 2 * h, 2 * w,
                              gain if leaky else 1.0)
            for i, (cin, cout, h, w, leaky) in enumerate(CONV_CFG)
        ],
        # module init zeroes self.bias; use a small random bias here so the
        # final bias path is actually exercised by the check.
        "bias": 0.01 * jax.random.normal(keys[12], (3,) + TEX_SHP, jnp.float32),
        "frontal_view": jax.random.normal(keys[10], (VIEW_IN,), jnp.float32),
    }

    face_embs = jax.random.normal(keys[11], (B, N_LATENT), jnp.float32)

    view2d, flat_params = prepare_fused_params(params)     # one-time weight prep
    out = face_decoder_frontal(face_embs, view2d, flat_params)
    jax.block_until_ready(out)

    ref = reference_forward(face_embs, params)
    assert out["face_geom"].shape == (B, N_VERTS, 3)
    assert out["face_tex_raw"].shape == (B, 3) + TEX_SHP
    assert out["face_tex"].shape == (B, 3) + TEX_SHP
    for k in ("face_geom", "face_tex_raw", "face_tex"):
        _check(out[k], ref[k], k)

    print("KERNEL_OK")
</pallas_src>

<mosaic_0001>
module attributes {stable_mosaic.version = 11 : i64} {
  func.func @_fused_kernel(%arg0: memref<2x32xf32, #tpu.memory_space<vmem>>, %arg1: memref<1x3xf32, #tpu.memory_space<vmem>>, %arg2: memref<32x32xf32, #tpu.memory_space<vmem>>, %arg3: memref<1x32xf32, #tpu.memory_space<vmem>>, %arg4: memref<32x48xf32, #tpu.memory_space<vmem>>, %arg5: memref<1x48xf32, #tpu.memory_space<vmem>>, %arg6: memref<3x8xf32, #tpu.memory_space<vmem>>, %arg7: memref<1x8xf32, #tpu.memory_space<vmem>>, %arg8: memref<40x256xf32, #tpu.memory_space<vmem>>, %arg9: memref<1x256xf32, #tpu.memory_space<vmem>>, %arg10: memref<256x128xf32, #tpu.memory_space<vmem>>, %arg11: memref<256x128xf32, #tpu.memory_space<vmem>>, %arg12: memref<256x128xf32, #tpu.memory_space<vmem>>, %arg13: memref<256x128xf32, #tpu.memory_space<vmem>>, %arg14: memref<16x8xf32, #tpu.memory_space<vmem>>, %arg15: memref<16x8xf32, #tpu.memory_space<vmem>>, %arg16: memref<16x128xf32, #tpu.memory_space<vmem>>, %arg17: memref<512x128xf32, #tpu.memory_space<vmem>>, %arg18: memref<512x128xf32, #tpu.memory_space<vmem>>, %arg19: memref<512x128xf32, #tpu.memory_space<vmem>>, %arg20: memref<512x128xf32, #tpu.memory_space<vmem>>, %arg21: memref<32x16xf32, #tpu.memory_space<vmem>>, %arg22: memref<32x16xf32, #tpu.memory_space<vmem>>, %arg23: memref<32x128xf32, #tpu.memory_space<vmem>>, %arg24: memref<512x96xf32, #tpu.memory_space<vmem>>, %arg25: memref<512x96xf32, #tpu.memory_space<vmem>>, %arg26: memref<512x96xf32, #tpu.memory_space<vmem>>, %arg27: memref<512x96xf32, #tpu.memory_space<vmem>>, %arg28: memref<64x32xf32, #tpu.memory_space<vmem>>, %arg29: memref<64x32xf32, #tpu.memory_space<vmem>>, %arg30: memref<64x96xf32, #tpu.memory_space<vmem>>, %arg31: memref<64x96xf32, #tpu.memory_space<vmem>>, %arg32: memref<2x48xf32, #tpu.memory_space<vmem>>, %arg33: memref<2x3x32x32xf32, #tpu.memory_space<vmem>>, %arg34: memref<2x3x32x32xf32, #tpu.memory_space<vmem>>, %arg35: memref<12x96xf32, #tpu.memory_space<vmem>>, %arg36: memref<20x160xf32, #tpu.memory_space<vmem>>, %arg37: memref<36x144xf32, #tpu.memory_space<vmem>>) attributes {dimension_semantics = [], scalar_prefetch = 0 : i64, scratch_operands = 3 : i64, tpu.core_type = #tpu.core_type<tc>} {
    %c0 = arith.constant 0 : index
    %c0_0 = arith.constant 0 : index
    %0 = vector.load %arg0[%c0, %c0_0] : memref<2x32xf32, #tpu.memory_space<vmem>>, vector<2x32xf32>
    %c0_1 = arith.constant 0 : index
    %c0_2 = arith.constant 0 : index
    %1 = vector.load %arg2[%c0_1, %c0_2] : memref<32x32xf32, #tpu.memory_space<vmem>>, vector<32x32xf32>
    %cst = arith.constant dense<0.000000e+00> : vector<2x32xf32>
    %2 = tpu.matmul %0, %1, %cst {dimension_numbers = #tpu.dot_dimension_numbers<[1], [0], [0], [1], [0, 0, 1, 1], [], []>} : vector<2x32xf32>, vector<32x32xf32>, vector<2x32xf32> -> vector<2x32xf32>
    %c0_3 = arith.constant 0 : index
    %c0_4 = arith.constant 0 : index
    %3 = vector.load %arg3[%c0_3, %c0_4] : memref<1x32xf32, #tpu.memory_space<vmem>>, vector<1x32xf32>
    %4 = vector.broadcast %3 : vector<1x32xf32> to vector<2x32xf32>
    %5 = arith.addf %2, %4 : vector<2x32xf32>
    %cst_5 = arith.constant 0.000000e+00 : f32
    %6 = vector.broadcast %cst_5 : f32 to vector<2x32xf32>
    %7 = arith.cmpf oge, %5, %6 : vector<2x32xf32>
    %cst_6 = arith.constant 2.000000e-01 : f32
    %8 = vector.broadcast %cst_6 : f32 to vector<2x32xf32>
    %9 = arith.mulf %8, %5 : vector<2x32xf32>
    %10 = arith.select %7, %5, %9 : vector<2x32xi1>, vector<2x32xf32>
    %c0_7 = arith.constant 0 : index
    %c0_8 = arith.constant 0 : index
    %11 = vector.load %arg4[%c0_7, %c0_8] : memref<32x48xf32, #tpu.memory_space<vmem>>, vector<32x48xf32>
    %cst_9 = arith.constant dense<0.000000e+00> : vector<2x48xf32>
    %12 = tpu.matmul %10, %11, %cst_9 {dimension_numbers = #tpu.dot_dimension_numbers<[1], [0], [0], [1], [0, 0, 1, 1], [], []>} : vector<2x32xf32>, vector<32x48xf32>, vector<2x48xf32> -> vector<2x48xf32>
    %c0_10 = arith.constant 0 : index
    %c0_11 = arith.constant 0 : index
    %13 = vector.load %arg5[%c0_10, %c0_11] : memref<1x48xf32, #tpu.memory_space<vmem>>, vector<1x48xf32>
    %14 = vector.broadcast %13 : vector<1x48xf32> to vector<2x48xf32>
    %15 = arith.addf %12, %14 : vector<2x48xf32>
    %c0_12 = arith.constant 0 : index
    %c0_13 = arith.constant 0 : index
    %16 = vector.load %arg32[%c0_12, %c0_13] : memref<2x48xf32, #tpu.memory_space<vmem>>, vector<2x48xf32>
    tpu.vector_store %arg32[%c0_12, %c0_13], %15 {strides = array<i32>} : memref<2x48xf32, #tpu.memory_space<vmem>>, vector<2x48xf32>,
    %c0_14 = arith.constant 0 : index
    %c0_15 = arith.constant 0 : index
    %17 = vector.load %arg1[%c0_14, %c0_15] : memref<1x3xf32, #tpu.memory_space<vmem>>, vector<1x3xf32>
    %c0_16 = arith.constant 0 : index
    %c0_17 = arith.constant 0 : index
    %18 = vector.load %arg6[%c0_16, %c0_17] : memref<3x8xf32, #tpu.memory_space<vmem>>, vector<3x8xf32>
    %cst_18 = arith.constant dense<0.000000e+00> : vector<1x8xf32>
    %19 = tpu.matmul %17, %18, %cst_18 {dimension_numbers = #tpu.dot_dimension_numbers<[1], [0], [0], [1], [0, 0, 1, 1], [], []>} : vector<1x3xf32>, vector<3x8xf32>, vector<1x8xf32> -> vector<1x8xf32>
    %c0_19 = arith.constant 0 : index
    %c0_20 = arith.constant 0 : index
    %20 = vector.load %arg7[%c0_19, %c0_20] : memref<1x8xf32, #tpu.memory_space<vmem>>, vector<1x8xf32>
    %21 = arith.addf %19, %20 : vector<1x8xf32>
    %cst_21 = arith.constant 0.000000e+00 : f32
    %22 = vector.broadcast %cst_21 : f32 to vector<1x8xf32>
    %23 = arith.cmpf oge, %21, %22 : vector<1x8xf32>
    %cst_22 = arith.constant 2.000000e-01 : f32
    %24 = vector.broadcast %cst_22 : f32 to vector<1x8xf32>
    %25 = arith.mulf %24, %21 : vector<1x8xf32>
    %26 = arith.select %23, %21, %25 : vector<1x8xi1>, vector<1x8xf32>
    %27 = vector.shape_cast %26 : vector<1x8xf32> to vector<1x8xf32>
    %28 = vector.broadcast %27 : vector<1x8xf32> to vector<2x8xf32>
    %29 = tpu.concatenate %10, %28 in 1 : vector<2x32xf32>, vector<2x8xf32> -> vector<2x40xf32>
    %c0_23 = arith.constant 0 : index
    %c0_24 = arith.constant 0 : index
    %30 = vector.load %arg8[%c0_23, %c0_24] : memref<40x256xf32, #tpu.memory_space<vmem>>, vector<40x256xf32>
    %cst_25 = arith.constant dense<0.000000e+00> : vector<2x256xf32>
    %31 = tpu.matmul %29, %30, %cst_25 {dimension_numbers = #tpu.dot_dimension_numbers<[1], [0], [0], [1], [0, 0, 1, 1], [], []>} : vector<2x40xf32>, vector<40x256xf32>, vector<2x256xf32> -> vector<2x256xf32>
    %c0_26 = arith.constant 0 : index
    %c0_27 = arith.constant 0 : index
    %32 = vector.load %arg9[%c0_26, %c0_27] : memref<1x256xf32, #tpu.memory_space<vmem>>, vector<1x256xf32>
    %33 = vector.broadcast %32 : vector<1x256xf32> to vector<2x256xf32>
    %34 = arith.addf %31, %33 : vector<2x256xf32>
    %cst_28 = arith.constant 0.000000e+00 : f32
    %35 = vector.broadcast %cst_28 : f32 to vector<2x256xf32>
    %36 = arith.cmpf oge, %34, %35 : vector<2x256xf32>
    %cst_29 = arith.constant 2.000000e-01 : f32
    %37 = vector.broadcast %cst_29 : f32 to vector<2x256xf32>
    %38 = arith.mulf %37, %34 : vector<2x256xf32>
    %39 = arith.select %36, %34, %38 : vector<2x256xi1>, vector<2x256xf32>
    %cst_30 = arith.constant 0.000000e+00 : f32
    %40 = vector.broadcast %cst_30 : f32 to vector<12x96xf32>
    %c0_31 = arith.constant 0 : index
    %c0_32 = arith.constant 0 : index
    %41 = vector.load %arg35[%c0_31, %c0_32] : memref<12x96xf32, #tpu.memory_space<vmem>>, vector<12x96xf32>
    tpu.vector_store %arg35[%c0_31, %c0_32], %40 {strides = array<i32>} : memref<12x96xf32, #tpu.memory_space<vmem>>, vector<12x96xf32>,
    %42 = vector.extract_strided_slice %39 {offsets = [0, 0], sizes = [1, 64], strides = [1, 1]} : vector<2x256xf32> to vector<1x64xf32>
    %c1 = arith.constant 1 : index
    %c16 = arith.constant 16 : index
    %43 = vector.load %arg35[%c1, %c16] : memref<12x96xf32, #tpu.memory_space<vmem>>, vector<1x64xf32>
    tpu.vector_store %arg35[%c1, %c16], %42 {strides = array<i32>} : memref<12x96xf32, #tpu.memory_space<vmem>>, vector<1x64xf32>,
    %44 = vector.extract_strided_slice %39 {offsets = [0, 64], sizes = [1, 64], strides = [1, 1]} : vector<2x256xf32> to vector<1x64xf32>
    %c2 = arith.constant 2 : index
    %c16_33 = arith.constant 16 : index
    %45 = vector.load %arg35[%c2, %c16_33] : memref<12x96xf32, #tpu.memory_space<vmem>>, vector<1x64xf32>
    tpu.vector_store %arg35[%c2, %c16_33], %44 {strides = array<i32>} : memref<12x96xf32, #tpu.memory_space<vmem>>, vector<1x64xf32>,
    %46 = vector.extract_strided_slice %39 {offsets = [0, 128], sizes = [1, 64], strides = [1, 1]} : vector<2x256xf32> to vector<1x64xf32>
    %c3 = arith.constant 3 : index
    %c16_34 = arith.constant 16 : index
    %47 = vector.load %arg35[%c3, %c16_34] : memref<12x96xf32, #tpu.memory_space<vmem>>, vector<1x64xf32>
    tpu.vector_store %arg35[%c3, %c16_34], %46 {strides = array<i32>} : memref<12x96xf32, #tpu.memory_space<vmem>>, vector<1x64xf32>,
    %48 = vector.extract_strided_slice %39 {offsets = [0, 192], sizes = [1, 64], strides = [1, 1]} : vector<2x256xf32> to vector<1x64xf32>
    %c4 = arith.constant 4 : index
    %c16_35 = arith.constant 16 : index
    %49 = vector.load %arg35[%c4, %c16_35] : memref<12x96xf32, #tpu.memory_space<vmem>>, vector<1x64xf32>
    tpu.vector_store %arg35[%c4, %c16_35], %48 {strides = array<i32>} : memref<12x96xf32, #tpu.memory_space<vmem>>, vector<1x64xf32>,
    %50 = vector.extract_strided_slice %39 {offsets = [1, 0], sizes = [1, 64], strides = [1, 1]} : vector<2x256xf32> to vector<1x64xf32>
    %c7 = arith.constant 7 : index
    %c16_36 = arith.constant 16 : index
    %51 = vector.load %arg35[%c7, %c16_36] : memref<12x96xf32, #tpu.memory_space<vmem>>, vector<1x64xf32>
    tpu.vector_store %arg35[%c7, %c16_36], %50 {strides = array<i32>} : memref<12x96xf32, #tpu.memory_space<vmem>>, vector<1x64xf32>,
    %52 = vector.extract_strided_slice %39 {offsets = [1, 64], sizes = [1, 64], strides = [1, 1]} : vector<2x256xf32> to vector<1x64xf32>
    %c8 = arith.constant 8 : index
    %c16_37 = arith.constant 16 : index
    %53 = vector.load %arg35[%c8, %c16_37] : memref<12x96xf32, #tpu.memory_space<vmem>>, vector<1x64xf32>
    tpu.vector_store %arg35[%c8, %c16_37], %52 {strides = array<i32>} : memref<12x96xf32, #tpu.memory_space<vmem>>, vector<1x64xf32>,
    %54 = vector.extract_strided_slice %39 {offsets = [1, 128], sizes = [1, 64], strides = [1, 1]} : vector<2x256xf32> to vector<1x64xf32>
    %c9 = arith.constant 9 : index
    %c16_38 = arith.constant 16 : index
    %55 = vector.load %arg35[%c9, %c16_38] : memref<12x96xf32, #tpu.memory_space<vmem>>, vector<1x64xf32>
    tpu.vector_store %arg35[%c9, %c16_38], %54 {strides = array<i32>} : memref<12x96xf32, #tpu.memory_space<vmem>>, vector<1x64xf32>,
    %56 = vector.extract_strided_slice %39 {offsets = [1, 192], sizes = [1, 64], strides = [1, 1]} : vector<2x256xf32> to vector<1x64xf32>
    %c10 = arith.constant 10 : index
    %c16_39 = arith.constant 16 : index
    %57 = vector.load %arg35[%c10, %c16_39] : memref<12x96xf32, #tpu.memory_space<vmem>>, vector<1x64xf32>
    tpu.vector_store %arg35[%c10, %c16_39], %56 {strides = array<i32>} : memref<12x96xf32, #tpu.memory_space<vmem>>, vector<1x64xf32>,
    %c1_40 = arith.constant 1 : index
    %c16_41 = arith.constant 16 : index
    %58 = vector.load %arg35[%c1_40, %c16_41] : memref<12x96xf32, #tpu.memory_space<vmem>>, vector<4x64xf32>
    %c7_42 = arith.constant 7 : index
    %c16_43 = arith.constant 16 : index
    %59 = vector.load %arg35[%c7_42, %c16_43] : memref<12x96xf32, #tpu.memory_space<vmem>>, vector<4x64xf32>
    %60 = tpu.concatenate %58, %59 in 0 : vector<4x64xf32>, vector<4x64xf32> -> vector<8x64xf32>
    %c1_44 = arith.constant 1 : index
    %c0_45 = arith.constant 0 : index
    %61 = vector.load %arg35[%c1_44, %c0_45] : memref<12x96xf32, #tpu.memory_space<vmem>>, vector<4x64xf32>
    %c7_46 = arith.constant 7 : index
    %c0_47 = arith.constant 0 : index
    %62 = vector.load %arg35[%c7_46, %c0_47] : memref<12x96xf32, #tpu.memory_space<vmem>>, vector<4x64xf32>
    %63 = tpu.concatenate %61, %62 in 0 : vector<4x64xf32>, vector<4x64xf32> -> vector<8x64xf32>
    %c0_48 = arith.constant 0 : index
    %c16_49 = arith.constant 16 : index
    %64 = vector.load %arg35[%c0_48, %c16_49] : memref<12x96xf32, #tpu.memory_space<vmem>>, vector<4x64xf32>
    %c6 = arith.constant 6 : index
    %c16_50 = arith.constant 16 : index
    %65 = vector.load %arg35[%c6, %c16_50] : memref<12x96xf32, #tpu.memory_space<vmem>>, vector<4x64xf32>
    %66 = tpu.concatenate %64, %65 in 0 : vector<4x64xf32>, vector<4x64xf32> -> vector<8x64xf32>
    %c0_51 = arith.constant 0 : index
    %c0_52 = arith.constant 0 : index
    %67 = vector.load %arg35[%c0_51, %c0_52] : memref<12x96xf32, #tpu.memory_space<vmem>>, vector<4x64xf32>
    %c6_53 = arith.constant 6 : index
    %c0_54 = arith.constant 0 : index
    %68 = vector.load %arg35[%c6_53, %c0_54] : memref<12x96xf32, #tpu.memory_space<vmem>>, vector<4x64xf32>
    %69 = tpu.concatenate %67, %68 in 0 : vector<4x64xf32>, vector<4x64xf32> -> vector<8x64xf32>
    %70 = tpu.concatenate %60, %63, %66, %69 in 1 : vector<8x64xf32>, vector<8x64xf32>, vector<8x64xf32>, vector<8x64xf32> -> vector<8x256xf32>
    %c0_55 = arith.constant 0 : index
    %c0_56 = arith.constant 0 : index
    %71 = vector.load %arg10[%c0_55, %c0_56] : memref<256x128xf32, #tpu.memory_space<vmem>>, vector<256x128xf32>
    %cst_57 = arith.constant dense<0.000000e+00> : vector<8x128xf32>
    %72 = tpu.matmul %70, %71, %cst_57 {dimension_numbers = #tpu.dot_dimension_numbers<[1], [0], [0], [1], [0, 0, 1, 1], [], []>} : vector<8x256xf32>, vector<256x128xf32>, vector<8x128xf32> -> vector<8x128xf32>
    %c1_58 = arith.constant 1 : index
    %c32 = arith.constant 32 : index
    %73 = vector.load %arg35[%c1_58, %c32] : memref<12x96xf32, #tpu.memory_space<vmem>>, vector<4x64xf32>
    %c7_59 = arith.constant 7 : index
    %c32_60 = arith.constant 32 : index
    %74 = vector.load %arg35[%c7_59, %c32_60] : memref<12x96xf32, #tpu.memory_space<vmem>>, vector<4x64xf32>
    %75 = tpu.concatenate %73, %74 in 0 : vector<4x64xf32>, vector<4x64xf32> -> vector<8x64xf32>
    %c0_61 = arith.constant 0 : index
    %c32_62 = arith.constant 32 : index
    %76 = vector.load %arg35[%c0_61, %c32_62] : memref<12x96xf32, #tpu.memory_space<vmem>>, vector<4x64xf32>
    %c6_63 = arith.constant 6 : index
    %c32_64 = arith.constant 32 : index
    %77 = vector.load %arg35[%c6_63, %c32_64] : memref<12x96xf32, #tpu.memory_space<vmem>>, vector<4x64xf32>
    %78 = tpu.concatenate %76, %77 in 0 : vector<4x64xf32>, vector<4x64xf32> -> vector<8x64xf32>
    %79 = tpu.concatenate %60, %75, %66, %78 in 1 : vector<8x64xf32>, vector<8x64xf32>, vector<8x64xf32>, vector<8x64xf32> -> vector<8x256xf32>
    %c0_65 = arith.constant 0 : index
    %c0_66 = arith.constant 0 : index
    %80 = vector.load %arg11[%c0_65, %c0_66] : memref<256x128xf32, #tpu.memory_space<vmem>>, vector<256x128xf32>
    %cst_67 = arith.constant dense<0.000000e+00> : vector<8x128xf32>
    %81 = tpu.matmul %79, %80, %cst_67 {dimension_numbers = #tpu.dot_dimension_numbers<[1], [0], [0], [1], [0, 0, 1, 1], [], []>} : vector<8x256xf32>, vector<256x128xf32>, vector<8x128xf32> -> vector<8x128xf32>
    %82 = arith.addf %72, %81 : vector<8x128xf32>
    %c2_68 = arith.constant 2 : index
    %c16_69 = arith.constant 16 : index
    %83 = vector.load %arg35[%c2_68, %c16_69] : memref<12x96xf32, #tpu.memory_space<vmem>>, vector<4x64xf32>
    %c8_70 = arith.constant 8 : index
    %c16_71 = arith.constant 16 : index
    %84 = vector.load %arg35[%c8_70, %c16_71] : memref<12x96xf32, #tpu.memory_space<vmem>>, vector<4x64xf32>
    %85 = tpu.concatenate %83, %84 in 0 : vector<4x64xf32>, vector<4x64xf32> -> vector<8x64xf32>
    %c2_72 = arith.constant 2 : index
    %c0_73 = arith.constant 0 : index
    %86 = vector.load %arg35[%c2_72, %c0_73] : memref<12x96xf32, #tpu.memory_space<vmem>>, vector<4x64xf32>
    %c8_74 = arith.constant 8 : index
    %c0_75 = arith.constant 0 : index
    %87 = vector.load %arg35[%c8_74, %c0_75] : memref<12x96xf32, #tpu.memory_space<vmem>>, vector<4x64xf32>
    %88 = tpu.concatenate %86, %87 in 0 : vector<4x64xf32>, vector<4x64xf32> -> vector<8x64xf32>
    %89 = tpu.concatenate %60, %63, %85, %88 in 1 : vector<8x64xf32>, vector<8x64xf32>, vector<8x64xf32>, vector<8x64xf32> -> vector<8x256xf32>
    %c0_76 = arith.constant 0 : index
    %c0_77 = arith.constant 0 : index
    %90 = vector.load %arg12[%c0_76, %c0_77] : memref<256x128xf32, #tpu.memory_space<vmem>>, vector<256x128xf32>
    %cst_78 = arith.constant dense<0.000000e+00> : vector<8x128xf32>
    %91 = tpu.matmul %89, %90, %cst_78 {dimension_numbers = #tpu.dot_dimension_numbers<[1], [0], [0], [1], [0, 0, 1, 1], [], []>} : vector<8x256xf32>, vector<256x128xf32>, vector<8x128xf32> -> vector<8x128xf32>
    %c2_79 = arith.constant 2 : index
    %c32_80 = arith.constant 32 : index
    %92 = vector.load %arg35[%c2_79, %c32_80] : memref<12x96xf32, #tpu.memory_space<vmem>>, vector<4x64xf32>
    %c8_81 = arith.constant 8 : index
    %c32_82 = arith.constant 32 : index
    %93 = vector.load %arg35[%c8_81, %c32_82] : memref<12x96xf32, #tpu.memory_space<vmem>>, vector<4x64xf32>
    %94 = tpu.concatenate %92, %93 in 0 : vector<4x64xf32>, vector<4x64xf32> -> vector<8x64xf32>
    %95 = tpu.concatenate %60, %75, %85, %94 in 1 : vector<8x64xf32>, vector<8x64xf32>, vector<8x64xf32>, vector<8x64xf32> -> vector<8x256xf32>
    %c0_83 = arith.constant 0 : index
    %c0_84 = arith.constant 0 : index
    %96 = vector.load %arg13[%c0_83, %c0_84] : memref<256x128xf32, #tpu.memory_space<vmem>>, vector<256x128xf32>
    %cst_85 = arith.constant dense<0.000000e+00> : vector<8x128xf32>
    %97 = tpu.matmul %95, %96, %cst_85 {dimension_numbers = #tpu.dot_dimension_numbers<[1], [0], [0], [1], [0, 0, 1, 1], [], []>} : vector<8x256xf32>, vector<256x128xf32>, vector<8x128xf32> -> vector<8x128xf32>
    %98 = arith.addf %91, %97 : vector<8x128xf32>
    %c0_86 = arith.constant 0 : index
    %c0_87 = arith.constant 0 : index
    %99 = vector.load %arg14[%c0_86, %c0_87] : memref<16x8xf32, #tpu.memory_space<vmem>>, vector<16x8xf32>
    %cst_88 = arith.constant dense<0.000000e+00> : vector<16x128xf32>
    %100 = tpu.matmul %99, %82, %cst_88 {dimension_numbers = #tpu.dot_dimension_numbers<[1], [0], [0], [1], [0, 0, 1, 1], [], []>} : vector<16x8xf32>, vector<8x128xf32>, vector<16x128xf32> -> vector<16x128xf32>
    %c0_89 = arith.constant 0 : index
    %c0_90 = arith.constant 0 : index
    %101 = vector.load %arg15[%c0_89, %c0_90] : memref<16x8xf32, #tpu.memory_space<vmem>>, vector<16x8xf32>
    %cst_91 = arith.constant dense<0.000000e+00> : vector<16x128xf32>
    %102 = tpu.matmul %101, %98, %cst_91 {dimension_numbers = #tpu.dot_dimension_numbers<[1], [0], [0], [1], [0, 0, 1, 1], [], []>} : vector<16x8xf32>, vector<8x128xf32>, vector<16x128xf32> -> vector<16x128xf32>
    %103 = arith.addf %100, %102 : vector<16x128xf32>
    %c0_92 = arith.constant 0 : index
    %c0_93 = arith.constant 0 : index
    %104 = vector.load %arg16[%c0_92, %c0_93] : memref<16x128xf32, #tpu.memory_space<vmem>>, vector<16x128xf32>
    %105 = arith.addf %103, %104 : vector<16x128xf32>
    %cst_94 = arith.constant 0.000000e+00 : f32
    %106 = vector.broadcast %cst_94 : f32 to vector<16x128xf32>
    %107 = arith.cmpf oge, %105, %106 : vector<16x128xf32>
    %cst_95 = arith.constant 2.000000e-01 : f32
    %108 = vector.broadcast %cst_95 : f32 to vector<16x128xf32>
    %109 = arith.mulf %108, %105 : vector<16x128xf32>
    %110 = arith.select %107, %105, %109 : vector<16x128xi1>, vector<16x128xf32>
    %cst_96 = arith.constant 0.000000e+00 : f32
    %111 = vector.broadcast %cst_96 : f32 to vector<20x160xf32>
    %c0_97 = arith.constant 0 : index
    %c0_98 = arith.constant 0 : index
    %112 = vector.load %arg36[%c0_97, %c0_98] : memref<20x160xf32, #tpu.memory_space<vmem>>, vector<20x160xf32>
    tpu.vector_store %arg36[%c0_97, %c0_98], %111 {strides = array<i32>} : memref<20x160xf32, #tpu.memory_space<vmem>>, vector<20x160xf32>,
    %113 = vector.extract_strided_slice %110 {offsets = [0, 0], sizes = [8, 128], strides = [1, 1]} : vector<16x128xf32> to vector<8x128xf32>
    %c1_99 = arith.constant 1 : index
    %c16_100 = arith.constant 16 : index
    %114 = vector.load %arg36[%c1_99, %c16_100] : memref<20x160xf32, #tpu.memory_space<vmem>>, vector<8x128xf32>
    tpu.vector_store %arg36[%c1_99, %c16_100], %113 {strides = array<i32>} : memref<20x160xf32, #tpu.memory_space<vmem>>, vector<8x128xf32>,
    %115 = vector.extract_strided_slice %110 {offsets = [8, 0], sizes = [8, 128], strides = [1, 1]} : vector<16x128xf32> to vector<8x128xf32>
    %c11 = arith.constant 11 : index
    %c16_101 = arith.constant 16 : index
    %116 = vector.load %arg36[%c11, %c16_101] : memref<20x160xf32, #tpu.memory_space<vmem>>, vector<8x128xf32>
    tpu.vector_store %arg36[%c11, %c16_101], %115 {strides = array<i32>} : memref<20x160xf32, #tpu.memory_space<vmem>>, vector<8x128xf32>,
    %c1_102 = arith.constant 1 : index
    %c16_103 = arith.constant 16 : index
    %117 = vector.load %arg36[%c1_102, %c16_103] : memref<20x160xf32, #tpu.memory_space<vmem>>, vector<8x128xf32>
    %c11_104 = arith.constant 11 : index
    %c16_105 = arith.constant 16 : index
    %118 = vector.load %arg36[%c11_104, %c16_105] : memref<20x160xf32, #tpu.memory_space<vmem>>, vector<8x128xf32>
    %119 = tpu.concatenate %117, %118 in 0 : vector<8x128xf32>, vector<8x128xf32> -> vector<16x128xf32>
    %c1_106 = arith.constant 1 : index
    %c0_107 = arith.constant 0 : index
    %120 = vector.load %arg36[%c1_106, %c0_107] : memref<20x160xf32, #tpu.memory_space<vmem>>, vector<8x128xf32>
    %c11_108 = arith.constant 11 : index
    %c0_109 = arith.constant 0 : index
    %121 = vector.load %arg36[%c11_108, %c0_109] : memref<20x160xf32, #tpu.memory_space<vmem>>, vector<8x128xf32>
    %122 = tpu.concatenate %120, %121 in 0 : vector<8x128xf32>, vector<8x128xf32> -> vector<16x128xf32>
    %c0_110 = arith.constant 0 : index
    %c16_111 = arith.constant 16 : index
    %123 = vector.load %arg36[%c0_110, %c16_111] : memref<20x160xf32, #tpu.memory_space<vmem>>, vector<8x128xf32>
    %c10_112 = arith.constant 10 : index
    %c16_113 = arith.constant 16 : index
    %124 = vector.load %arg36[%c10_112, %c16_113] : memref<20x160xf32, #tpu.memory_space<vmem>>, vector<8x128xf32>
    %125 = tpu.concatenate %123, %124 in 0 : vector<8x128xf32>, vector<8x128xf32> -> vector<16x128xf32>
    %c0_114 = arith.constant 0 : index
    %c0_115 = arith.constant 0 : index
    %126 = vector.load %arg36[%c0_114, %c0_115] : memref<20x160xf32, #tpu.memory_space<vmem>>, vector<8x128xf32>
    %c10_116 = arith.constant 10 : index
    %c0_117 = arith.constant 0 : index
    %127 = vector.load %arg36[%c10_116, %c0_117] : memref<20x160xf32, #tpu.memory_space<vmem>>, vector<8x128xf32>
    %128 = tpu.concatenate %126, %127 in 0 : vector<8x128xf32>, vector<8x128xf32> -> vector<16x128xf32>
    %129 = tpu.concatenate %119, %122, %125, %128 in 1 : vector<16x128xf32>, vector<16x128xf32>, vector<16x128xf32>, vector<16x128xf32> -> vector<16x512xf32>
    %c0_118 = arith.constant 0 : index
    %c0_119 = arith.constant 0 : index
    %130 = vector.load %arg17[%c0_118, %c0_119] : memref<512x128xf32, #tpu.memory_space<vmem>>, vector<512x128xf32>
    %cst_120 = arith.constant dense<0.000000e+00> : vector<16x128xf32>
    %131 = tpu.matmul %129, %130, %cst_120 {dimension_numbers = #tpu.dot_dimension_numbers<[1], [0], [0], [1], [0, 0, 1, 1], [], []>} : vector<16x512xf32>, vector<512x128xf32>, vector<16x128xf32> -> vector<16x128xf32>
    %c1_121 = arith.constant 1 : index
    %c32_122 = arith.constant 32 : index
    %132 = vector.load %arg36[%c1_121, %c32_122] : memref<20x160xf32, #tpu.memory_space<vmem>>, vector<8x128xf32>
    %c11_123 = arith.constant 11 : index
    %c32_124 = arith.constant 32 : index
    %133 = vector.load %arg36[%c11_123, %c32_124] : memref<20x160xf32, #tpu.memory_space<vmem>>, vector<8x128xf32>
    %134 = tpu.concatenate %132, %133 in 0 : vector<8x128xf32>, vector<8x128xf32> -> vector<16x128xf32>
    %c0_125 = arith.constant 0 : index
    %c32_126 = arith.constant 32 : index
    %135 = vector.load %arg36[%c0_125, %c32_126] : memref<20x160xf32, #tpu.memory_space<vmem>>, vector<8x128xf32>
    %c10_127 = arith.constant 10 : index
    %c32_128 = arith.constant 32 : index
    %136 = vector.load %arg36[%c10_127, %c32_128] : memref<20x160xf32, #tpu.memory_space<vmem>>, vector<8x128xf32>
    %137 = tpu.concatenate %135, %136 in 0 : vector<8x128xf32>, vector<8x128xf32> -> vector<16x128xf32>
    %138 = tpu.concatenate %119, %134, %125, %137 in 1 : vector<16x128xf32>, vector<16x128xf32>, vector<16x128xf32>, vector<16x128xf32> -> vector<16x512xf32>
    %c0_129 = arith.constant 0 : index
    %c0_130 = arith.constant 0 : index
    %139 = vector.load %arg18[%c0_129, %c0_130] : memref<512x128xf32, #tpu.memory_space<vmem>>, vector<512x128xf32>
    %cst_131 = arith.constant dense<0.000000e+00> : vector<16x128xf32>
    %140 = tpu.matmul %138, %139, %cst_131 {dimension_numbers = #tpu.dot_dimension_numbers<[1], [0], [0], [1], [0, 0, 1, 1], [], []>} : vector<16x512xf32>, vector<512x128xf32>, vector<16x128xf32> -> vector<16x128xf32>
    %141 = arith.addf %131, %140 : vector<16x128xf32>
    %c2_132 = arith.constant 2 : index
    %c16_133 = arith.constant 16 : index
    %142 = vector.load %arg36[%c2_132, %c16_133] : memref<20x160xf32, #tpu.memory_space<vmem>>, vector<8x128xf32>
    %c12 = arith.constant 12 : index
    %c16_134 = arith.constant 16 : index
    %143 = vector.load %arg36[%c12, %c16_134] : memref<20x160xf32, #tpu.memory_space<vmem>>, vector<8x128xf32>
    %144 = tpu.concatenate %142, %143 in 0 : vector<8x128xf32>, vector<8x128xf32> -> vector<16x128xf32>
    %c2_135 = arith.constant 2 : index
    %c0_136 = arith.constant 0 : index
    %145 = vector.load %arg36[%c2_135, %c0_136] : memref<20x160xf32, #tpu.memory_space<vmem>>, vector<8x128xf32>
    %c12_137 = arith.constant 12 : index
    %c0_138 = arith.constant 0 : index
    %146 = vector.load %arg36[%c12_137, %c0_138] : memref<20x160xf32, #tpu.memory_space<vmem>>, vector<8x128xf32>
    %147 = tpu.concatenate %145, %146 in 0 : vector<8x128xf32>, vector<8x128xf32> -> vector<16x128xf32>
    %148 = tpu.concatenate %119, %122, %144, %147 in 1 : vector<16x128xf32>, vector<16x128xf32>, vector<16x128xf32>, vector<16x128xf32> -> vector<16x512xf32>
    %c0_139 = arith.constant 0 : index
    %c0_140 = arith.constant 0 : index
    %149 = vector.load %arg19[%c0_139, %c0_140] : memref<512x128xf32, #tpu.memory_space<vmem>>, vector<512x128xf32>
    %cst_141 = arith.constant dense<0.000000e+00> : vector<16x128xf32>
    %150 = tpu.matmul %148, %149, %cst_141 {dimension_numbers = #tpu.dot_dimension_numbers<[1], [0], [0], [1], [0, 0, 1, 1], [], []>} : vector<16x512xf32>, vector<512x128xf32>, vector<16x128xf32> -> vector<16x128xf32>
    %c2_142 = arith.constant 2 : index
    %c32_143 = arith.constant 32 : index
    %151 = vector.load %arg36[%c2_142, %c32_143] : memref<20x160xf32, #tpu.memory_space<vmem>>, vector<8x128xf32>
    %c12_144 = arith.constant 12 : index
    %c32_145 = arith.constant 32 : index
    %152 = vector.load %arg36[%c12_144, %c32_145] : memref<20x160xf32, #tpu.memory_space<vmem>>, vector<8x128xf32>
    %153 = tpu.concatenate %151, %152 in 0 : vector<8x128xf32>, vector<8x128xf32> -> vector<16x128xf32>
    %154 = tpu.concatenate %119, %134, %144, %153 in 1 : vector<16x128xf32>, vector<16x128xf32>, vector<16x128xf32>, vector<16x128xf32> -> vector<16x512xf32>
    %c0_146 = arith.constant 0 : index
    %c0_147 = arith.constant 0 : index
    %155 = vector.load %arg20[%c0_146, %c0_147] : memref<512x128xf32, #tpu.memory_space<vmem>>, vector<512x128xf32>
    %cst_148 = arith.constant dense<0.000000e+00> : vector<16x128xf32>
    %156 = tpu.matmul %154, %155, %cst_148 {dimension_numbers = #tpu.dot_dimension_numbers<[1], [0], [0], [1], [0, 0, 1, 1], [], []>} : vector<16x512xf32>, vector<512x128xf32>, vector<16x128xf32> -> vector<16x128xf32>
    %157 = arith.addf %150, %156 : vector<16x128xf32>
    %c0_149 = arith.constant 0 : index
    %c0_150 = arith.constant 0 : index
    %158 = vector.load %arg21[%c0_149, %c0_150] : memref<32x16xf32, #tpu.memory_space<vmem>>, vector<32x16xf32>
    %cst_151 = arith.constant dense<0.000000e+00> : vector<32x128xf32>
    %159 = tpu.matmul %158, %141, %cst_151 {dimension_numbers = #tpu.dot_dimension_numbers<[1], [0], [0], [1], [0, 0, 1, 1], [], []>} : vector<32x16xf32>, vector<16x128xf32>, vector<32x128xf32> -> vector<32x128xf32>
    %c0_152 = arith.constant 0 : index
    %c0_153 = arith.constant 0 : index
    %160 = vector.load %arg22[%c0_152, %c0_153] : memref<32x16xf32, #tpu.memory_space<vmem>>, vector<32x16xf32>
    %cst_154 = arith.constant dense<0.000000e+00> : vector<32x128xf32>
    %161 = tpu.matmul %160, %157, %cst_154 {dimension_numbers = #tpu.dot_dimension_numbers<[1], [0], [0], [1], [0, 0, 1, 1], [], []>} : vector<32x16xf32>, vector<16x128xf32>, vector<32x128xf32> -> vector<32x128xf32>
    %162 = arith.addf %159, %161 : vector<32x128xf32>
    %c0_155 = arith.constant 0 : index
    %c0_156 = arith.constant 0 : index
    %163 = vector.load %arg23[%c0_155, %c0_156] : memref<32x128xf32, #tpu.memory_space<vmem>>, vector<32x128xf32>
    %164 = arith.addf %162, %163 : vector<32x128xf32>
    %cst_157 = arith.constant 0.000000e+00 : f32
    %165 = vector.broadcast %cst_157 : f32 to vector<32x128xf32>
    %166 = arith.cmpf oge, %164, %165 : vector<32x128xf32>
    %cst_158 = arith.constant 2.000000e-01 : f32
    %167 = vector.broadcast %cst_158 : f32 to vector<32x128xf32>
    %168 = arith.mulf %167, %164 : vector<32x128xf32>
    %169 = arith.select %166, %164, %168 : vector<32x128xi1>, vector<32x128xf32>
    %cst_159 = arith.constant 0.000000e+00 : f32
    %170 = vector.broadcast %cst_159 : f32 to vector<36x144xf32>
    %c0_160 = arith.constant 0 : index
    %c0_161 = arith.constant 0 : index
    %171 = vector.load %arg37[%c0_160, %c0_161] : memref<36x144xf32, #tpu.memory_space<vmem>>, vector<36x144xf32>
    tpu.vector_store %arg37[%c0_160, %c0_161], %170 {strides = array<i32>} : memref<36x144xf32, #tpu.memory_space<vmem>>, vector<36x144xf32>,
    %172 = vector.extract_strided_slice %169 {offsets = [0, 0], sizes = [16, 128], strides = [1, 1]} : vector<32x128xf32> to vector<16x128xf32>
    %c1_162 = arith.constant 1 : index
    %c8_163 = arith.constant 8 : index
    %173 = vector.load %arg37[%c1_162, %c8_163] : memref<36x144xf32, #tpu.memory_space<vmem>>, vector<16x128xf32>
    tpu.vector_store %arg37[%c1_162, %c8_163], %172 {strides = array<i32>} : memref<36x144xf32, #tpu.memory_space<vmem>>, vector<16x128xf32>,
    %174 = vector.extract_strided_slice %169 {offsets = [16, 0], sizes = [16, 128], strides = [1, 1]} : vector<32x128xf32> to vector<16x128xf32>
    %c19 = arith.constant 19 : index
    %c8_164 = arith.constant 8 : index
    %175 = vector.load %arg37[%c19, %c8_164] : memref<36x144xf32, #tpu.memory_space<vmem>>, vector<16x128xf32>
    tpu.vector_store %arg37[%c19, %c8_164], %174 {strides = array<i32>} : memref<36x144xf32, #tpu.memory_space<vmem>>, vector<16x128xf32>,
    %c1_165 = arith.constant 1 : index
    %c8_166 = arith.constant 8 : index
    %176 = vector.load %arg37[%c1_165, %c8_166] : memref<36x144xf32, #tpu.memory_space<vmem>>, vector<16x128xf32>
    %c19_167 = arith.constant 19 : index
    %c8_168 = arith.constant 8 : index
    %177 = vector.load %arg37[%c19_167, %c8_168] : memref<36x144xf32, #tpu.memory_space<vmem>>, vector<16x128xf32>
    %178 = tpu.concatenate %176, %177 in 0 : vector<16x128xf32>, vector<16x128xf32> -> vector<32x128xf32>
    %c1_169 = arith.constant 1 : index
    %c0_170 = arith.constant 0 : index
    %179 = vector.load %arg37[%c1_169, %c0_170] : memref<36x144xf32, #tpu.memory_space<vmem>>, vector<16x128xf32>
    %c19_171 = arith.constant 19 : index
    %c0_172 = arith.constant 0 : index
    %180 = vector.load %arg37[%c19_171, %c0_172] : memref<36x144xf32, #tpu.memory_space<vmem>>, vector<16x128xf32>
    %181 = tpu.concatenate %179, %180 in 0 : vector<16x128xf32>, vector<16x128xf32> -> vector<32x128xf32>
    %c0_173 = arith.constant 0 : index
    %c8_174 = arith.constant 8 : index
    %182 = vector.load %arg37[%c0_173, %c8_174] : memref<36x144xf32, #tpu.memory_space<vmem>>, vector<16x128xf32>
    %c18 = arith.constant 18 : index
    %c8_175 = arith.constant 8 : index
    %183 = vector.load %arg37[%c18, %c8_175] : memref<36x144xf32, #tpu.memory_space<vmem>>, vector<16x128xf32>
    %184 = tpu.concatenate %182, %183 in 0 : vector<16x128xf32>, vector<16x128xf32> -> vector<32x128xf32>
    %c0_176 = arith.constant 0 : index
    %c0_177 = arith.constant 0 : index
    %185 = vector.load %arg37[%c0_176, %c0_177] : memref<36x144xf32, #tpu.memory_space<vmem>>, vector<16x128xf32>
    %c18_178 = arith.constant 18 : index
    %c0_179 = arith.constant 0 : index
    %186 = vector.load %arg37[%c18_178, %c0_179] : memref<36x144xf32, #tpu.memory_space<vmem>>, vector<16x128xf32>
    %187 = tpu.concatenate %185, %186 in 0 : vector<16x128xf32>, vector<16x128xf32> -> vector<32x128xf32>
    %188 = tpu.concatenate %178, %181, %184, %187 in 1 : vector<32x128xf32>, vector<32x128xf32>, vector<32x128xf32>, vector<32x128xf32> -> vector<32x512xf32>
    %c0_180 = arith.constant 0 : index
    %c0_181 = arith.constant 0 : index
    %189 = vector.load %arg24[%c0_180, %c0_181] : memref<512x96xf32, #tpu.memory_space<vmem>>, vector<512x96xf32>
    %cst_182 = arith.constant dense<0.000000e+00> : vector<32x96xf32>
    %190 = tpu.matmul %188, %189, %cst_182 {dimension_numbers = #tpu.dot_dimension_numbers<[1], [0], [0], [1], [0, 0, 1, 1], [], []>} : vector<32x512xf32>, vector<512x96xf32>, vector<32x96xf32> -> vector<32x96xf32>
    %c1_183 = arith.constant 1 : index
    %c16_184 = arith.constant 16 : index
    %191 = vector.load %arg37[%c1_183, %c16_184] : memref<36x144xf32, #tpu.memory_space<vmem>>, vector<16x128xf32>
    %c19_185 = arith.constant 19 : index
    %c16_186 = arith.constant 16 : index
    %192 = vector.load %arg37[%c19_185, %c16_186] : memref<36x144xf32, #tpu.memory_space<vmem>>, vector<16x128xf32>
    %193 = tpu.concatenate %191, %192 in 0 : vector<16x128xf32>, vector<16x128xf32> -> vector<32x128xf32>
    %c0_187 = arith.constant 0 : index
    %c16_188 = arith.constant 16 : index
    %194 = vector.load %arg37[%c0_187, %c16_188] : memref<36x144xf32, #tpu.memory_space<vmem>>, vector<16x128xf32>
    %c18_189 = arith.constant 18 : index
    %c16_190 = arith.constant 16 : index
    %195 = vector.load %arg37[%c18_189, %c16_190] : memref<36x144xf32, #tpu.memory_space<vmem>>, vector<16x128xf32>
    %196 = tpu.concatenate %194, %195 in 0 : vector<16x128xf32>, vector<16x128xf32> -> vector<32x128xf32>
    %197 = tpu.concatenate %178, %193, %184, %196 in 1 : vector<32x128xf32>, vector<32x128xf32>, vector<32x128xf32>, vector<32x128xf32> -> vector<32x512xf32>
    %c0_191 = arith.constant 0 : index
    %c0_192 = arith.constant 0 : index
    %198 = vector.load %arg25[%c0_191, %c0_192] : memref<512x96xf32, #tpu.memory_space<vmem>>, vector<512x96xf32>
    %cst_193 = arith.constant dense<0.000000e+00> : vector<32x96xf32>
    %199 = tpu.matmul %197, %198, %cst_193 {dimension_numbers = #tpu.dot_dimension_numbers<[1], [0], [0], [1], [0, 0, 1, 1], [], []>} : vector<32x512xf32>, vector<512x96xf32>, vector<32x96xf32> -> vector<32x96xf32>
    %200 = arith.addf %190, %199 : vector<32x96xf32>
    %c2_194 = arith.constant 2 : index
    %c8_195 = arith.constant 8 : index
    %201 = vector.load %arg37[%c2_194, %c8_195] : memref<36x144xf32, #tpu.memory_space<vmem>>, vector<16x128xf32>
    %c20 = arith.constant 20 : index
    %c8_196 = arith.constant 8 : index
    %202 = vector.load %arg37[%c20, %c8_196] : memref<36x144xf32, #tpu.memory_space<vmem>>, vector<16x128xf32>
    %203 = tpu.concatenate %201, %202 in 0 : vector<16x128xf32>, vector<16x128xf32> -> vector<32x128xf32>
    %c2_197 = arith.constant 2 : index
    %c0_198 = arith.constant 0 : index
    %204 = vector.load %arg37[%c2_197, %c0_198] : memref<36x144xf32, #tpu.memory_space<vmem>>, vector<16x128xf32>
    %c20_199 = arith.constant 20 : index
    %c0_200 = arith.constant 0 : index
    %205 = vector.load %arg37[%c20_199, %c0_200] : memref<36x144xf32, #tpu.memory_space<vmem>>, vector<16x128xf32>
    %206 = tpu.concatenate %204, %205 in 0 : vector<16x128xf32>, vector<16x128xf32> -> vector<32x128xf32>
    %207 = tpu.concatenate %178, %181, %203, %206 in 1 : vector<32x128xf32>, vector<32x128xf32>, vector<32x128xf32>, vector<32x128xf32> -> vector<32x512xf32>
    %c0_201 = arith.constant 0 : index
    %c0_202 = arith.constant 0 : index
    %208 = vector.load %arg26[%c0_201, %c0_202] : memref<512x96xf32, #tpu.memory_space<vmem>>, vector<512x96xf32>
    %cst_203 = arith.constant dense<0.000000e+00> : vector<32x96xf32>
    %209 = tpu.matmul %207, %208, %cst_203 {dimension_numbers = #tpu.dot_dimension_numbers<[1], [0], [0], [1], [0, 0, 1, 1], [], []>} : vector<32x512xf32>, vector<512x96xf32>, vector<32x96xf32> -> vector<32x96xf32>
    %c2_204 = arith.constant 2 : index
    %c16_205 = arith.constant 16 : index
    %210 = vector.load %arg37[%c2_204, %c16_205] : memref<36x144xf32, #tpu.memory_space<vmem>>, vector<16x128xf32>
    %c20_206 = arith.constant 20 : index
    %c16_207 = arith.constant 16 : index
    %211 = vector.load %arg37[%c20_206, %c16_207] : memref<36x144xf32, #tpu.memory_space<vmem>>, vector<16x128xf32>
    %212 = tpu.concatenate %210, %211 in 0 : vector<16x128xf32>, vector<16x128xf32> -> vector<32x128xf32>
    %213 = tpu.concatenate %178, %193, %203, %212 in 1 : vector<32x128xf32>, vector<32x128xf32>, vector<32x128xf32>, vector<32x128xf32> -> vector<32x512xf32>
    %c0_208 = arith.constant 0 : index
    %c0_209 = arith.constant 0 : index
    %214 = vector.load %arg27[%c0_208, %c0_209] : memref<512x96xf32, #tpu.memory_space<vmem>>, vector<512x96xf32>
    %cst_210 = arith.constant dense<0.000000e+00> : vector<32x96xf32>
    %215 = tpu.matmul %213, %214, %cst_210 {dimension_numbers = #tpu.dot_dimension_numbers<[1], [0], [0], [1], [0, 0, 1, 1], [], []>} : vector<32x512xf32>, vector<512x96xf32>, vector<32x96xf32> -> vector<32x96xf32>
    %216 = arith.addf %209, %215 : vector<32x96xf32>
    %c0_211 = arith.constant 0 : index
    %c0_212 = arith.constant 0 : index
    %217 = vector.load %arg28[%c0_211, %c0_212] : memref<64x32xf32, #tpu.memory_space<vmem>>, vector<64x32xf32>
    %cst_213 = arith.constant dense<0.000000e+00> : vector<64x96xf32>
    %218 = tpu.matmul %217, %200, %cst_213 {dimension_numbers = #tpu.dot_dimension_numbers<[1], [0], [0], [1], [0, 0, 1, 1], [], []>} : vector<64x32xf32>, vector<32x96xf32>, vector<64x96xf32> -> vector<64x96xf32>
    %c0_214 = arith.constant 0 : index
    %c0_215 = arith.constant 0 : index
    %219 = vector.load %arg29[%c0_214, %c0_215] : memref<64x32xf32, #tpu.memory_space<vmem>>, vector<64x32xf32>
    %cst_216 = arith.constant dense<0.000000e+00> : vector<64x96xf32>
    %220 = tpu.matmul %219, %216, %cst_216 {dimension_numbers = #tpu.dot_dimension_numbers<[1], [0], [0], [1], [0, 0, 1, 1], [], []>} : vector<64x32xf32>, vector<32x96xf32>, vector<64x96xf32> -> vector<64x96xf32>
    %221 = arith.addf %218, %220 : vector<64x96xf32>
    %c0_217 = arith.constant 0 : index
    %c0_218 = arith.constant 0 : index
    %222 = vector.load %arg30[%c0_217, %c0_218] : memref<64x96xf32, #tpu.memory_space<vmem>>, vector<64x96xf32>
    %223 = arith.addf %221, %222 : vector<64x96xf32>
    %c0_219 = arith.constant 0 : index
    %c0_220 = arith.constant 0 : index
    %224 = vector.load %arg31[%c0_219, %c0_220] : memref<64x96xf32, #tpu.memory_space<vmem>>, vector<64x96xf32>
    %225 = arith.addf %223, %224 : vector<64x96xf32>
    %cst_221 = arith.constant 5.000000e-01 : f32
    %226 = vector.broadcast %cst_221 : f32 to vector<64x96xf32>
    %227 = arith.addf %225, %226 : vector<64x96xf32>
    %cst_222 = arith.constant 2.550000e+02 : f32
    %228 = vector.broadcast %cst_222 : f32 to vector<64x96xf32>
    %229 = arith.mulf %228, %227 : vector<64x96xf32>
    %230 = vector.extract_strided_slice %223 {offsets = [0, 0], sizes = [32, 32], strides = [1, 1]} : vector<64x96xf32> to vector<32x32xf32>
    %c0_223 = arith.constant 0 : index
    %c0_224 = arith.constant 0 : index
    %c0_225 = arith.constant 0 : index
    %c0_226 = arith.constant 0 : index
    %231 = vector.load %arg33[%c0_223, %c0_224, %c0_225, %c0_226] : memref<2x3x32x32xf32, #tpu.memory_space<vmem>>, vector<1x1x32x32xf32>
    %232 = vector.shape_cast %231 : vector<1x1x32x32xf32> to vector<32x32xf32>
    %233 = vector.shape_cast %230 : vector<32x32xf32> to vector<1x1x32x32xf32>
    tpu.vector_store %arg33[%c0_223, %c0_224, %c0_225, %c0_226], %233 {strides = array<i32>} : memref<2x3x32x32xf32, #tpu.memory_space<vmem>>, vector<1x1x32x32xf32>,
    %234 = vector.extract_strided_slice %229 {offsets = [0, 0], sizes = [32, 32], strides = [1, 1]} : vector<64x96xf32> to vector<32x32xf32>
    %c0_227 = arith.constant 0 : index
    %c0_228 = arith.constant 0 : index
    %c0_229 = arith.constant 0 : index
    %c0_230 = arith.constant 0 : index
    %235 = vector.load %arg34[%c0_227, %c0_228, %c0_229, %c0_230] : memref<2x3x32x32xf32, #tpu.memory_space<vmem>>, vector<1x1x32x32xf32>
    %236 = vector.shape_cast %235 : vector<1x1x32x32xf32> to vector<32x32xf32>
    %237 = vector.shape_cast %234 : vector<32x32xf32> to vector<1x1x32x32xf32>
    tpu.vector_store %arg34[%c0_227, %c0_228, %c0_229, %c0_230], %237 {strides = array<i32>} : memref<2x3x32x32xf32, #tpu.memory_space<vmem>>, vector<1x1x32x32xf32>,
    %238 = vector.extract_strided_slice %223 {offsets = [0, 32], sizes = [32, 32], strides = [1, 1]} : vector<64x96xf32> to vector<32x32xf32>
    %c0_231 = arith.constant 0 : index
    %c1_232 = arith.constant 1 : index
    %c0_233 = arith.constant 0 : index
    %c0_234 = arith.constant 0 : index
    %239 = vector.load %arg33[%c0_231, %c1_232, %c0_233, %c0_234] : memref<2x3x32x32xf32, #tpu.memory_space<vmem>>, vector<1x1x32x32xf32>
    %240 = vector.shape_cast %239 : vector<1x1x32x32xf32> to vector<32x32xf32>
    %241 = vector.shape_cast %238 : vector<32x32xf32> to vector<1x1x32x32xf32>
    tpu.vector_store %arg33[%c0_231, %c1_232, %c0_233, %c0_234], %241 {strides = array<i32>} : memref<2x3x32x32xf32, #tpu.memory_space<vmem>>, vector<1x1x32x32xf32>,
    %242 = vector.extract_strided_slice %229 {offsets = [0, 32], sizes = [32, 32], strides = [1, 1]} : vector<64x96xf32> to vector<32x32xf32>
    %c0_235 = arith.constant 0 : index
    %c1_236 = arith.constant 1 : index
    %c0_237 = arith.constant 0 : index
    %c0_238 = arith.constant 0 : index
    %243 = vector.load %arg34[%c0_235, %c1_236, %c0_237, %c0_238] : memref<2x3x32x32xf32, #tpu.memory_space<vmem>>, vector<1x1x32x32xf32>
    %244 = vector.shape_cast %243 : vector<1x1x32x32xf32> to vector<32x32xf32>
    %245 = vector.shape_cast %242 : vector<32x32xf32> to vector<1x1x32x32xf32>
    tpu.vector_store %arg34[%c0_235, %c1_236, %c0_237, %c0_238], %245 {strides = array<i32>} : memref<2x3x32x32xf32, #tpu.memory_space<vmem>>, vector<1x1x32x32xf32>,
    %246 = vector.extract_strided_slice %223 {offsets = [0, 64], sizes = [32, 32], strides = [1, 1]} : vector<64x96xf32> to vector<32x32xf32>
    %c0_239 = arith.constant 0 : index
    %c2_240 = arith.constant 2 : index
    %c0_241 = arith.constant 0 : index
    %c0_242 = arith.constant 0 : index
    %247 = vector.load %arg33[%c0_239, %c2_240, %c0_241, %c0_242] : memref<2x3x32x32xf32, #tpu.memory_space<vmem>>, vector<1x1x32x32xf32>
    %248 = vector.shape_cast %247 : vector<1x1x32x32xf32> to vector<32x32xf32>
    %249 = vector.shape_cast %246 : vector<32x32xf32> to vector<1x1x32x32xf32>
    tpu.vector_store %arg33[%c0_239, %c2_240, %c0_241, %c0_242], %249 {strides = array<i32>} : memref<2x3x32x32xf32, #tpu.memory_space<vmem>>, vector<1x1x32x32xf32>,
    %250 = vector.extract_strided_slice %229 {offsets = [0, 64], sizes = [32, 32], strides = [1, 1]} : vector<64x96xf32> to vector<32x32xf32>
    %c0_243 = arith.constant 0 : index
    %c2_244 = arith.constant 2 : index
    %c0_245 = arith.constant 0 : index
    %c0_246 = arith.constant 0 : index
    %251 = vector.load %arg34[%c0_243, %c2_244, %c0_245, %c0_246] : memref<2x3x32x32xf32, #tpu.memory_space<vmem>>, vector<1x1x32x32xf32>
    %252 = vector.shape_cast %251 : vector<1x1x32x32xf32> to vector<32x32xf32>
    %253 = vector.shape_cast %250 : vector<32x32xf32> to vector<1x1x32x32xf32>
    tpu.vector_store %arg34[%c0_243, %c2_244, %c0_245, %c0_246], %253 {strides = array<i32>} : memref<2x3x32x32xf32, #tpu.memory_space<vmem>>, vector<1x1x32x32xf32>,
    %254 = vector.extract_strided_slice %223 {offsets = [32, 0], sizes = [32, 32], strides = [1, 1]} : vector<64x96xf32> to vector<32x32xf32>
    %c1_247 = arith.constant 1 : index
    %c0_248 = arith.constant 0 : index
    %c0_249 = arith.constant 0 : index
    %c0_250 = arith.constant 0 : index
    %255 = vector.load %arg33[%c1_247, %c0_248, %c0_249, %c0_250] : memref<2x3x32x32xf32, #tpu.memory_space<vmem>>, vector<1x1x32x32xf32>
    %256 = vector.shape_cast %255 : vector<1x1x32x32xf32> to vector<32x32xf32>
    %257 = vector.shape_cast %254 : vector<32x32xf32> to vector<1x1x32x32xf32>
    tpu.vector_store %arg33[%c1_247, %c0_248, %c0_249, %c0_250], %257 {strides = array<i32>} : memref<2x3x32x32xf32, #tpu.memory_space<vmem>>, vector<1x1x32x32xf32>,
    %258 = vector.extract_strided_slice %229 {offsets = [32, 0], sizes = [32, 32], strides = [1, 1]} : vector<64x96xf32> to vector<32x32xf32>
    %c1_251 = arith.constant 1 : index
    %c0_252 = arith.constant 0 : index
    %c0_253 = arith.constant 0 : index
    %c0_254 = arith.constant 0 : index
    %259 = vector.load %arg34[%c1_251, %c0_252, %c0_253, %c0_254] : memref<2x3x32x32xf32, #tpu.memory_space<vmem>>, vector<1x1x32x32xf32>
    %260 = vector.shape_cast %259 : vector<1x1x32x32xf32> to vector<32x32xf32>
    %261 = vector.shape_cast %258 : vector<32x32xf32> to vector<1x1x32x32xf32>
    tpu.vector_store %arg34[%c1_251, %c0_252, %c0_253, %c0_254], %261 {strides = array<i32>} : memref<2x3x32x32xf32, #tpu.memory_space<vmem>>, vector<1x1x32x32xf32>,
    %262 = vector.extract_strided_slice %223 {offsets = [32, 32], sizes = [32, 32], strides = [1, 1]} : vector<64x96xf32> to vector<32x32xf32>
    %c1_255 = arith.constant 1 : index
    %c1_256 = arith.constant 1 : index
    %c0_257 = arith.constant 0 : index
    %c0_258 = arith.constant 0 : index
    %263 = vector.load %arg33[%c1_255, %c1_256, %c0_257, %c0_258] : memref<2x3x32x32xf32, #tpu.memory_space<vmem>>, vector<1x1x32x32xf32>
    %264 = vector.shape_cast %263 : vector<1x1x32x32xf32> to vector<32x32xf32>
    %265 = vector.shape_cast %262 : vector<32x32xf32> to vector<1x1x32x32xf32>
    tpu.vector_store %arg33[%c1_255, %c1_256, %c0_257, %c0_258], %265 {strides = array<i32>} : memref<2x3x32x32xf32, #tpu.memory_space<vmem>>, vector<1x1x32x32xf32>,
    %266 = vector.extract_strided_slice %229 {offsets = [32, 32], sizes = [32, 32], strides = [1, 1]} : vector<64x96xf32> to vector<32x32xf32>
    %c1_259 = arith.constant 1 : index
    %c1_260 = arith.constant 1 : index
    %c0_261 = arith.constant 0 : index
    %c0_262 = arith.constant 0 : index
    %267 = vector.load %arg34[%c1_259, %c1_260, %c0_261, %c0_262] : memref<2x3x32x32xf32, #tpu.memory_space<vmem>>, vector<1x1x32x32xf32>
    %268 = vector.shape_cast %267 : vector<1x1x32x32xf32> to vector<32x32xf32>
    %269 = vector.shape_cast %266 : vector<32x32xf32> to vector<1x1x32x32xf32>
    tpu.vector_store %arg34[%c1_259, %c1_260, %c0_261, %c0_262], %269 {strides = array<i32>} : memref<2x3x32x32xf32, #tpu.memory_space<vmem>>, vector<1x1x32x32xf32>,
    %270 = vector.extract_strided_slice %223 {offsets = [32, 64], sizes = [32, 32], strides = [1, 1]} : vector<64x96xf32> to vector<32x32xf32>
    %c1_263 = arith.constant 1 : index
    %c2_264 = arith.constant 2 : index
    %c0_265 = arith.constant 0 : index
    %c0_266 = arith.constant 0 : index
    %271 = vector.load %arg33[%c1_263, %c2_264, %c0_265, %c0_266] : memref<2x3x32x32xf32, #tpu.memory_space<vmem>>, vector<1x1x32x32xf32>
    %272 = vector.shape_cast %271 : vector<1x1x32x32xf32> to vector<32x32xf32>
    %273 = vector.shape_cast %270 : vector<32x32xf32> to vector<1x1x32x32xf32>
    tpu.vector_store %arg33[%c1_263, %c2_264, %c0_265, %c0_266], %273 {strides = array<i32>} : memref<2x3x32x32xf32, #tpu.memory_space<vmem>>, vector<1x1x32x32xf32>,
    %274 = vector.extract_strided_slice %229 {offsets = [32, 64], sizes = [32, 32], strides = [1, 1]} : vector<64x96xf32> to vector<32x32xf32>
    %c1_267 = arith.constant 1 : index
    %c2_268 = arith.constant 2 : index
    %c0_269 = arith.constant 0 : index
    %c0_270 = arith.constant 0 : index
    %275 = vector.load %arg34[%c1_267, %c2_268, %c0_269, %c0_270] : memref<2x3x32x32xf32, #tpu.memory_space<vmem>>, vector<1x1x32x32xf32>
    %276 = vector.shape_cast %275 : vector<1x1x32x32xf32> to vector<32x32xf32>
    %277 = vector.shape_cast %274 : vector<32x32xf32> to vector<1x1x32x32xf32>
    tpu.vector_store %arg34[%c1_267, %c2_268, %c0_269, %c0_270], %277 {strides = array<i32>} : memref<2x3x32x32xf32, #tpu.memory_space<vmem>>, vector<1x1x32x32xf32>,
    return
  }
}

</mosaic_0001>

<llo_original>
// kernel: face_decoder_frontal.1
$region0: #{face_decoder_frontal.1}
  #allocation0 [shape = 'u32[]', space=smem, size = 0x4, offset = 0x4, fixed_abs, tag = 'smem constant byte address 0x4 - core index']
  #allocation1 [shape = 'u32[72,128]{1,0:T(1,128)}', space=vmem, size = 0x9000, scoped, tag = 'internal scratch']
  #allocation2 [shape = 'f32[12,96]{1,0:T(8,128)}', space=vmem, size = 0x2000, scoped, tag = 'scratch operand']
  #allocation3 [shape = 'f32[20,160]{1,0:T(8,128)}', space=vmem, size = 0x6000, scoped, tag = 'scratch operand']
  #allocation4 [shape = 'f32[36,144]{1,0:T(8,128)}', space=vmem, size = 0xa000, scoped, tag = 'scratch operand']
  %s0 = inlined_call_operand.smem [shape: u32[35], index: -1, kind: input, shape index: {}]
  %s1 = sld [smem:[%s0]]
  %s2 = scalar_lea.smem %s0, 1
  %s3 = sld [smem:[%s2]]
  %s4 = scalar_lea.smem %s0, 2
  %s5 = sld [smem:[%s4]]
  %s6 = scalar_lea.smem %s0, 3
  %s7 = sld [smem:[%s6]]
  %s8 = scalar_lea.smem %s0, 4
  %s9 = sld [smem:[%s8]]
  %s10 = scalar_lea.smem %s0, 5
  %s11 = sld [smem:[%s10]]
  %s12 = scalar_lea.smem %s0, 6
  %s13 = sld [smem:[%s12]]
  %s14 = scalar_lea.smem %s0, 7
  %s15 = sld [smem:[%s14]]
  %s16 = scalar_lea.smem %s0, 8
  %s17 = sld [smem:[%s16]]
  %s18 = scalar_lea.smem %s0, 9
  %s19 = sld [smem:[%s18]]
  %s20 = scalar_lea.smem %s0, 10
  %s21 = sld [smem:[%s20]]
  %s22 = scalar_lea.smem %s0, 11
  %s23 = sld [smem:[%s22]]
  %s24 = scalar_lea.smem %s0, 12
  %s25 = sld [smem:[%s24]]
  %s26 = scalar_lea.smem %s0, 13
  %s27 = sld [smem:[%s26]]
  %s28 = scalar_lea.smem %s0, 14
  %s29 = sld [smem:[%s28]]
  %s30 = scalar_lea.smem %s0, 15
  %s31 = sld [smem:[%s30]]
  %s32 = scalar_lea.smem %s0, 16
  %s33 = sld [smem:[%s32]]
  %s34 = scalar_lea.smem %s0, 17
  %s35 = sld [smem:[%s34]]
  %s36 = scalar_lea.smem %s0, 18
  %s37 = sld [smem:[%s36]]
  %s38 = scalar_lea.smem %s0, 19
  %s39 = sld [smem:[%s38]]
  %s40 = scalar_lea.smem %s0, 20
  %s41 = sld [smem:[%s40]]
  %s42 = scalar_lea.smem %s0, 21
  %s43 = sld [smem:[%s42]]
  %s44 = scalar_lea.smem %s0, 22
  %s45 = sld [smem:[%s44]]
  %s46 = scalar_lea.smem %s0, 23
  %s47 = sld [smem:[%s46]]
  %s48 = scalar_lea.smem %s0, 24
  %s49 = sld [smem:[%s48]]
  %s50 = scalar_lea.smem %s0, 25
  %s51 = sld [smem:[%s50]]
  %s52 = scalar_lea.smem %s0, 26
  %s53 = sld [smem:[%s52]]
  %s54 = scalar_lea.smem %s0, 27
  %s55 = sld [smem:[%s54]]
  %s56 = scalar_lea.smem %s0, 28
  %s57 = sld [smem:[%s56]]
  %s58 = scalar_lea.smem %s0, 29
  %s59 = sld [smem:[%s58]]
  %s60 = scalar_lea.smem %s0, 30
  %s61 = sld [smem:[%s60]]
  %s62 = scalar_lea.smem %s0, 31
  %s63 = sld [smem:[%s62]]
  %s64 = scalar_lea.smem %s0, 32
  %s65 = sld [smem:[%s64]]
  %s66 = scalar_lea.smem %s0, 33
  %s67 = sld [smem:[%s66]]
  %s68 = scalar_lea.smem %s0, 34
  %s69 = sld [smem:[%s68]]
  %70 = xla_tuple %s65, %s67, %s69
  %s71 = sld [smem:[#allocation0]]
  $region178: #{face_decoder_frontal.1} parent=0
    _
  %s73 = ssub.s32 1, %s71
  %s74 = scalar_select 0, %s73, %s71
  $region1: #{face_decoder_frontal.1} parent=0
    #allocation5 [shape = 'u8[40960]{0}', space=vmem, size = 0xa000, scoped, tag = 'input window, operand 8, single buffered']
    #allocation6 [shape = 's32[1]{0}', space=sflag, size = 0x4, scoped, tag = 'scoped memory for face_decoder_frontal.1']
    #allocation7 [shape = 's32[1]{0}', space=sflag, size = 0x4, scoped, tag = 'scoped memory for face_decoder_frontal.1']
    #allocation8 [shape = 'u8[131072]{0}', space=vmem, size = 0x20000, scoped, tag = 'input window, operand 12, single buffered']
    #allocation9 [shape = 's32[1]{0}', space=sflag, size = 0x4, scoped, tag = 'scoped memory for face_decoder_frontal.1']
    #allocation10 [shape = 'u8[131072]{0}', space=vmem, size = 0x20000, scoped, tag = 'input window, operand 13, single buffered']
    #allocation11 [shape = 'u8[16384]{0}', space=vmem, size = 0x4000, scoped, tag = 'input window, operand 23, single buffered']
    #allocation12 [shape = 's32[1]{0}', space=sflag, size = 0x4, scoped, tag = 'scoped memory for face_decoder_frontal.1']
    #allocation13 [shape = 'u8[32768]{0}', space=vmem, size = 0x8000, scoped, tag = 'input window, operand 30, single buffered']
    #allocation14 [shape = 'u8[32768]{0}', space=vmem, size = 0x8000, scoped, tag = 'input window, operand 31, single buffered']
    #allocation15 [shape = 's32[1]{0}', space=sflag, size = 0x4, scoped, tag = 'scoped memory for face_decoder_frontal.1']
    #allocation16 [shape = 'u8[98304]{0}', space=vmem, size = 0x18000, scoped, tag = 'output window, operand 1, single buffered']
    #allocation17 [shape = 'u8[98304]{0}', space=vmem, size = 0x18000, scoped, tag = 'output window, operand 2, single buffered']
    #allocation18 [shape = 's32[1]{0}', space=sflag, size = 0x4, scoped, tag = 'scoped memory for face_decoder_frontal.1']
    %75 = vsyncpa [#allocation6], 0
    %76 = vsyncpa [#allocation9], 0
    %77 = vsyncpa [#allocation12], 0
    %78 = vsyncpa [#allocation15], 0
    %79 = vsyncpa [#allocation7], 0
    %80 = vsyncpa [#allocation18], 0
    // Predicated region
    $region2: #{face_decoder_frontal.1} parent=1 // pred_check
      _
    $region3: #{face_decoder_frontal.1} parent=1 // pred_check_branch
      %82 = sbr.rel (0) target = $region5
    $region4: #{face_decoder_frontal.1} parent=1 // pred_region
      _
    $region5: #{face_decoder_frontal.1} parent=1 // pred_fallthru
      _
    // Predicated region
    $region6: #{face_decoder_frontal.1} parent=1 // pred_check
      _
    $region7: #{face_decoder_frontal.1} parent=1 // pred_check_branch
      %84 = sbr.rel (0) target = $region9
    $region8: #{face_decoder_frontal.1} parent=1 // pred_region
      _
    $region9: #{face_decoder_frontal.1} parent=1 // pred_fallthru
      _
    // Predicated region
    $region10: #{face_decoder_frontal.1} parent=1 // pred_check
      _
    $region11: #{face_decoder_frontal.1} parent=1 // pred_check_branch
      %86 = sbr.rel (0) target = $region13
    $region12: #{face_decoder_frontal.1} parent=1 // pred_region
      _
    $region13: #{face_decoder_frontal.1} parent=1 // pred_fallthru
      _
    // Predicated region
    $region14: #{face_decoder_frontal.1} parent=1 // pred_check
      _
    $region15: #{face_decoder_frontal.1} parent=1 // pred_check_branch
      %88 = sbr.rel (0) target = $region17
    $region16: #{face_decoder_frontal.1} parent=1 // pred_region
      _
    $region17: #{face_decoder_frontal.1} parent=1 // pred_fallthru
      _
    // Predicated region
    $region18: #{face_decoder_frontal.1} parent=1 // pred_check
      _
    $region19: #{face_decoder_frontal.1} parent=1 // pred_check_branch
      %90 = sbr.rel (0) target = $region21
    $region20: #{face_decoder_frontal.1} parent=1 // pred_region
      _
    $region21: #{face_decoder_frontal.1} parent=1 // pred_fallthru
      _
    // Predicated region
    $region22: #{face_decoder_frontal.1} parent=1 // pred_check
      _
    $region23: #{face_decoder_frontal.1} parent=1 // pred_check_branch
      %92 = sbr.rel (0) target = $region25
    $region24: #{face_decoder_frontal.1} parent=1 // pred_region
      _
    $region25: #{face_decoder_frontal.1} parent=1 // pred_fallthru
      _
    // Predicated region
    $region26: #{face_decoder_frontal.1} parent=1 // pred_check
      _
    $region27: #{face_decoder_frontal.1} parent=1 // pred_check_branch
      %94 = sbr.rel (0) target = $region29
    $region28: #{face_decoder_frontal.1} parent=1 // pred_region
      _
    $region29: #{face_decoder_frontal.1} parent=1 // pred_fallthru
      _
    // Predicated region
    $region30: #{face_decoder_frontal.1} parent=1 // pred_check
      _
    $region31: #{face_decoder_frontal.1} parent=1 // pred_check_branch
      %96 = sbr.rel (0) target = $region33
    $region32: #{face_decoder_frontal.1} parent=1 // pred_region
      _
    $region33: #{face_decoder_frontal.1} parent=1 // pred_fallthru
      _
    // Predicated region
    $region34: #{face_decoder_frontal.1} parent=1 // pred_check
      _
    $region35: #{face_decoder_frontal.1} parent=1 // pred_check_branch
      %98 = sbr.rel (0) target = $region37
    $region36: #{face_decoder_frontal.1} parent=1 // pred_region
      %100 = vsyncadd [#allocation6], 0
      %s101 = sshll.u32 %s17, 4
      %s102 = int_to_ptr.hbm [resolvable:$true] %s101
      %s103 = sshll.u32 [#allocation5], 4
      %s104 = int_to_ptr.vmem [resolvable:$true] %s103
      %109 = dma.hbm_to_vmem [thread:$0]  %s102, 1280, %s104, [#allocation6], 256, 256, 16
    $region37: #{face_decoder_frontal.1} parent=1 // pred_fallthru
      _
    // Predicated region
    $region38: #{face_decoder_frontal.1} parent=1 // pred_check
      _
    $region39: #{face_decoder_frontal.1} parent=1 // pred_check_branch
      %111 = sbr.rel (0) target = $region41
    $region40: #{face_decoder_frontal.1} parent=1 // pred_region
      _
    $region41: #{face_decoder_frontal.1} parent=1 // pred_fallthru
      _
    // Predicated region
    $region42: #{face_decoder_frontal.1} parent=1 // pred_check
      _
    $region43: #{face_decoder_frontal.1} parent=1 // pred_check_branch
      %113 = sbr.rel (0) target = $region45
    $region44: #{face_decoder_frontal.1} parent=1 // pred_region
      _
    $region45: #{face_decoder_frontal.1} parent=1 // pred_fallthru
      _
    // Predicated region
    $region46: #{face_decoder_frontal.1} parent=1 // pred_check
      _
    $region47: #{face_decoder_frontal.1} parent=1 // pred_check_branch
      %115 = sbr.rel (0) target = $region49
    $region48: #{face_decoder_frontal.1} parent=1 // pred_region
      _
    $region49: #{face_decoder_frontal.1} parent=1 // pred_fallthru
      _
    // Predicated region
    $region50: #{face_decoder_frontal.1} parent=1 // pred_check
      _
    $region51: #{face_decoder_frontal.1} parent=1 // pred_check_branch
      %117 = sbr.rel (0) target = $region53
    $region52: #{face_decoder_frontal.1} parent=1 // pred_region
      %119 = vsyncadd [#allocation9], 0
      %s120 = sshll.u32 %s25, 4
      %s121 = int_to_ptr.hbm [resolvable:$true] %s120
      %s122 = sshll.u32 [#allocation8], 4
      %s123 = int_to_ptr.vmem [resolvable:$true] %s122
      %128 = dma.hbm_to_vmem [thread:$0]  %s121, 4096, %s123, [#allocation9], 128, 128, 8
    $region53: #{face_decoder_frontal.1} parent=1 // pred_fallthru
      _
    // Predicated region
    $region54: #{face_decoder_frontal.1} parent=1 // pred_check
      _
    $region55: #{face_decoder_frontal.1} parent=1 // pred_check_branch
      %130 = sbr.rel (0) target = $region57
    $region56: #{face_decoder_frontal.1} parent=1 // pred_region
      %132 = vsyncadd [#allocation9], 0
      %s133 = sshll.u32 %s27, 4
      %s134 = int_to_ptr.hbm [resolvable:$true] %s133
      %s135 = sshll.u32 [#allocation10], 4
      %s136 = int_to_ptr.vmem [resolvable:$true] %s135
      %141 = dma.hbm_to_vmem [thread:$0]  %s134, 4096, %s136, [#allocation9], 128, 128, 8
    $region57: #{face_decoder_frontal.1} parent=1 // pred_fallthru
      _
    // Predicated region
    $region58: #{face_decoder_frontal.1} parent=1 // pred_check
      _
    $region59: #{face_decoder_frontal.1} parent=1 // pred_check_branch
      %143 = sbr.rel (0) target = $region61
    $region60: #{face_decoder_frontal.1} parent=1 // pred_region
      _
    $region61: #{face_decoder_frontal.1} parent=1 // pred_fallthru
      _
    // Predicated region
    $region62: #{face_decoder_frontal.1} parent=1 // pred_check
      _
    $region63: #{face_decoder_frontal.1} parent=1 // pred_check_branch
      %145 = sbr.rel (0) target = $region65
    $region64: #{face_decoder_frontal.1} parent=1 // pred_region
      _
    $region65: #{face_decoder_frontal.1} parent=1 // pred_fallthru
      _
    // Predicated region
    $region66: #{face_decoder_frontal.1} parent=1 // pred_check
      _
    $region67: #{face_decoder_frontal.1} parent=1 // pred_check_branch
      %147 = sbr.rel (0) target = $region69
    $region68: #{face_decoder_frontal.1} parent=1 // pred_region
      _
    $region69: #{face_decoder_frontal.1} parent=1 // pred_fallthru
      _
    // Predicated region
    $region70: #{face_decoder_frontal.1} parent=1 // pred_check
      _
    $region71: #{face_decoder_frontal.1} parent=1 // pred_check_branch
      %149 = sbr.rel (0) target = $region73
    $region72: #{face_decoder_frontal.1} parent=1 // pred_region
      _
    $region73: #{face_decoder_frontal.1} parent=1 // pred_fallthru
      _
    // Predicated region
    $region74: #{face_decoder_frontal.1} parent=1 // pred_check
      _
    $region75: #{face_decoder_frontal.1} parent=1 // pred_check_branch
      %151 = sbr.rel (0) target = $region77
    $region76: #{face_decoder_frontal.1} parent=1 // pred_region
      _
    $region77: #{face_decoder_frontal.1} parent=1 // pred_fallthru
      _
    // Predicated region
    $region78: #{face_decoder_frontal.1} parent=1 // pred_check
      _
    $region79: #{face_decoder_frontal.1} parent=1 // pred_check_branch
      %153 = sbr.rel (0) target = $region81
    $region80: #{face_decoder_frontal.1} parent=1 // pred_region
      _
    $region81: #{face_decoder_frontal.1} parent=1 // pred_fallthru
      _
    // Predicated region
    $region82: #{face_decoder_frontal.1} parent=1 // pred_check
      _
    $region83: #{face_decoder_frontal.1} parent=1 // pred_check_branch
      %155 = sbr.rel (0) target = $region85
    $region84: #{face_decoder_frontal.1} parent=1 // pred_region
      _
    $region85: #{face_decoder_frontal.1} parent=1 // pred_fallthru
      _
    // Predicated region
    $region86: #{face_decoder_frontal.1} parent=1 // pred_check
      _
    $region87: #{face_decoder_frontal.1} parent=1 // pred_check_branch
      %157 = sbr.rel (0) target = $region89
    $region88: #{face_decoder_frontal.1} parent=1 // pred_region
      _
    $region89: #{face_decoder_frontal.1} parent=1 // pred_fallthru
      _
    // Predicated region
    $region90: #{face_decoder_frontal.1} parent=1 // pred_check
      _
    $region91: #{face_decoder_frontal.1} parent=1 // pred_check_branch
      %159 = sbr.rel (0) target = $region93
    $region92: #{face_decoder_frontal.1} parent=1 // pred_region
      _
    $region93: #{face_decoder_frontal.1} parent=1 // pred_fallthru
      _
    // Predicated region
    $region94: #{face_decoder_frontal.1} parent=1 // pred_check
      _
    $region95: #{face_decoder_frontal.1} parent=1 // pred_check_branch
      %161 = sbr.rel (0) target = $region97
    $region96: #{face_decoder_frontal.1} parent=1 // pred_region
      %163 = vsyncadd [#allocation12], 0
      %s164 = sshll.u32 %s47, 4
      %s165 = int_to_ptr.hbm [resolvable:$true] %s164
      %s166 = sshll.u32 [#allocation11], 4
      %s167 = int_to_ptr.vmem [resolvable:$true] %s166
      %172 = dma.hbm_to_vmem [thread:$0]  %s165, 512, %s167, [#allocation12], 128, 128, 8
    $region97: #{face_decoder_frontal.1} parent=1 // pred_fallthru
      _
    // Predicated region
    $region98: #{face_decoder_frontal.1} parent=1 // pred_check
      _
    $region99: #{face_decoder_frontal.1} parent=1 // pred_check_branch
      %174 = sbr.rel (0) target = $region101
    $region100: #{face_decoder_frontal.1} parent=1 // pred_region
      _
    $region101: #{face_decoder_frontal.1} parent=1 // pred_fallthru
      _
    // Predicated region
    $region102: #{face_decoder_frontal.1} parent=1 // pred_check
      _
    $region103: #{face_decoder_frontal.1} parent=1 // pred_check_branch
      %176 = sbr.rel (0) target = $region105
    $region104: #{face_decoder_frontal.1} parent=1 // pred_region
      _
    $region105: #{face_decoder_frontal.1} parent=1 // pred_fallthru
      _
    // Predicated region
    $region106: #{face_decoder_frontal.1} parent=1 // pred_check
      _
    $region107: #{face_decoder_frontal.1} parent=1 // pred_check_branch
      %178 = sbr.rel (0) target = $region109
    $region108: #{face_decoder_frontal.1} parent=1 // pred_region
      _
    $region109: #{face_decoder_frontal.1} parent=1 // pred_fallthru
      _
    // Predicated region
    $region110: #{face_decoder_frontal.1} parent=1 // pred_check
      _
    $region111: #{face_decoder_frontal.1} parent=1 // pred_check_branch
      %180 = sbr.rel (0) target = $region113
    $region112: #{face_decoder_frontal.1} parent=1 // pred_region
      _
    $region113: #{face_decoder_frontal.1} parent=1 // pred_fallthru
      _
    // Predicated region
    $region114: #{face_decoder_frontal.1} parent=1 // pred_check
      _
    $region115: #{face_decoder_frontal.1} parent=1 // pred_check_branch
      %182 = sbr.rel (0) target = $region117
    $region116: #{face_decoder_frontal.1} parent=1 // pred_region
      _
    $region117: #{face_decoder_frontal.1} parent=1 // pred_fallthru
      _
    // Predicated region
    $region118: #{face_decoder_frontal.1} parent=1 // pred_check
      _
    $region119: #{face_decoder_frontal.1} parent=1 // pred_check_branch
      %184 = sbr.rel (0) target = $region121
    $region120: #{face_decoder_frontal.1} parent=1 // pred_region
      _
    $region121: #{face_decoder_frontal.1} parent=1 // pred_fallthru
      _
    // Predicated region
    $region122: #{face_decoder_frontal.1} parent=1 // pred_check
      _
    $region123: #{face_decoder_frontal.1} parent=1 // pred_check_branch
      %186 = sbr.rel (0) target = $region125
    $region124: #{face_decoder_frontal.1} parent=1 // pred_region
      %188 = vsyncadd [#allocation12], 0
      %s189 = sshll.u32 %s61, 4
      %s190 = int_to_ptr.hbm [resolvable:$true] %s189
      %s191 = sshll.u32 [#allocation13], 4
      %s192 = int_to_ptr.vmem [resolvable:$true] %s191
      %197 = dma.hbm_to_vmem [thread:$0]  %s190, 1024, %s192, [#allocation12], 128, 128, 8
    $region125: #{face_decoder_frontal.1} parent=1 // pred_fallthru
      _
    // Predicated region
    $region126: #{face_decoder_frontal.1} parent=1 // pred_check
      _
    $region127: #{face_decoder_frontal.1} parent=1 // pred_check_branch
      %199 = sbr.rel (0) target = $region129
    $region128: #{face_decoder_frontal.1} parent=1 // pred_region
      %201 = vsyncadd [#allocation15], 0
      %s202 = sshll.u32 %s63, 4
      %s203 = int_to_ptr.hbm [resolvable:$true] %s202
      %s204 = sshll.u32 [#allocation14], 4
      %s205 = int_to_ptr.vmem [resolvable:$true] %s204
      %210 = dma.hbm_to_vmem [thread:$0]  %s203, 1024, %s205, [#allocation15], 128, 128, 8
    $region129: #{face_decoder_frontal.1} parent=1 // pred_fallthru
      _
    // Predicated region
    $region130: #{face_decoder_frontal.1} parent=1 // pred_check
      _
    $region131: #{face_decoder_frontal.1} parent=1 // pred_check_branch
      %212 = sbr.rel (0) target = $region133
    $region132: #{face_decoder_frontal.1} parent=1 // pred_region
      %214 = dma.done [#allocation6], 1280
    $region133: #{face_decoder_frontal.1} parent=1 // pred_fallthru
      _
    // Predicated region
    $region134: #{face_decoder_frontal.1} parent=1 // pred_check
      _
    $region135: #{face_decoder_frontal.1} parent=1 // pred_check_branch
      %216 = sbr.rel (0) target = $region137
    $region136: #{face_decoder_frontal.1} parent=1 // pred_region
      %218 = dma.done [#allocation9], 4096
    $region137: #{face_decoder_frontal.1} parent=1 // pred_fallthru
      _
    // Predicated region
    $region138: #{face_decoder_frontal.1} parent=1 // pred_check
      _
    $region139: #{face_decoder_frontal.1} parent=1 // pred_check_branch
      %220 = sbr.rel (0) target = $region141
    $region140: #{face_decoder_frontal.1} parent=1 // pred_region
      %222 = dma.done [#allocation9], 4096
    $region141: #{face_decoder_frontal.1} parent=1 // pred_fallthru
      _
    // Predicated region
    $region142: #{face_decoder_frontal.1} parent=1 // pred_check
      _
    $region143: #{face_decoder_frontal.1} parent=1 // pred_check_branch
      %224 = sbr.rel (0) target = $region145
    $region144: #{face_decoder_frontal.1} parent=1 // pred_region
      %226 = dma.done [#allocation12], 512
    $region145: #{face_decoder_frontal.1} parent=1 // pred_fallthru
      _
    // Predicated region
    $region146: #{face_decoder_frontal.1} parent=1 // pred_check
      _
    $region147: #{face_decoder_frontal.1} parent=1 // pred_check_branch
      %228 = sbr.rel (0) target = $region149
    $region148: #{face_decoder_frontal.1} parent=1 // pred_region
      %230 = dma.done [#allocation12], 1024
    $region149: #{face_decoder_frontal.1} parent=1 // pred_fallthru
      _
    // Predicated region
    $region150: #{face_decoder_frontal.1} parent=1 // pred_check
      _
    $region151: #{face_decoder_frontal.1} parent=1 // pred_check_branch
      %232 = sbr.rel (0) target = $region153
    $region152: #{face_decoder_frontal.1} parent=1 // pred_region
      %234 = dma.done [#allocation15], 1024
    $region153: #{face_decoder_frontal.1} parent=1 // pred_fallthru
      _
    %v235 = vld [vmem:[%s1] sm:$0x3]
    %v236 = vld [vmem:[%s5] sm:$0xff]
    %v237 = vld [vmem:[%s5 + $0x8] sm:$0xff]
    %v238 = vld [vmem:[%s5 + $0x10] sm:$0xff]
    %v239 = vld [vmem:[%s5 + $0x18] sm:$0xff]
    %v240 = vld [vmem:[%s7] sm:$0x1]
    %v242 = vperm.slane %v240, 0
    %vm244 = vcmask 261120
    %v246 = vsel %vm244, %v235, 0
    %248 = vmatpush.msra.mxu0 0.0
    %249 = vmatpush.msra.mxu0 0.0
    %250 = vmatpush.msra.mxu0 0.0
    %251 = vmatpush.msra.mxu0 0.0
    %252 = vmatpush.msra.mxu0 0.0
    %253 = vmatpush.msra.mxu0 0.0
    %254 = vmatpush.msra.mxu0 0.0
    %255 = vmatpush.msra.mxu0 0.0
    %256 = vmatpush.msra.mxu0 0.0
    %257 = vmatpush.msra.mxu0 0.0
    %258 = vmatpush.msra.mxu0 0.0
    %259 = vmatpush.msra.mxu0 0.0
    %260 = vmatpush.msra.mxu0 %v239
    %261 = vmatpush.msra.mxu0 %v238
    %262 = vmatpush.msra.mxu0 %v237
    %263 = vmatpush.msra.mxu0 %v236
    %264 = vmatmul.f32.gmra.mxu0 %v246
    %v265 = vpop.f32.mrf.mxu0
    %v266 = vadd.f32 %v242, %v265
    %267 = vdwg.mxu0
    %vm268 = vcmp.ge.f32.partialorder %v266, 0.0
    %v269 = vmul.f32 %v266, 0.2
    %v270 = vsel %vm268, %v266, %v269
    %v271 = vld [vmem:[%s9] sm:$0xff]
    %v272 = vld [vmem:[%s9 + $0x8] sm:$0xff]
    %v273 = vld [vmem:[%s9 + $0x10] sm:$0xff]
    %v274 = vld [vmem:[%s9 + $0x18] sm:$0xff]
    %v275 = vld [vmem:[%s11] sm:$0x1]
    %v277 = vperm.slane %v275, 0
    %v280 = vsel %vm244, %v270, 0
    %282 = vmatpush.msra.mxu0 0.0
    %283 = vmatpush.msra.mxu0 0.0
    %284 = vmatpush.msra.mxu0 0.0
    %285 = vmatpush.msra.mxu0 0.0
    %286 = vmatpush.msra.mxu0 0.0
    %287 = vmatpush.msra.mxu0 0.0
    %288 = vmatpush.msra.mxu0 0.0
    %289 = vmatpush.msra.mxu0 0.0
    %290 = vmatpush.msra.mxu0 0.0
    %291 = vmatpush.msra.mxu0 0.0
    %292 = vmatpush.msra.mxu0 0.0
    %293 = vmatpush.msra.mxu0 0.0
    %294 = vmatpush.msra.mxu0 %v274
    %295 = vmatpush.msra.mxu0 %v273
    %296 = vmatpush.msra.mxu0 %v272
    %297 = vmatpush.msra.mxu0 %v271
    %298 = vmatmul.f32.gmra.mxu0 %v280
    %v299 = vpop.f32.mrf.mxu0
    %v300 = vadd.f32 %v277, %v299
    %301 = vdwg.mxu0
    %vm302 = vcmask 386048
    %303 = vst.msk [vmem:[%s65] sm:$0x3] %vm302, %v300
    %v304 = vld [vmem:[%s3] sm:$0x1]
    %v305 = vld [vmem:[%s13] sm:$0x7]
    %v306 = vld [vmem:[%s15] sm:$0x1]
    %vm307 = vcmask 23552
    %v309 = vsel %vm307, %v304, 0
    %vm311 = vcmask 1042432
    %v313 = vsel %vm311, %v305, 0
    %315 = vmatpush.msra.mxu0 0.0
    %316 = vmatpush.msra.mxu0 0.0
    %317 = vmatpush.msra.mxu0 0.0
    %318 = vmatpush.msra.mxu0 0.0
    %319 = vmatpush.msra.mxu0 0.0
    %320 = vmatpush.msra.mxu0 0.0
    %321 = vmatpush.msra.mxu0 0.0
    %322 = vmatpush.msra.mxu0 0.0
    %323 = vmatpush.msra.mxu0 0.0
    %324 = vmatpush.msra.mxu0 0.0
    %325 = vmatpush.msra.mxu0 0.0
    %326 = vmatpush.msra.mxu0 0.0
    %327 = vmatpush.msra.mxu0 0.0
    %328 = vmatpush.msra.mxu0 0.0
    %329 = vmatpush.msra.mxu0 0.0
    %330 = vmatpush.msra.mxu0 %v313
    %331 = vmatmul.f32.gmra.mxu0 %v309
    %v332 = vpop.f32.mrf.mxu0
    %v333 = vadd.f32 %v306, %v332
    %334 = vdwg.mxu0
    %vm335 = vcmp.ge.f32.partialorder %v333, 0.0
    %v336 = vmul.f32 %v333, 0.2
    %v337 = vsel %vm335, %v333, %v336
    %v338 = vperm.slane %v337, 0
    %340 = vrot.lane.b32.xlu0 %v338, 32
    %v341 = vpop.permute.xlu0 %340
    %v343 = vsel %vm244, %v270, %v341
    %v344 = vld [vmem:[#allocation5] sm:$0xff]
    %v345 = vld [vmem:[#allocation5 + $0x8] sm:$0xff]
    %v346 = vld [vmem:[#allocation5 + $0x10] sm:$0xff]
    %v347 = vld [vmem:[#allocation5 + $0x18] sm:$0xff]
    %v348 = vld [vmem:[#allocation5 + $0x20] sm:$0xff]
    %v349 = vld [vmem:[#allocation5 + $0x28] sm:$0xff]
    %v350 = vld [vmem:[#allocation5 + $0x30] sm:$0xff]
    %v351 = vld [vmem:[#allocation5 + $0x38] sm:$0xff]
    %v352 = vld [vmem:[#allocation5 + $0x40] sm:$0xff]
    %v353 = vld [vmem:[#allocation5 + $0x48] sm:$0xff]
    %v354 = vld [vmem:[%s19] sm:$0x3]
    %v356 = vperm.slane %v354, 0
    %v357 = vperm.slane %v354, 1
    %vm360 = vcmask 326656
    %v362 = vsel %vm360, %v343, 0
    %364 = vmatpush.msra.mxu0 0.0
    %365 = vmatpush.msra.mxu0 0.0
    %366 = vmatpush.msra.mxu0 0.0
    %367 = vmatpush.msra.mxu0 0.0
    %368 = vmatpush.msra.mxu0 0.0
    %369 = vmatpush.msra.mxu0 0.0
    %370 = vmatpush.msra.mxu0 0.0
    %371 = vmatpush.msra.mxu0 0.0
    %372 = vmatpush.msra.mxu0 0.0
    %373 = vmatpush.msra.mxu0 0.0
    %374 = vmatpush.msra.mxu0 0.0
    %375 = vmatpush.msra.mxu0 %v352
    %376 = vmatpush.msra.mxu0 %v350
    %377 = vmatpush.msra.mxu0 %v348
    %378 = vmatpush.msra.mxu0 %v346
    %379 = vmatpush.msra.mxu0 %v344
    %380 = vmatmul.f32.gmra.mxu0 %v362
    %v381 = vpop.f32.mrf.mxu0
    %v382 = vadd.f32 %v356, %v381
    %383 = vdwg.mxu0
    %384 = vmatpush.msra.mxu0 0.0
    %385 = vmatpush.msra.mxu0 0.0
    %386 = vmatpush.msra.mxu0 0.0
    %387 = vmatpush.msra.mxu0 0.0
    %388 = vmatpush.msra.mxu0 0.0
    %389 = vmatpush.msra.mxu0 0.0
    %390 = vmatpush.msra.mxu0 0.0
    %391 = vmatpush.msra.mxu0 0.0
    %392 = vmatpush.msra.mxu0 0.0
    %393 = vmatpush.msra.mxu0 0.0
    %394 = vmatpush.msra.mxu0 0.0
    %395 = vmatpush.msra.mxu0 %v353
    %396 = vmatpush.msra.mxu0 %v351
    %397 = vmatpush.msra.mxu0 %v349
    %398 = vmatpush.msra.mxu0 %v347
    %399 = vmatpush.msra.mxu0 %v345
    %400 = vmatmul.f32.gmra.mxu0 %v362
    %v401 = vpop.f32.mrf.mxu0
    %v402 = vadd.f32 %v357, %v401
    %403 = vdwg.mxu0
    %vm404 = vcmp.ge.f32.partialorder %v382, 0.0
    %vm405 = vcmp.ge.f32.partialorder %v402, 0.0
    %v406 = vmul.f32 %v382, 0.2
    %v407 = vmul.f32 %v402, 0.2
    %v408 = vsel %vm404, %v382, %v406
    %v409 = vsel %vm405, %v402, %v407
    %vm410 = vcmask 785408
    %411 = vst.msk [vmem:[#allocation2] sm:$0xff] %vm410, 0.0
    %vm412 = vcmask 781312
    %413 = vst.msk [vmem:[#allocation2 + $0x8] sm:$0xf] %vm412, 0.0
    %415 = vrot.lane.b32.xlu0 %v408, 16
    %v416 = vpop.permute.xlu0 %415
    %vm418 = vcmask 647296
    %419 = vst.msk [vmem:[#allocation2 + $0x1] sm:$0x1] %vm418, %v416
    %420 = vrot.lane.b32.xlu0 %v408, 80
    %v421 = vpop.permute.xlu0 %420
    %423 = vst.msk [vmem:[#allocation2 + $0x2] sm:$0x1] %vm418, %v421
    %425 = vrot.lane.b32.xlu0 %v409, 16
    %v426 = vpop.permute.xlu0 %425
    %428 = vst.msk [vmem:[#allocation2 + $0x3] sm:$0x1] %vm418, %v426
    %429 = vrot.lane.b32.xlu0 %v409, 80
    %v430 = vpop.permute.xlu0 %429
    %432 = vst.msk [vmem:[#allocation2 + $0x4] sm:$0x1] %vm418, %v430
    %vm433 = vcmask 648321
    %434 = vst.msk [vmem:[#allocation2 + $0x6] sm:$0x2] %vm433, %v416
    %435 = vst.msk [vmem:[#allocation2 + $0x7] sm:$0x2] %vm433, %v421
    %436 = vst.msk [vmem:[#allocation2 + $0x8] sm:$0x2] %vm433, %v426
    %437 = vst.msk [vmem:[#allocation2 + $0x9] sm:$0x2] %vm433, %v430
    %v438 = vld [vmem:[#allocation2 + $0x1] sm:$0xf]
    %v439 = vld [vmem:[#allocation2 + $0x7] sm:$0xf]
    %v441 = vrot.slane %v439, 4
    %vm443 = vcmask 1043456
    %v444 = vsel %vm443, %v438, %v441
    %v445 = vld [vmem:[#allocation2] sm:$0xf]
    %v446 = vld [vmem:[#allocation2 + $0x6] sm:$0xf]
    %v448 = vrot.slane %v446, 4
    %v450 = vsel %vm443, %v445, %v448
    %452 = vrot.lane.b32.xlu0 %v444, 112
    %v453 = vpop.permute.xlu0 %452
    %455 = vrot.lane.b32.xlu0 %v444, 64
    %v456 = vpop.permute.xlu0 %455
    %459 = vrot.lane.b32.xlu0 %v450, 112
    %v460 = vpop.permute.xlu0 %459
    %462 = vrot.lane.b32.xlu0 %v450, 64
    %v463 = vpop.permute.xlu0 %462
    %vm465 = vcmask 523264
    %v466 = vsel %vm465, %v453, %v456
    %v467 = vsel %vm465, %v460, %v463
    %v468 = vld [vmem:[%s21] sm:$0xff]
    %v469 = vld [vmem:[%s21 + $0x8] sm:$0xff]
    %v470 = vld [vmem:[%s21 + $0x10] sm:$0xff]
    %v471 = vld [vmem:[%s21 + $0x18] sm:$0xff]
    %v472 = vld [vmem:[%s21 + $0x20] sm:$0xff]
    %v473 = vld [vmem:[%s21 + $0x28] sm:$0xff]
    %v474 = vld [vmem:[%s21 + $0x30] sm:$0xff]
    %v475 = vld [vmem:[%s21 + $0x38] sm:$0xff]
    %v476 = vld [vmem:[%s21 + $0x40] sm:$0xff]
    %v477 = vld [vmem:[%s21 + $0x48] sm:$0xff]
    %v478 = vld [vmem:[%s21 + $0x50] sm:$0xff]
    %v479 = vld [vmem:[%s21 + $0x58] sm:$0xff]
    %v480 = vld [vmem:[%s21 + $0x60] sm:$0xff]
    %v481 = vld [vmem:[%s21 + $0x68] sm:$0xff]
    %v482 = vld [vmem:[%s21 + $0x70] sm:$0xff]
    %v483 = vld [vmem:[%s21 + $0x78] sm:$0xff]
    %v484 = vld [vmem:[%s21 + $0x80] sm:$0xff]
    %v485 = vld [vmem:[%s21 + $0x88] sm:$0xff]
    %v486 = vld [vmem:[%s21 + $0x90] sm:$0xff]
    %v487 = vld [vmem:[%s21 + $0x98] sm:$0xff]
    %v488 = vld [vmem:[%s21 + $0xa0] sm:$0xff]
    %v489 = vld [vmem:[%s21 + $0xa8] sm:$0xff]
    %v490 = vld [vmem:[%s21 + $0xb0] sm:$0xff]
    %v491 = vld [vmem:[%s21 + $0xb8] sm:$0xff]
    %v492 = vld [vmem:[%s21 + $0xc0] sm:$0xff]
    %v493 = vld [vmem:[%s21 + $0xc8] sm:$0xff]
    %v494 = vld [vmem:[%s21 + $0xd0] sm:$0xff]
    %v495 = vld [vmem:[%s21 + $0xd8] sm:$0xff]
    %v496 = vld [vmem:[%s21 + $0xe0] sm:$0xff]
    %v497 = vld [vmem:[%s21 + $0xe8] sm:$0xff]
    %v498 = vld [vmem:[%s21 + $0xf0] sm:$0xff]
    %v499 = vld [vmem:[%s21 + $0xf8] sm:$0xff]
    %500 = vrot.lane.b32.xlu0 %v444, 32
    %v501 = vpop.permute.xlu0 %500
    %503 = vrot.lane.b32.xlu0 %v450, 32
    %v504 = vpop.permute.xlu0 %503
    %v506 = vsel %vm465, %v453, %v501
    %v507 = vsel %vm465, %v460, %v504
    %v508 = vld [vmem:[%s23] sm:$0xff]
    %v509 = vld [vmem:[%s23 + $0x8] sm:$0xff]
    %v510 = vld [vmem:[%s23 + $0x10] sm:$0xff]
    %v511 = vld [vmem:[%s23 + $0x18] sm:$0xff]
    %v512 = vld [vmem:[%s23 + $0x20] sm:$0xff]
    %v513 = vld [vmem:[%s23 + $0x28] sm:$0xff]
    %v514 = vld [vmem:[%s23 + $0x30] sm:$0xff]
    %v515 = vld [vmem:[%s23 + $0x38] sm:$0xff]
    %v516 = vld [vmem:[%s23 + $0x40] sm:$0xff]
    %v517 = vld [vmem:[%s23 + $0x48] sm:$0xff]
    %v518 = vld [vmem:[%s23 + $0x50] sm:$0xff]
    %v519 = vld [vmem:[%s23 + $0x58] sm:$0xff]
    %v520 = vld [vmem:[%s23 + $0x60] sm:$0xff]
    %v521 = vld [vmem:[%s23 + $0x68] sm:$0xff]
    %v522 = vld [vmem:[%s23 + $0x70] sm:$0xff]
    %v523 = vld [vmem:[%s23 + $0x78] sm:$0xff]
    %v524 = vld [vmem:[%s23 + $0x80] sm:$0xff]
    %v525 = vld [vmem:[%s23 + $0x88] sm:$0xff]
    %v526 = vld [vmem:[%s23 + $0x90] sm:$0xff]
    %v527 = vld [vmem:[%s23 + $0x98] sm:$0xff]
    %v528 = vld [vmem:[%s23 + $0xa0] sm:$0xff]
    %v529 = vld [vmem:[%s23 + $0xa8] sm:$0xff]
    %v530 = vld [vmem:[%s23 + $0xb0] sm:$0xff]
    %v531 = vld [vmem:[%s23 + $0xb8] sm:$0xff]
    %v532 = vld [vmem:[%s23 + $0xc0] sm:$0xff]
    %v533 = vld [vmem:[%s23 + $0xc8] sm:$0xff]
    %v534 = vld [vmem:[%s23 + $0xd0] sm:$0xff]
    %v535 = vld [vmem:[%s23 + $0xd8] sm:$0xff]
    %v536 = vld [vmem:[%s23 + $0xe0] sm:$0xff]
    %v537 = vld [vmem:[%s23 + $0xe8] sm:$0xff]
    %v538 = vld [vmem:[%s23 + $0xf0] sm:$0xff]
    %v539 = vld [vmem:[%s23 + $0xf8] sm:$0xff]
    %540 = vmatpush.msra.mxu0 %v523
    %541 = vmatpush.msra.mxu0 %v522
    %542 = vmatpush.msra.mxu0 %v521
    %543 = vmatpush.msra.mxu0 %v520
    %544 = vmatpush.msra.mxu0 %v519
    %545 = vmatpush.msra.mxu0 %v518
    %546 = vmatpush.msra.mxu0 %v517
    %547 = vmatpush.msra.mxu0 %v516
    %548 = vmatpush.msra.mxu0 %v515
    %549 = vmatpush.msra.mxu0 %v514
    %550 = vmatpush.msra.mxu0 %v513
    %551 = vmatpush.msra.mxu0 %v512
    %552 = vmatpush.msra.mxu0 %v511
    %553 = vmatpush.msra.mxu0 %v510
    %554 = vmatpush.msra.mxu0 %v509
    %555 = vmatpush.msra.mxu0 %v508
    %556 = vmatmul.f32.gmra.mxu0 %v506
    %v557 = vpop.f32.mrf.mxu0
    %v558 = vadd.f32 0.0, %v557
    %559 = vdwg.mxu0
    %560 = vmatpush.msra.mxu0 %v539
    %561 = vmatpush.msra.mxu0 %v538
    %562 = vmatpush.msra.mxu0 %v537
    %563 = vmatpush.msra.mxu0 %v536
    %564 = vmatpush.msra.mxu0 %v535
    %565 = vmatpush.msra.mxu0 %v534
    %566 = vmatpush.msra.mxu0 %v533
    %567 = vmatpush.msra.mxu0 %v532
    %568 = vmatpush.msra.mxu0 %v531
    %569 = vmatpush.msra.mxu0 %v530
    %570 = vmatpush.msra.mxu0 %v529
    %571 = vmatpush.msra.mxu0 %v528
    %572 = vmatpush.msra.mxu0 %v527
    %573 = vmatpush.msra.mxu0 %v526
    %574 = vmatpush.msra.mxu0 %v525
    %575 = vmatpush.msra.mxu0 %v524
    %576 = vmatmul.f32.gmra.mxu0 %v507
    %v577 = vpop.f32.mrf.mxu0
    %v578 = vadd.f32 %v558, %v577
    %579 = vdwg.mxu0
    %580 = vmatpush.msra.mxu0 %v483
    %581 = vmatpush.msra.mxu0 %v482
    %582 = vmatpush.msra.mxu0 %v481
    %583 = vmatpush.msra.mxu0 %v480
    %584 = vmatpush.msra.mxu0 %v479
    %585 = vmatpush.msra.mxu0 %v478
    %586 = vmatpush.msra.mxu0 %v477
    %587 = vmatpush.msra.mxu0 %v476
    %588 = vmatpush.msra.mxu0 %v475
    %589 = vmatpush.msra.mxu0 %v474
    %590 = vmatpush.msra.mxu0 %v473
    %591 = vmatpush.msra.mxu0 %v472
    %592 = vmatpush.msra.mxu0 %v471
    %593 = vmatpush.msra.mxu0 %v470
    %594 = vmatpush.msra.mxu0 %v469
    %595 = vmatpush.msra.mxu0 %v468
    %596 = vmatmul.f32.gmra.mxu0 %v466
    %v597 = vpop.f32.mrf.mxu0
    %v598 = vadd.f32 %v578, %v597
    %599 = vdwg.mxu0
    %600 = vmatpush.msra.mxu0 %v499
    %601 = vmatpush.msra.mxu0 %v498
    %602 = vmatpush.msra.mxu0 %v497
    %603 = vmatpush.msra.mxu0 %v496
    %604 = vmatpush.msra.mxu0 %v495
    %605 = vmatpush.msra.mxu0 %v494
    %606 = vmatpush.msra.mxu0 %v493
    %607 = vmatpush.msra.mxu0 %v492
    %608 = vmatpush.msra.mxu0 %v491
    %609 = vmatpush.msra.mxu0 %v490
    %610 = vmatpush.msra.mxu0 %v489
    %611 = vmatpush.msra.mxu0 %v488
    %612 = vmatpush.msra.mxu0 %v487
    %613 = vmatpush.msra.mxu0 %v486
    %614 = vmatpush.msra.mxu0 %v485
    %615 = vmatpush.msra.mxu0 %v484
    %616 = vmatmul.f32.gmra.mxu0 %v467
    %v617 = vpop.f32.mrf.mxu0
    %v618 = vadd.f32 %v598, %v617
    %619 = vdwg.mxu0
    %v620 = vld [vmem:[#allocation2 + $0x2] sm:$0xf]
    %v621 = vld [vmem:[#allocation2 + $0x8] sm:$0xf]
    %v623 = vrot.slane %v621, 4
    %v625 = vsel %vm443, %v620, %v623
    %627 = vrot.lane.b32.xlu0 %v625, 112
    %v628 = vpop.permute.xlu0 %627
    %630 = vrot.lane.b32.xlu0 %v625, 64
    %v631 = vpop.permute.xlu0 %630
    %v633 = vsel %vm465, %v628, %v631
    %v634 = vld [vmem:[#allocation8] sm:$0xff]
    %v635 = vld [vmem:[#allocation8 + $0x8] sm:$0xff]
    %v636 = vld [vmem:[#allocation8 + $0x10] sm:$0xff]
    %v637 = vld [vmem:[#allocation8 + $0x18] sm:$0xff]
    %v638 = vld [vmem:[#allocation8 + $0x20] sm:$0xff]
    %v639 = vld [vmem:[#allocation8 + $0x28] sm:$0xff]
    %v640 = vld [vmem:[#allocation8 + $0x30] sm:$0xff]
    %v641 = vld [vmem:[#allocation8 + $0x38] sm:$0xff]
    %v642 = vld [vmem:[#allocation8 + $0x40] sm:$0xff]
    %v643 = vld [vmem:[#allocation8 + $0x48] sm:$0xff]
    %v644 = vld [vmem:[#allocation8 + $0x50] sm:$0xff]
    %v645 = vld [vmem:[#allocation8 + $0x58] sm:$0xff]
    %v646 = vld [vmem:[#allocation8 + $0x60] sm:$0xff]
    %v647 = vld [vmem:[#allocation8 + $0x68] sm:$0xff]
    %v648 = vld [vmem:[#allocation8 + $0x70] sm:$0xff]
    %v649 = vld [vmem:[#allocation8 + $0x78] sm:$0xff]
    %v650 = vld [vmem:[#allocation8 + $0x80] sm:$0xff]
    %v651 = vld [vmem:[#allocation8 + $0x88] sm:$0xff]
    %v652 = vld [vmem:[#allocation8 + $0x90] sm:$0xff]
    %v653 = vld [vmem:[#allocation8 + $0x98] sm:$0xff]
    %v654 = vld [vmem:[#allocation8 + $0xa0] sm:$0xff]
    %v655 = vld [vmem:[#allocation8 + $0xa8] sm:$0xff]
    %v656 = vld [vmem:[#allocation8 + $0xb0] sm:$0xff]
    %v657 = vld [vmem:[#allocation8 + $0xb8] sm:$0xff]
    %v658 = vld [vmem:[#allocation8 + $0xc0] sm:$0xff]
    %v659 = vld [vmem:[#allocation8 + $0xc8] sm:$0xff]
    %v660 = vld [vmem:[#allocation8 + $0xd0] sm:$0xff]
    %v661 = vld [vmem:[#allocation8 + $0xd8] sm:$0xff]
    %v662 = vld [vmem:[#allocation8 + $0xe0] sm:$0xff]
    %v663 = vld [vmem:[#allocation8 + $0xe8] sm:$0xff]
    %v664 = vld [vmem:[#allocation8 + $0xf0] sm:$0xff]
    %v665 = vld [vmem:[#allocation8 + $0xf8] sm:$0xff]
    %666 = vrot.lane.b32.xlu0 %v625, 32
    %v667 = vpop.permute.xlu0 %666
    %v669 = vsel %vm465, %v628, %v667
    %v670 = vld [vmem:[#allocation10] sm:$0xff]
    %v671 = vld [vmem:[#allocation10 + $0x8] sm:$0xff]
    %v672 = vld [vmem:[#allocation10 + $0x10] sm:$0xff]
    %v673 = vld [vmem:[#allocation10 + $0x18] sm:$0xff]
    %v674 = vld [vmem:[#allocation10 + $0x20] sm:$0xff]
    %v675 = vld [vmem:[#allocation10 + $0x28] sm:$0xff]
    %v676 = vld [vmem:[#allocation10 + $0x30] sm:$0xff]
    %v677 = vld [vmem:[#allocation10 + $0x38] sm:$0xff]
    %v678 = vld [vmem:[#allocation10 + $0x40] sm:$0xff]
    %v679 = vld [vmem:[#allocation10 + $0x48] sm:$0xff]
    %v680 = vld [vmem:[#allocation10 + $0x50] sm:$0xff]
    %v681 = vld [vmem:[#allocation10 + $0x58] sm:$0xff]
    %v682 = vld [vmem:[#allocation10 + $0x60] sm:$0xff]
    %v683 = vld [vmem:[#allocation10 + $0x68] sm:$0xff]
    %v684 = vld [vmem:[#allocation10 + $0x70] sm:$0xff]
    %v685 = vld [vmem:[#allocation10 + $0x78] sm:$0xff]
    %v686 = vld [vmem:[#allocation10 + $0x80] sm:$0xff]
    %v687 = vld [vmem:[#allocation10 + $0x88] sm:$0xff]
    %v688 = vld [vmem:[#allocation10 + $0x90] sm:$0xff]
    %v689 = vld [vmem:[#allocation10 + $0x98] sm:$0xff]
    %v690 = vld [vmem:[#allocation10 + $0xa0] sm:$0xff]
    %v691 = vld [vmem:[#allocation10 + $0xa8] sm:$0xff]
    %v692 = vld [vmem:[#allocation10 + $0xb0] sm:$0xff]
    %v693 = vld [vmem:[#allocation10 + $0xb8] sm:$0xff]
    %v694 = vld [vmem:[#allocation10 + $0xc0] sm:$0xff]
    %v695 = vld [vmem:[#allocation10 + $0xc8] sm:$0xff]
    %v696 = vld [vmem:[#allocation10 + $0xd0] sm:$0xff]
    %v697 = vld [vmem:[#allocation10 + $0xd8] sm:$0xff]
    %v698 = vld [vmem:[#allocation10 + $0xe0] sm:$0xff]
    %v699 = vld [vmem:[#allocation10 + $0xe8] sm:$0xff]
    %v700 = vld [vmem:[#allocation10 + $0xf0] sm:$0xff]
    %v701 = vld [vmem:[#allocation10 + $0xf8] sm:$0xff]
    %702 = vmatpush.msra.mxu0 %v685
    %703 = vmatpush.msra.mxu0 %v684
    %704 = vmatpush.msra.mxu0 %v683
    %705 = vmatpush.msra.mxu0 %v682
    %706 = vmatpush.msra.mxu0 %v681
    %707 = vmatpush.msra.mxu0 %v680
    %708 = vmatpush.msra.mxu0 %v679
    %709 = vmatpush.msra.mxu0 %v678
    %710 = vmatpush.msra.mxu0 %v677
    %711 = vmatpush.msra.mxu0 %v676
    %712 = vmatpush.msra.mxu0 %v675
    %713 = vmatpush.msra.mxu0 %v674
    %714 = vmatpush.msra.mxu0 %v673
    %715 = vmatpush.msra.mxu0 %v672
    %716 = vmatpush.msra.mxu0 %v671
    %717 = vmatpush.msra.mxu0 %v670
    %718 = vmatmul.f32.gmra.mxu0 %v506
    %v719 = vpop.f32.mrf.mxu0
    %v720 = vadd.f32 0.0, %v719
    %721 = vdwg.mxu0
    %722 = vmatpush.msra.mxu0 %v701
    %723 = vmatpush.msra.mxu0 %v700
    %724 = vmatpush.msra.mxu0 %v699
    %725 = vmatpush.msra.mxu0 %v698
    %726 = vmatpush.msra.mxu0 %v697
    %727 = vmatpush.msra.mxu0 %v696
    %728 = vmatpush.msra.mxu0 %v695
    %729 = vmatpush.msra.mxu0 %v694
    %730 = vmatpush.msra.mxu0 %v693
    %731 = vmatpush.msra.mxu0 %v692
    %732 = vmatpush.msra.mxu0 %v691
    %733 = vmatpush.msra.mxu0 %v690
    %734 = vmatpush.msra.mxu0 %v689
    %735 = vmatpush.msra.mxu0 %v688
    %736 = vmatpush.msra.mxu0 %v687
    %737 = vmatpush.msra.mxu0 %v686
    %738 = vmatmul.f32.gmra.mxu0 %v669
    %v739 = vpop.f32.mrf.mxu0
    %v740 = vadd.f32 %v720, %v739
    %741 = vdwg.mxu0
    %742 = vmatpush.msra.mxu0 %v649
    %743 = vmatpush.msra.mxu0 %v648
    %744 = vmatpush.msra.mxu0 %v647
    %745 = vmatpush.msra.mxu0 %v646
    %746 = vmatpush.msra.mxu0 %v645
    %747 = vmatpush.msra.mxu0 %v644
    %748 = vmatpush.msra.mxu0 %v643
    %749 = vmatpush.msra.mxu0 %v642
    %750 = vmatpush.msra.mxu0 %v641
    %751 = vmatpush.msra.mxu0 %v640
    %752 = vmatpush.msra.mxu0 %v639
    %753 = vmatpush.msra.mxu0 %v638
    %754 = vmatpush.msra.mxu0 %v637
    %755 = vmatpush.msra.mxu0 %v636
    %756 = vmatpush.msra.mxu0 %v635
    %757 = vmatpush.msra.mxu0 %v634
    %758 = vmatmul.f32.gmra.mxu0 %v466
    %v759 = vpop.f32.mrf.mxu0
    %v760 = vadd.f32 %v740, %v759
    %761 = vdwg.mxu0
    %762 = vmatpush.msra.mxu0 %v665
    %763 = vmatpush.msra.mxu0 %v664
    %764 = vmatpush.msra.mxu0 %v663
    %765 = vmatpush.msra.mxu0 %v662
    %766 = vmatpush.msra.mxu0 %v661
    %767 = vmatpush.msra.mxu0 %v660
    %768 = vmatpush.msra.mxu0 %v659
    %769 = vmatpush.msra.mxu0 %v658
    %770 = vmatpush.msra.mxu0 %v657
    %771 = vmatpush.msra.mxu0 %v656
    %772 = vmatpush.msra.mxu0 %v655
    %773 = vmatpush.msra.mxu0 %v654
    %774 = vmatpush.msra.mxu0 %v653
    %775 = vmatpush.msra.mxu0 %v652
    %776 = vmatpush.msra.mxu0 %v651
    %777 = vmatpush.msra.mxu0 %v650
    %778 = vmatmul.f32.gmra.mxu0 %v633
    %v779 = vpop.f32.mrf.mxu0
    %v780 = vadd.f32 %v760, %v779
    %781 = vdwg.mxu0
    %v782 = vld [vmem:[%s29] sm:$0xff]
    %v783 = vld [vmem:[%s29 + $0x8] sm:$0xff]
    %v784 = vld [vmem:[%s31] sm:$0xff]
    %v785 = vld [vmem:[%s31 + $0x8] sm:$0xff]
    %vm786 = vcmask 64512
    %v788 = vsel %vm786, %v784, 0
    %v791 = vsel %vm786, %v785, 0
    %793 = vmatpush.msra.mxu0 0.0
    %794 = vmatpush.msra.mxu0 0.0
    %795 = vmatpush.msra.mxu0 0.0
    %796 = vmatpush.msra.mxu0 0.0
    %797 = vmatpush.msra.mxu0 0.0
    %798 = vmatpush.msra.mxu0 0.0
    %799 = vmatpush.msra.mxu0 0.0
    %800 = vmatpush.msra.mxu0 0.0
    %801 = vmatpush.msra.mxu0 0.0
    %802 = vmatpush.msra.mxu0 0.0
    %803 = vmatpush.msra.mxu0 0.0
    %804 = vmatpush.msra.mxu0 0.0
    %805 = vmatpush.msra.mxu0 0.0
    %806 = vmatpush.msra.mxu0 0.0
    %807 = vmatpush.msra.mxu0 0.0
    %808 = vmatpush.msra.mxu0 %v780
    %809 = vmatmul.f32.gmra.mxu0 %v788
    %v810 = vpop.f32.mrf.mxu0
    %v811 = vadd.f32 0.0, %v810
    %812 = vmatmul.f32.gmra.mxu0 %v791
    %v813 = vpop.f32.mrf.mxu0
    %v814 = vadd.f32 0.0, %v813
    %815 = vdwg.mxu0
    %v817 = vsel %vm786, %v782, 0
    %v820 = vsel %vm786, %v783, 0
    %822 = vmatpush.msra.mxu0 0.0
    %823 = vmatpush.msra.mxu0 0.0
    %824 = vmatpush.msra.mxu0 0.0
    %825 = vmatpush.msra.mxu0 0.0
    %826 = vmatpush.msra.mxu0 0.0
    %827 = vmatpush.msra.mxu0 0.0
    %828 = vmatpush.msra.mxu0 0.0
    %829 = vmatpush.msra.mxu0 0.0
    %830 = vmatpush.msra.mxu0 0.0
    %831 = vmatpush.msra.mxu0 0.0
    %832 = vmatpush.msra.mxu0 0.0
    %833 = vmatpush.msra.mxu0 0.0
    %834 = vmatpush.msra.mxu0 0.0
    %835 = vmatpush.msra.mxu0 0.0
    %836 = vmatpush.msra.mxu0 0.0
    %837 = vmatpush.msra.mxu0 %v618
    %838 = vmatmul.f32.gmra.mxu0 %v817
    %v839 = vpop.f32.mrf.mxu0
    %v840 = vadd.f32 %v811, %v839
    %841 = vmatmul.f32.gmra.mxu0 %v820
    %v842 = vpop.f32.mrf.mxu0
    %v843 = vadd.f32 %v814, %v842
    %844 = vdwg.mxu0
    %v845 = vld [vmem:[%s33] sm:$0xff]
    %v846 = vld [vmem:[%s33 + $0x8] sm:$0xff]
    %v847 = vadd.f32 %v840, %v845
    %v848 = vadd.f32 %v843, %v846
    %vm849 = vcmp.ge.f32.partialorder %v847, 0.0
    %vm850 = vcmp.ge.f32.partialorder %v848, 0.0
    %v851 = vmul.f32 %v847, 0.2
    %v852 = vmul.f32 %v848, 0.2
    %v853 = vsel %vm849, %v847, %v851
    %v854 = vsel %vm850, %v848, %v852
    %855 = vst [vmem:[#allocation3] sm:$0xff] 0.0
    %856 = vst.msk [vmem:[#allocation3 + $0x8] sm:$0xff] %vm244, 0.0
    %857 = vst [vmem:[#allocation3 + $0x10] sm:$0xff] 0.0
    %858 = vst.msk [vmem:[#allocation3 + $0x18] sm:$0xff] %vm244, 0.0
    %859 = vst [vmem:[#allocation3 + $0x20] sm:$0xf] 0.0
    %vm860 = vcmask 257024
    %861 = vst.msk [vmem:[#allocation3 + $0x28] sm:$0xf] %vm860, 0.0
    %v863 = vrot.slane %v853, 7
    %864 = vrot.lane.b32.xlu0 %v863, 16
    %v865 = vpop.permute.xlu0 %864
    %vm867 = vcmask 1047681
    %868 = vst.msk [vmem:[#allocation3] sm:$0xfe] %vm867, %v865
    %vm869 = vcmask 130049
    %870 = vst.msk [vmem:[#allocation3 + $0x8] sm:$0xfe] %vm869, %v865
    %vm871 = vcmask 1040512
    %872 = vst.msk [vmem:[#allocation3 + $0x10] sm:$0x1] %vm871, %v865
    %vm873 = vcmask 122880
    %874 = vst.msk [vmem:[#allocation3 + $0x18] sm:$0x1] %vm873, %v865
    %v876 = vrot.slane %v854, 5
    %877 = vrot.lane.b32.xlu0 %v876, 16
    %v878 = vpop.permute.xlu0 %877
    %vm880 = vcmask 1047683
    %881 = vst.msk [vmem:[#allocation3 + $0x10] sm:$0xf8] %vm880, %v878
    %vm882 = vcmask 130051
    %883 = vst.msk [vmem:[#allocation3 + $0x18] sm:$0xf8] %vm882, %v878
    %vm884 = vcmask 1042560
    %885 = vst.msk [vmem:[#allocation3 + $0x20] sm:$0x7] %vm884, %v878
    %vm886 = vcmask 124928
    %887 = vst.msk [vmem:[#allocation3 + $0x28] sm:$0x7] %vm886, %v878
    %v888 = vld [vmem:[#allocation3] sm:$0xfe]
    %v889 = vld [vmem:[#allocation3 + $0x8] sm:$0xfe]
    %v890 = vld [vmem:[#allocation3 + $0x10] sm:$0x1]
    %v891 = vld [vmem:[#allocation3 + $0x18] sm:$0x1]
    %v892 = vld [vmem:[#allocation3 + $0x10] sm:$0xf8]
    %v893 = vld [vmem:[#allocation3 + $0x18] sm:$0xf8]
    %v894 = vld [vmem:[#allocation3 + $0x20] sm:$0x7]
    %v895 = vld [vmem:[#allocation3 + $0x28] sm:$0x7]
    %vm900 = vcmask 1046528
    %v901 = vrot.slane %v888, 1
    %v902 = vrot.slane %v890, 1
    %v903 = vsel %vm900, %v901, %v902
    %v904 = vrot.slane %v889, 1
    %v905 = vrot.slane %v891, 1
    %v906 = vsel %vm900, %v904, %v905
    %vm911 = vcmask 1044480
    %v912 = vrot.slane %v892, 3
    %v913 = vrot.slane %v894, 3
    %v914 = vsel %vm911, %v912, %v913
    %v915 = vrot.slane %v893, 3
    %v916 = vrot.slane %v895, 3
    %v917 = vsel %vm911, %v915, %v916
    %v920 = vld [vmem:[#allocation3] sm:$0xff]
    %v921 = vld [vmem:[#allocation3 + $0x8] sm:$0xff]
    %v922 = vld [vmem:[#allocation3 + $0x10] sm:$0xfc]
    %v923 = vld [vmem:[#allocation3 + $0x18] sm:$0xfc]
    %v924 = vld [vmem:[#allocation3 + $0x20] sm:$0x3]
    %v925 = vld [vmem:[#allocation3 + $0x28] sm:$0x3]
    %vm930 = vcmask 1045504
    %v931 = vrot.slane %v922, 2
    %v932 = vrot.slane %v924, 2
    %v933 = vsel %vm930, %v931, %v932
    %v934 = vrot.slane %v923, 2
    %v935 = vrot.slane %v925, 2
    %v936 = vsel %vm930, %v934, %v935
    %938 = vrot.lane.b32.xlu0 %v903, 112
    %v939 = vpop.permute.xlu0 %938
    %940 = vrot.lane.b32.xlu0 %v906, 112
    %v941 = vpop.permute.xlu0 %940
    %942 = vrot.lane.b32.xlu0 %v914, 112
    %v943 = vpop.permute.xlu0 %942
    %944 = vrot.lane.b32.xlu0 %v917, 112
    %v945 = vpop.permute.xlu0 %944
    %vm946 = vcmask 916480
    %v947 = vsel %vm946, %v939, %v941
    %v948 = vsel %vm946, %v943, %v945
    %953 = vrot.lane.b32.xlu0 %v920, 112
    %v954 = vpop.permute.xlu0 %953
    %955 = vrot.lane.b32.xlu0 %v921, 112
    %v956 = vpop.permute.xlu0 %955
    %957 = vrot.lane.b32.xlu0 %v933, 112
    %v958 = vpop.permute.xlu0 %957
    %959 = vrot.lane.b32.xlu0 %v936, 112
    %v960 = vpop.permute.xlu0 %959
    %v961 = vsel %vm946, %v954, %v956
    %v962 = vsel %vm946, %v958, %v960
    %v965 = vld [vmem:[%s35] sm:$0xff]
    %v966 = vld [vmem:[%s35 + $0x8] sm:$0xff]
    %v967 = vld [vmem:[%s35 + $0x10] sm:$0xff]
    %v968 = vld [vmem:[%s35 + $0x18] sm:$0xff]
    %v969 = vld [vmem:[%s35 + $0x20] sm:$0xff]
    %v970 = vld [vmem:[%s35 + $0x28] sm:$0xff]
    %v971 = vld [vmem:[%s35 + $0x30] sm:$0xff]
    %v972 = vld [vmem:[%s35 + $0x38] sm:$0xff]
    %v973 = vld [vmem:[%s35 + $0x40] sm:$0xff]
    %v974 = vld [vmem:[%s35 + $0x48] sm:$0xff]
    %v975 = vld [vmem:[%s35 + $0x50] sm:$0xff]
    %v976 = vld [vmem:[%s35 + $0x58] sm:$0xff]
    %v977 = vld [vmem:[%s35 + $0x60] sm:$0xff]
    %v978 = vld [vmem:[%s35 + $0x68] sm:$0xff]
    %v979 = vld [vmem:[%s35 + $0x70] sm:$0xff]
    %v980 = vld [vmem:[%s35 + $0x78] sm:$0xff]
    %v981 = vld [vmem:[%s35 + $0x80] sm:$0xff]
    %v982 = vld [vmem:[%s35 + $0x88] sm:$0xff]
    %v983 = vld [vmem:[%s35 + $0x90] sm:$0xff]
    %v984 = vld [vmem:[%s35 + $0x98] sm:$0xff]
    %v985 = vld [vmem:[%s35 + $0xa0] sm:$0xff]
    %v986 = vld [vmem:[%s35 + $0xa8] sm:$0xff]
    %v987 = vld [vmem:[%s35 + $0xb0] sm:$0xff]
    %v988 = vld [vmem:[%s35 + $0xb8] sm:$0xff]
    %v989 = vld [vmem:[%s35 + $0xc0] sm:$0xff]
    %v990 = vld [vmem:[%s35 + $0xc8] sm:$0xff]
    %v991 = vld [vmem:[%s35 + $0xd0] sm:$0xff]
    %v992 = vld [vmem:[%s35 + $0xd8] sm:$0xff]
    %v993 = vld [vmem:[%s35 + $0xe0] sm:$0xff]
    %v994 = vld [vmem:[%s35 + $0xe8] sm:$0xff]
    %v995 = vld [vmem:[%s35 + $0xf0] sm:$0xff]
    %v996 = vld [vmem:[%s35 + $0xf8] sm:$0xff]
    %v997 = vld [vmem:[%s35 + $0x100] sm:$0xff]
    %v998 = vld [vmem:[%s35 + $0x108] sm:$0xff]
    %v999 = vld [vmem:[%s35 + $0x110] sm:$0xff]
    %v1000 = vld [vmem:[%s35 + $0x118] sm:$0xff]
    %v1001 = vld [vmem:[%s35 + $0x120] sm:$0xff]
    %v1002 = vld [vmem:[%s35 + $0x128] sm:$0xff]
    %v1003 = vld [vmem:[%s35 + $0x130] sm:$0xff]
    %v1004 = vld [vmem:[%s35 + $0x138] sm:$0xff]
    %v1005 = vld [vmem:[%s35 + $0x140] sm:$0xff]
    %v1006 = vld [vmem:[%s35 + $0x148] sm:$0xff]
    %v1007 = vld [vmem:[%s35 + $0x150] sm:$0xff]
    %v1008 = vld [vmem:[%s35 + $0x158] sm:$0xff]
    %v1009 = vld [vmem:[%s35 + $0x160] sm:$0xff]
    %v1010 = vld [vmem:[%s35 + $0x168] sm:$0xff]
    %v1011 = vld [vmem:[%s35 + $0x170] sm:$0xff]
    %v1012 = vld [vmem:[%s35 + $0x178] sm:$0xff]
    %v1013 = vld [vmem:[%s35 + $0x180] sm:$0xff]
    %v1014 = vld [vmem:[%s35 + $0x188] sm:$0xff]
    %v1015 = vld [vmem:[%s35 + $0x190] sm:$0xff]
    %v1016 = vld [vmem:[%s35 + $0x198] sm:$0xff]
    %v1017 = vld [vmem:[%s35 + $0x1a0] sm:$0xff]
    %v1018 = vld [vmem:[%s35 + $0x1a8] sm:$0xff]
    %v1019 = vld [vmem:[%s35 + $0x1b0] sm:$0xff]
    %v1020 = vld [vmem:[%s35 + $0x1b8] sm:$0xff]
    %v1021 = vld [vmem:[%s35 + $0x1c0] sm:$0xff]
    %v1022 = vld [vmem:[%s35 + $0x1c8] sm:$0xff]
    %v1023 = vld [vmem:[%s35 + $0x1d0] sm:$0xff]
    %v1024 = vld [vmem:[%s35 + $0x1d8] sm:$0xff]
    %v1025 = vld [vmem:[%s35 + $0x1e0] sm:$0xff]
    %v1026 = vld [vmem:[%s35 + $0x1e8] sm:$0xff]
    %v1027 = vld [vmem:[%s35 + $0x1f0] sm:$0xff]
    %v1028 = vld [vmem:[%s35 + $0x1f8] sm:$0xff]
    %1029 = vrot.lane.b32.xlu0 %v903, 96
    %v1030 = vpop.permute.xlu0 %1029
    %1031 = vrot.lane.b32.xlu0 %v906, 96
    %v1032 = vpop.permute.xlu0 %1031
    %1033 = vrot.lane.b32.xlu0 %v914, 96
    %v1034 = vpop.permute.xlu0 %1033
    %1035 = vrot.lane.b32.xlu0 %v917, 96
    %v1036 = vpop.permute.xlu0 %1035
    %v1037 = vsel %vm410, %v1030, %v1032
    %v1038 = vsel %vm410, %v1034, %v1036
    %1041 = vrot.lane.b32.xlu0 %v920, 96
    %v1042 = vpop.permute.xlu0 %1041
    %1043 = vrot.lane.b32.xlu0 %v921, 96
    %v1044 = vpop.permute.xlu0 %1043
    %1045 = vrot.lane.b32.xlu0 %v933, 96
    %v1046 = vpop.permute.xlu0 %1045
    %1047 = vrot.lane.b32.xlu0 %v936, 96
    %v1048 = vpop.permute.xlu0 %1047
    %v1049 = vsel %vm410, %v1042, %v1044
    %v1050 = vsel %vm410, %v1046, %v1048
    %v1053 = vld [vmem:[%s37] sm:$0xff]
    %v1054 = vld [vmem:[%s37 + $0x8] sm:$0xff]
    %v1055 = vld [vmem:[%s37 + $0x10] sm:$0xff]
    %v1056 = vld [vmem:[%s37 + $0x18] sm:$0xff]
    %v1057 = vld [vmem:[%s37 + $0x20] sm:$0xff]
    %v1058 = vld [vmem:[%s37 + $0x28] sm:$0xff]
    %v1059 = vld [vmem:[%s37 + $0x30] sm:$0xff]
    %v1060 = vld [vmem:[%s37 + $0x38] sm:$0xff]
    %v1061 = vld [vmem:[%s37 + $0x40] sm:$0xff]
    %v1062 = vld [vmem:[%s37 + $0x48] sm:$0xff]
    %v1063 = vld [vmem:[%s37 + $0x50] sm:$0xff]
    %v1064 = vld [vmem:[%s37 + $0x58] sm:$0xff]
    %v1065 = vld [vmem:[%s37 + $0x60] sm:$0xff]
    %v1066 = vld [vmem:[%s37 + $0x68] sm:$0xff]
    %v1067 = vld [vmem:[%s37 + $0x70] sm:$0xff]
    %v1068 = vld [vmem:[%s37 + $0x78] sm:$0xff]
    %v1069 = vld [vmem:[%s37 + $0x80] sm:$0xff]
    %v1070 = vld [vmem:[%s37 + $0x88] sm:$0xff]
    %v1071 = vld [vmem:[%s37 + $0x90] sm:$0xff]
    %v1072 = vld [vmem:[%s37 + $0x98] sm:$0xff]
    %v1073 = vld [vmem:[%s37 + $0xa0] sm:$0xff]
    %v1074 = vld [vmem:[%s37 + $0xa8] sm:$0xff]
    %v1075 = vld [vmem:[%s37 + $0xb0] sm:$0xff]
    %v1076 = vld [vmem:[%s37 + $0xb8] sm:$0xff]
    %v1077 = vld [vmem:[%s37 + $0xc0] sm:$0xff]
    %v1078 = vld [vmem:[%s37 + $0xc8] sm:$0xff]
    %v1079 = vld [vmem:[%s37 + $0xd0] sm:$0xff]
    %v1080 = vld [vmem:[%s37 + $0xd8] sm:$0xff]
    %v1081 = vld [vmem:[%s37 + $0xe0] sm:$0xff]
    %v1082 = vld [vmem:[%s37 + $0xe8] sm:$0xff]
    %v1083 = vld [vmem:[%s37 + $0xf0] sm:$0xff]
    %v1084 = vld [vmem:[%s37 + $0xf8] sm:$0xff]
    %v1085 = vld [vmem:[%s37 + $0x100] sm:$0xff]
    %v1086 = vld [vmem:[%s37 + $0x108] sm:$0xff]
    %v1087 = vld [vmem:[%s37 + $0x110] sm:$0xff]
    %v1088 = vld [vmem:[%s37 + $0x118] sm:$0xff]
    %v1089 = vld [vmem:[%s37 + $0x120] sm:$0xff]
    %v1090 = vld [vmem:[%s37 + $0x128] sm:$0xff]
    %v1091 = vld [vmem:[%s37 + $0x130] sm:$0xff]
    %v1092 = vld [vmem:[%s37 + $0x138] sm:$0xff]
    %v1093 = vld [vmem:[%s37 + $0x140] sm:$0xff]
    %v1094 = vld [vmem:[%s37 + $0x148] sm:$0xff]
    %v1095 = vld [vmem:[%s37 + $0x150] sm:$0xff]
    %v1096 = vld [vmem:[%s37 + $0x158] sm:$0xff]
    %v1097 = vld [vmem:[%s37 + $0x160] sm:$0xff]
    %v1098 = vld [vmem:[%s37 + $0x168] sm:$0xff]
    %v1099 = vld [vmem:[%s37 + $0x170] sm:$0xff]
    %v1100 = vld [vmem:[%s37 + $0x178] sm:$0xff]
    %v1101 = vld [vmem:[%s37 + $0x180] sm:$0xff]
    %v1102 = vld [vmem:[%s37 + $0x188] sm:$0xff]
    %v1103 = vld [vmem:[%s37 + $0x190] sm:$0xff]
    %v1104 = vld [vmem:[%s37 + $0x198] sm:$0xff]
    %v1105 = vld [vmem:[%s37 + $0x1a0] sm:$0xff]
    %v1106 = vld [vmem:[%s37 + $0x1a8] sm:$0xff]
    %v1107 = vld [vmem:[%s37 + $0x1b0] sm:$0xff]
    %v1108 = vld [vmem:[%s37 + $0x1b8] sm:$0xff]
    %v1109 = vld [vmem:[%s37 + $0x1c0] sm:$0xff]
    %v1110 = vld [vmem:[%s37 + $0x1c8] sm:$0xff]
    %v1111 = vld [vmem:[%s37 + $0x1d0] sm:$0xff]
    %v1112 = vld [vmem:[%s37 + $0x1d8] sm:$0xff]
    %v1113 = vld [vmem:[%s37 + $0x1e0] sm:$0xff]
    %v1114 = vld [vmem:[%s37 + $0x1e8] sm:$0xff]
    %v1115 = vld [vmem:[%s37 + $0x1f0] sm:$0xff]
    %v1116 = vld [vmem:[%s37 + $0x1f8] sm:$0xff]
    %1117 = vmatpush.msra.mxu0 %v1068
    %1118 = vmatpush.msra.mxu0 %v1067
    %1119 = vmatpush.msra.mxu0 %v1066
    %1120 = vmatpush.msra.mxu0 %v1065
    %1121 = vmatpush.msra.mxu0 %v1064
    %1122 = vmatpush.msra.mxu0 %v1063
    %1123 = vmatpush.msra.mxu0 %v1062
    %1124 = vmatpush.msra.mxu0 %v1061
    %1125 = vmatpush.msra.mxu0 %v1060
    %1126 = vmatpush.msra.mxu0 %v1059
    %1127 = vmatpush.msra.mxu0 %v1058
    %1128 = vmatpush.msra.mxu0 %v1057
    %1129 = vmatpush.msra.mxu0 %v1056
    %1130 = vmatpush.msra.mxu0 %v1055
    %1131 = vmatpush.msra.mxu0 %v1054
    %1132 = vmatpush.msra.mxu0 %v1053
    %1133 = vmatmul.f32.gmra.mxu0 %v947
    %v1134 = vpop.f32.mrf.mxu0
    %v1135 = vadd.f32 0.0, %v1134
    %1136 = vmatmul.f32.gmra.mxu0 %v948
    %v1137 = vpop.f32.mrf.mxu0
    %v1138 = vadd.f32 0.0, %v1137
    %1139 = vdwg.mxu0
    %1140 = vmatpush.msra.mxu0 %v1084
    %1141 = vmatpush.msra.mxu0 %v1083
    %1142 = vmatpush.msra.mxu0 %v1082
    %1143 = vmatpush.msra.mxu0 %v1081
    %1144 = vmatpush.msra.mxu0 %v1080
    %1145 = vmatpush.msra.mxu0 %v1079
    %1146 = vmatpush.msra.mxu0 %v1078
    %1147 = vmatpush.msra.mxu0 %v1077
    %1148 = vmatpush.msra.mxu0 %v1076
    %1149 = vmatpush.msra.mxu0 %v1075
    %1150 = vmatpush.msra.mxu0 %v1074
    %1151 = vmatpush.msra.mxu0 %v1073
    %1152 = vmatpush.msra.mxu0 %v1072
    %1153 = vmatpush.msra.mxu0 %v1071
    %1154 = vmatpush.msra.mxu0 %v1070
    %1155 = vmatpush.msra.mxu0 %v1069
    %1156 = vmatmul.f32.gmra.mxu0 %v1037
    %v1157 = vpop.f32.mrf.mxu0
    %v1158 = vadd.f32 %v1135, %v1157
    %1159 = vmatmul.f32.gmra.mxu0 %v1038
    %v1160 = vpop.f32.mrf.mxu0
    %v1161 = vadd.f32 %v1138, %v1160
    %1162 = vdwg.mxu0
    %1163 = vmatpush.msra.mxu0 %v1100
    %1164 = vmatpush.msra.mxu0 %v1099
    %1165 = vmatpush.msra.mxu0 %v1098
    %1166 = vmatpush.msra.mxu0 %v1097
    %1167 = vmatpush.msra.mxu0 %v1096
    %1168 = vmatpush.msra.mxu0 %v1095
    %1169 = vmatpush.msra.mxu0 %v1094
    %1170 = vmatpush.msra.mxu0 %v1093
    %1171 = vmatpush.msra.mxu0 %v1092
    %1172 = vmatpush.msra.mxu0 %v1091
    %1173 = vmatpush.msra.mxu0 %v1090
    %1174 = vmatpush.msra.mxu0 %v1089
    %1175 = vmatpush.msra.mxu0 %v1088
    %1176 = vmatpush.msra.mxu0 %v1087
    %1177 = vmatpush.msra.mxu0 %v1086
    %1178 = vmatpush.msra.mxu0 %v1085
    %1179 = vmatmul.f32.gmra.mxu0 %v961
    %v1180 = vpop.f32.mrf.mxu0
    %v1181 = vadd.f32 %v1158, %v1180
    %1182 = vmatmul.f32.gmra.mxu0 %v962
    %v1183 = vpop.f32.mrf.mxu0
    %v1184 = vadd.f32 %v1161, %v1183
    %1185 = vdwg.mxu0
    %1186 = vmatpush.msra.mxu0 %v1116
    %1187 = vmatpush.msra.mxu0 %v1115
    %1188 = vmatpush.msra.mxu0 %v1114
    %1189 = vmatpush.msra.mxu0 %v1113
    %1190 = vmatpush.msra.mxu0 %v1112
    %1191 = vmatpush.msra.mxu0 %v1111
    %1192 = vmatpush.msra.mxu0 %v1110
    %1193 = vmatpush.msra.mxu0 %v1109
    %1194 = vmatpush.msra.mxu0 %v1108
    %1195 = vmatpush.msra.mxu0 %v1107
    %1196 = vmatpush.msra.mxu0 %v1106
    %1197 = vmatpush.msra.mxu0 %v1105
    %1198 = vmatpush.msra.mxu0 %v1104
    %1199 = vmatpush.msra.mxu0 %v1103
    %1200 = vmatpush.msra.mxu0 %v1102
    %1201 = vmatpush.msra.mxu0 %v1101
    %1202 = vmatmul.f32.gmra.mxu0 %v1049
    %v1203 = vpop.f32.mrf.mxu0
    %v1204 = vadd.f32 %v1181, %v1203
    %1205 = vmatmul.f32.gmra.mxu0 %v1050
    %v1206 = vpop.f32.mrf.mxu0
    %v1207 = vadd.f32 %v1184, %v1206
    %1208 = vdwg.mxu0
    %1209 = vmatpush.msra.mxu0 %v980
    %1210 = vmatpush.msra.mxu0 %v979
    %1211 = vmatpush.msra.mxu0 %v978
    %1212 = vmatpush.msra.mxu0 %v977
    %1213 = vmatpush.msra.mxu0 %v976
    %1214 = vmatpush.msra.mxu0 %v975
    %1215 = vmatpush.msra.mxu0 %v974
    %1216 = vmatpush.msra.mxu0 %v973
    %1217 = vmatpush.msra.mxu0 %v972
    %1218 = vmatpush.msra.mxu0 %v971
    %1219 = vmatpush.msra.mxu0 %v970
    %1220 = vmatpush.msra.mxu0 %v969
    %1221 = vmatpush.msra.mxu0 %v968
    %1222 = vmatpush.msra.mxu0 %v967
    %1223 = vmatpush.msra.mxu0 %v966
    %1224 = vmatpush.msra.mxu0 %v965
    %1225 = vmatmul.f32.gmra.mxu0 %v947
    %v1226 = vpop.f32.mrf.mxu0
    %v1227 = vadd.f32 %v1204, %v1226
    %1228 = vmatmul.f32.gmra.mxu0 %v948
    %v1229 = vpop.f32.mrf.mxu0
    %v1230 = vadd.f32 %v1207, %v1229
    %1231 = vdwg.mxu0
    %1232 = vmatpush.msra.mxu0 %v996
    %1233 = vmatpush.msra.mxu0 %v995
    %1234 = vmatpush.msra.mxu0 %v994
    %1235 = vmatpush.msra.mxu0 %v993
    %1236 = vmatpush.msra.mxu0 %v992
    %1237 = vmatpush.msra.mxu0 %v991
    %1238 = vmatpush.msra.mxu0 %v990
    %1239 = vmatpush.msra.mxu0 %v989
    %1240 = vmatpush.msra.mxu0 %v988
    %1241 = vmatpush.msra.mxu0 %v987
    %1242 = vmatpush.msra.mxu0 %v986
    %1243 = vmatpush.msra.mxu0 %v985
    %1244 = vmatpush.msra.mxu0 %v984
    %1245 = vmatpush.msra.mxu0 %v983
    %1246 = vmatpush.msra.mxu0 %v982
    %1247 = vmatpush.msra.mxu0 %v981
    %1248 = vmatmul.f32.gmra.mxu0 %v903
    %v1249 = vpop.f32.mrf.mxu0
    %v1250 = vadd.f32 %v1227, %v1249
    %1251 = vmatmul.f32.gmra.mxu0 %v914
    %v1252 = vpop.f32.mrf.mxu0
    %v1253 = vadd.f32 %v1230, %v1252
    %1254 = vdwg.mxu0
    %1255 = vmatpush.msra.mxu0 %v1012
    %1256 = vmatpush.msra.mxu0 %v1011
    %1257 = vmatpush.msra.mxu0 %v1010
    %1258 = vmatpush.msra.mxu0 %v1009
    %1259 = vmatpush.msra.mxu0 %v1008
    %1260 = vmatpush.msra.mxu0 %v1007
    %1261 = vmatpush.msra.mxu0 %v1006
    %1262 = vmatpush.msra.mxu0 %v1005
    %1263 = vmatpush.msra.mxu0 %v1004
    %1264 = vmatpush.msra.mxu0 %v1003
    %1265 = vmatpush.msra.mxu0 %v1002
    %1266 = vmatpush.msra.mxu0 %v1001
    %1267 = vmatpush.msra.mxu0 %v1000
    %1268 = vmatpush.msra.mxu0 %v999
    %1269 = vmatpush.msra.mxu0 %v998
    %1270 = vmatpush.msra.mxu0 %v997
    %1271 = vmatmul.f32.gmra.mxu0 %v961
    %v1272 = vpop.f32.mrf.mxu0
    %v1273 = vadd.f32 %v1250, %v1272
    %1274 = vmatmul.f32.gmra.mxu0 %v962
    %v1275 = vpop.f32.mrf.mxu0
    %v1276 = vadd.f32 %v1253, %v1275
    %1277 = vdwg.mxu0
    %1278 = vmatpush.msra.mxu0 %v1028
    %1279 = vmatpush.msra.mxu0 %v1027
    %1280 = vmatpush.msra.mxu0 %v1026
    %1281 = vmatpush.msra.mxu0 %v1025
    %1282 = vmatpush.msra.mxu0 %v1024
    %1283 = vmatpush.msra.mxu0 %v1023
    %1284 = vmatpush.msra.mxu0 %v1022
    %1285 = vmatpush.msra.mxu0 %v1021
    %1286 = vmatpush.msra.mxu0 %v1020
    %1287 = vmatpush.msra.mxu0 %v1019
    %1288 = vmatpush.msra.mxu0 %v1018
    %1289 = vmatpush.msra.mxu0 %v1017
    %1290 = vmatpush.msra.mxu0 %v1016
    %1291 = vmatpush.msra.mxu0 %v1015
    %1292 = vmatpush.msra.mxu0 %v1014
    %1293 = vmatpush.msra.mxu0 %v1013
    %1294 = vmatmul.f32.gmra.mxu0 %v920
    %v1295 = vpop.f32.mrf.mxu0
    %v1296 = vadd.f32 %v1273, %v1295
    %1297 = vmatmul.f32.gmra.mxu0 %v933
    %v1298 = vpop.f32.mrf.mxu0
    %v1299 = vadd.f32 %v1276, %v1298
    %1300 = vdwg.mxu0
    %v1301 = vld [vmem:[#allocation3] sm:$0xfc]
    %v1302 = vld [vmem:[#allocation3 + $0x8] sm:$0xfc]
    %v1303 = vld [vmem:[#allocation3 + $0x10] sm:$0x3]
    %v1304 = vld [vmem:[#allocation3 + $0x18] sm:$0x3]
    %v1305 = vld [vmem:[#allocation3 + $0x10] sm:$0xf0]
    %v1306 = vld [vmem:[#allocation3 + $0x18] sm:$0xf0]
    %v1307 = vld [vmem:[#allocation3 + $0x20] sm:$0xf]
    %v1308 = vld [vmem:[#allocation3 + $0x28] sm:$0xf]
    %v1313 = vrot.slane %v1301, 2
    %v1314 = vrot.slane %v1303, 2
    %v1315 = vsel %vm930, %v1313, %v1314
    %v1316 = vrot.slane %v1302, 2
    %v1317 = vrot.slane %v1304, 2
    %v1318 = vsel %vm930, %v1316, %v1317
    %v1323 = vrot.slane %v1305, 4
    %v1324 = vrot.slane %v1307, 4
    %v1325 = vsel %vm443, %v1323, %v1324
    %v1326 = vrot.slane %v1306, 4
    %v1327 = vrot.slane %v1308, 4
    %v1328 = vsel %vm443, %v1326, %v1327
    %1331 = vrot.lane.b32.xlu0 %v1315, 112
    %v1332 = vpop.permute.xlu0 %1331
    %1333 = vrot.lane.b32.xlu0 %v1318, 112
    %v1334 = vpop.permute.xlu0 %1333
    %1335 = vrot.lane.b32.xlu0 %v1325, 112
    %v1336 = vpop.permute.xlu0 %1335
    %1337 = vrot.lane.b32.xlu0 %v1328, 112
    %v1338 = vpop.permute.xlu0 %1337
    %v1339 = vsel %vm946, %v1332, %v1334
    %v1340 = vsel %vm946, %v1336, %v1338
    %v1343 = vld [vmem:[%s39] sm:$0xff]
    %v1344 = vld [vmem:[%s39 + $0x8] sm:$0xff]
    %v1345 = vld [vmem:[%s39 + $0x10] sm:$0xff]
    %v1346 = vld [vmem:[%s39 + $0x18] sm:$0xff]
    %v1347 = vld [vmem:[%s39 + $0x20] sm:$0xff]
    %v1348 = vld [vmem:[%s39 + $0x28] sm:$0xff]
    %v1349 = vld [vmem:[%s39 + $0x30] sm:$0xff]
    %v1350 = vld [vmem:[%s39 + $0x38] sm:$0xff]
    %v1351 = vld [vmem:[%s39 + $0x40] sm:$0xff]
    %v1352 = vld [vmem:[%s39 + $0x48] sm:$0xff]
    %v1353 = vld [vmem:[%s39 + $0x50] sm:$0xff]
    %v1354 = vld [vmem:[%s39 + $0x58] sm:$0xff]
    %v1355 = vld [vmem:[%s39 + $0x60] sm:$0xff]
    %v1356 = vld [vmem:[%s39 + $0x68] sm:$0xff]
    %v1357 = vld [vmem:[%s39 + $0x70] sm:$0xff]
    %v1358 = vld [vmem:[%s39 + $0x78] sm:$0xff]
    %v1359 = vld [vmem:[%s39 + $0x80] sm:$0xff]
    %v1360 = vld [vmem:[%s39 + $0x88] sm:$0xff]
    %v1361 = vld [vmem:[%s39 + $0x90] sm:$0xff]
    %v1362 = vld [vmem:[%s39 + $0x98] sm:$0xff]
    %v1363 = vld [vmem:[%s39 + $0xa0] sm:$0xff]
    %v1364 = vld [vmem:[%s39 + $0xa8] sm:$0xff]
    %v1365 = vld [vmem:[%s39 + $0xb0] sm:$0xff]
    %v1366 = vld [vmem:[%s39 + $0xb8] sm:$0xff]
    %v1367 = vld [vmem:[%s39 + $0xc0] sm:$0xff]
    %v1368 = vld [vmem:[%s39 + $0xc8] sm:$0xff]
    %v1369 = vld [vmem:[%s39 + $0xd0] sm:$0xff]
    %v1370 = vld [vmem:[%s39 + $0xd8] sm:$0xff]
    %v1371 = vld [vmem:[%s39 + $0xe0] sm:$0xff]
    %v1372 = vld [vmem:[%s39 + $0xe8] sm:$0xff]
    %v1373 = vld [vmem:[%s39 + $0xf0] sm:$0xff]
    %v1374 = vld [vmem:[%s39 + $0xf8] sm:$0xff]
    %v1375 = vld [vmem:[%s39 + $0x100] sm:$0xff]
    %v1376 = vld [vmem:[%s39 + $0x108] sm:$0xff]
    %v1377 = vld [vmem:[%s39 + $0x110] sm:$0xff]
    %v1378 = vld [vmem:[%s39 + $0x118] sm:$0xff]
    %v1379 = vld [vmem:[%s39 + $0x120] sm:$0xff]
    %v1380 = vld [vmem:[%s39 + $0x128] sm:$0xff]
    %v1381 = vld [vmem:[%s39 + $0x130] sm:$0xff]
    %v1382 = vld [vmem:[%s39 + $0x138] sm:$0xff]
    %v1383 = vld [vmem:[%s39 + $0x140] sm:$0xff]
    %v1384 = vld [vmem:[%s39 + $0x148] sm:$0xff]
    %v1385 = vld [vmem:[%s39 + $0x150] sm:$0xff]
    %v1386 = vld [vmem:[%s39 + $0x158] sm:$0xff]
    %v1387 = vld [vmem:[%s39 + $0x160] sm:$0xff]
    %v1388 = vld [vmem:[%s39 + $0x168] sm:$0xff]
    %v1389 = vld [vmem:[%s39 + $0x170] sm:$0xff]
    %v1390 = vld [vmem:[%s39 + $0x178] sm:$0xff]
    %v1391 = vld [vmem:[%s39 + $0x180] sm:$0xff]
    %v1392 = vld [vmem:[%s39 + $0x188] sm:$0xff]
    %v1393 = vld [vmem:[%s39 + $0x190] sm:$0xff]
    %v1394 = vld [vmem:[%s39 + $0x198] sm:$0xff]
    %v1395 = vld [vmem:[%s39 + $0x1a0] sm:$0xff]
    %v1396 = vld [vmem:[%s39 + $0x1a8] sm:$0xff]
    %v1397 = vld [vmem:[%s39 + $0x1b0] sm:$0xff]
    %v1398 = vld [vmem:[%s39 + $0x1b8] sm:$0xff]
    %v1399 = vld [vmem:[%s39 + $0x1c0] sm:$0xff]
    %v1400 = vld [vmem:[%s39 + $0x1c8] sm:$0xff]
    %v1401 = vld [vmem:[%s39 + $0x1d0] sm:$0xff]
    %v1402 = vld [vmem:[%s39 + $0x1d8] sm:$0xff]
    %v1403 = vld [vmem:[%s39 + $0x1e0] sm:$0xff]
    %v1404 = vld [vmem:[%s39 + $0x1e8] sm:$0xff]
    %v1405 = vld [vmem:[%s39 + $0x1f0] sm:$0xff]
    %v1406 = vld [vmem:[%s39 + $0x1f8] sm:$0xff]
    %1407 = vrot.lane.b32.xlu0 %v1315, 96
    %v1408 = vpop.permute.xlu0 %1407
    %1409 = vrot.lane.b32.xlu0 %v1318, 96
    %v1410 = vpop.permute.xlu0 %1409
    %1411 = vrot.lane.b32.xlu0 %v1325, 96
    %v1412 = vpop.permute.xlu0 %1411
    %1413 = vrot.lane.b32.xlu0 %v1328, 96
    %v1414 = vpop.permute.xlu0 %1413
    %v1415 = vsel %vm410, %v1408, %v1410
    %v1416 = vsel %vm410, %v1412, %v1414
    %v1419 = vld [vmem:[%s41] sm:$0xff]
    %v1420 = vld [vmem:[%s41 + $0x8] sm:$0xff]
    %v1421 = vld [vmem:[%s41 + $0x10] sm:$0xff]
    %v1422 = vld [vmem:[%s41 + $0x18] sm:$0xff]
    %v1423 = vld [vmem:[%s41 + $0x20] sm:$0xff]
    %v1424 = vld [vmem:[%s41 + $0x28] sm:$0xff]
    %v1425 = vld [vmem:[%s41 + $0x30] sm:$0xff]
    %v1426 = vld [vmem:[%s41 + $0x38] sm:$0xff]
    %v1427 = vld [vmem:[%s41 + $0x40] sm:$0xff]
    %v1428 = vld [vmem:[%s41 + $0x48] sm:$0xff]
    %v1429 = vld [vmem:[%s41 + $0x50] sm:$0xff]
    %v1430 = vld [vmem:[%s41 + $0x58] sm:$0xff]
    %v1431 = vld [vmem:[%s41 + $0x60] sm:$0xff]
    %v1432 = vld [vmem:[%s41 + $0x68] sm:$0xff]
    %v1433 = vld [vmem:[%s41 + $0x70] sm:$0xff]
    %v1434 = vld [vmem:[%s41 + $0x78] sm:$0xff]
    %v1435 = vld [vmem:[%s41 + $0x80] sm:$0xff]
    %v1436 = vld [vmem:[%s41 + $0x88] sm:$0xff]
    %v1437 = vld [vmem:[%s41 + $0x90] sm:$0xff]
    %v1438 = vld [vmem:[%s41 + $0x98] sm:$0xff]
    %v1439 = vld [vmem:[%s41 + $0xa0] sm:$0xff]
    %v1440 = vld [vmem:[%s41 + $0xa8] sm:$0xff]
    %v1441 = vld [vmem:[%s41 + $0xb0] sm:$0xff]
    %v1442 = vld [vmem:[%s41 + $0xb8] sm:$0xff]
    %v1443 = vld [vmem:[%s41 + $0xc0] sm:$0xff]
    %v1444 = vld [vmem:[%s41 + $0xc8] sm:$0xff]
    %v1445 = vld [vmem:[%s41 + $0xd0] sm:$0xff]
    %v1446 = vld [vmem:[%s41 + $0xd8] sm:$0xff]
    %v1447 = vld [vmem:[%s41 + $0xe0] sm:$0xff]
    %v1448 = vld [vmem:[%s41 + $0xe8] sm:$0xff]
    %v1449 = vld [vmem:[%s41 + $0xf0] sm:$0xff]
    %v1450 = vld [vmem:[%s41 + $0xf8] sm:$0xff]
    %v1451 = vld [vmem:[%s41 + $0x100] sm:$0xff]
    %v1452 = vld [vmem:[%s41 + $0x108] sm:$0xff]
    %v1453 = vld [vmem:[%s41 + $0x110] sm:$0xff]
    %v1454 = vld [vmem:[%s41 + $0x118] sm:$0xff]
    %v1455 = vld [vmem:[%s41 + $0x120] sm:$0xff]
    %v1456 = vld [vmem:[%s41 + $0x128] sm:$0xff]
    %v1457 = vld [vmem:[%s41 + $0x130] sm:$0xff]
    %v1458 = vld [vmem:[%s41 + $0x138] sm:$0xff]
    %v1459 = vld [vmem:[%s41 + $0x140] sm:$0xff]
    %v1460 = vld [vmem:[%s41 + $0x148] sm:$0xff]
    %v1461 = vld [vmem:[%s41 + $0x150] sm:$0xff]
    %v1462 = vld [vmem:[%s41 + $0x158] sm:$0xff]
    %v1463 = vld [vmem:[%s41 + $0x160] sm:$0xff]
    %v1464 = vld [vmem:[%s41 + $0x168] sm:$0xff]
    %v1465 = vld [vmem:[%s41 + $0x170] sm:$0xff]
    %v1466 = vld [vmem:[%s41 + $0x178] sm:$0xff]
    %v1467 = vld [vmem:[%s41 + $0x180] sm:$0xff]
    %v1468 = vld [vmem:[%s41 + $0x188] sm:$0xff]
    %v1469 = vld [vmem:[%s41 + $0x190] sm:$0xff]
    %v1470 = vld [vmem:[%s41 + $0x198] sm:$0xff]
    %v1471 = vld [vmem:[%s41 + $0x1a0] sm:$0xff]
    %v1472 = vld [vmem:[%s41 + $0x1a8] sm:$0xff]
    %v1473 = vld [vmem:[%s41 + $0x1b0] sm:$0xff]
    %v1474 = vld [vmem:[%s41 + $0x1b8] sm:$0xff]
    %v1475 = vld [vmem:[%s41 + $0x1c0] sm:$0xff]
    %v1476 = vld [vmem:[%s41 + $0x1c8] sm:$0xff]
    %v1477 = vld [vmem:[%s41 + $0x1d0] sm:$0xff]
    %v1478 = vld [vmem:[%s41 + $0x1d8] sm:$0xff]
    %v1479 = vld [vmem:[%s41 + $0x1e0] sm:$0xff]
    %v1480 = vld [vmem:[%s41 + $0x1e8] sm:$0xff]
    %v1481 = vld [vmem:[%s41 + $0x1f0] sm:$0xff]
    %v1482 = vld [vmem:[%s41 + $0x1f8] sm:$0xff]
    %1483 = vmatpush.msra.mxu0 %v1434
    %1484 = vmatpush.msra.mxu0 %v1433
    %1485 = vmatpush.msra.mxu0 %v1432
    %1486 = vmatpush.msra.mxu0 %v1431
    %1487 = vmatpush.msra.mxu0 %v1430
    %1488 = vmatpush.msra.mxu0 %v1429
    %1489 = vmatpush.msra.mxu0 %v1428
    %1490 = vmatpush.msra.mxu0 %v1427
    %1491 = vmatpush.msra.mxu0 %v1426
    %1492 = vmatpush.msra.mxu0 %v1425
    %1493 = vmatpush.msra.mxu0 %v1424
    %1494 = vmatpush.msra.mxu0 %v1423
    %1495 = vmatpush.msra.mxu0 %v1422
    %1496 = vmatpush.msra.mxu0 %v1421
    %1497 = vmatpush.msra.mxu0 %v1420
    %1498 = vmatpush.msra.mxu0 %v1419
    %1499 = vmatmul.f32.gmra.mxu0 %v947
    %v1500 = vpop.f32.mrf.mxu0
    %v1501 = vadd.f32 0.0, %v1500
    %1502 = vmatmul.f32.gmra.mxu0 %v948
    %v1503 = vpop.f32.mrf.mxu0
    %v1504 = vadd.f32 0.0, %v1503
    %1505 = vdwg.mxu0
    %1506 = vmatpush.msra.mxu0 %v1450
    %1507 = vmatpush.msra.mxu0 %v1449
    %1508 = vmatpush.msra.mxu0 %v1448
    %1509 = vmatpush.msra.mxu0 %v1447
    %1510 = vmatpush.msra.mxu0 %v1446
    %1511 = vmatpush.msra.mxu0 %v1445
    %1512 = vmatpush.msra.mxu0 %v1444
    %1513 = vmatpush.msra.mxu0 %v1443
    %1514 = vmatpush.msra.mxu0 %v1442
    %1515 = vmatpush.msra.mxu0 %v1441
    %1516 = vmatpush.msra.mxu0 %v1440
    %1517 = vmatpush.msra.mxu0 %v1439
    %1518 = vmatpush.msra.mxu0 %v1438
    %1519 = vmatpush.msra.mxu0 %v1437
    %1520 = vmatpush.msra.mxu0 %v1436
    %1521 = vmatpush.msra.mxu0 %v1435
    %1522 = vmatmul.f32.gmra.mxu0 %v1037
    %v1523 = vpop.f32.mrf.mxu0
    %v1524 = vadd.f32 %v1501, %v1523
    %1525 = vmatmul.f32.gmra.mxu0 %v1038
    %v1526 = vpop.f32.mrf.mxu0
    %v1527 = vadd.f32 %v1504, %v1526
    %1528 = vdwg.mxu0
    %1529 = vmatpush.msra.mxu0 %v1466
    %1530 = vmatpush.msra.mxu0 %v1465
    %1531 = vmatpush.msra.mxu0 %v1464
    %1532 = vmatpush.msra.mxu0 %v1463
    %1533 = vmatpush.msra.mxu0 %v1462
    %1534 = vmatpush.msra.mxu0 %v1461
    %1535 = vmatpush.msra.mxu0 %v1460
    %1536 = vmatpush.msra.mxu0 %v1459
    %1537 = vmatpush.msra.mxu0 %v1458
    %1538 = vmatpush.msra.mxu0 %v1457
    %1539 = vmatpush.msra.mxu0 %v1456
    %1540 = vmatpush.msra.mxu0 %v1455
    %1541 = vmatpush.msra.mxu0 %v1454
    %1542 = vmatpush.msra.mxu0 %v1453
    %1543 = vmatpush.msra.mxu0 %v1452
    %1544 = vmatpush.msra.mxu0 %v1451
    %1545 = vmatmul.f32.gmra.mxu0 %v1339
    %v1546 = vpop.f32.mrf.mxu0
    %v1547 = vadd.f32 %v1524, %v1546
    %1548 = vmatmul.f32.gmra.mxu0 %v1340
    %v1549 = vpop.f32.mrf.mxu0
    %v1550 = vadd.f32 %v1527, %v1549
    %1551 = vdwg.mxu0
    %1552 = vmatpush.msra.mxu0 %v1482
    %1553 = vmatpush.msra.mxu0 %v1481
    %1554 = vmatpush.msra.mxu0 %v1480
    %1555 = vmatpush.msra.mxu0 %v1479
    %1556 = vmatpush.msra.mxu0 %v1478
    %1557 = vmatpush.msra.mxu0 %v1477
    %1558 = vmatpush.msra.mxu0 %v1476
    %1559 = vmatpush.msra.mxu0 %v1475
    %1560 = vmatpush.msra.mxu0 %v1474
    %1561 = vmatpush.msra.mxu0 %v1473
    %1562 = vmatpush.msra.mxu0 %v1472
    %1563 = vmatpush.msra.mxu0 %v1471
    %1564 = vmatpush.msra.mxu0 %v1470
    %1565 = vmatpush.msra.mxu0 %v1469
    %1566 = vmatpush.msra.mxu0 %v1468
    %1567 = vmatpush.msra.mxu0 %v1467
    %1568 = vmatmul.f32.gmra.mxu0 %v1415
    %v1569 = vpop.f32.mrf.mxu0
    %v1570 = vadd.f32 %v1547, %v1569
    %1571 = vmatmul.f32.gmra.mxu0 %v1416
    %v1572 = vpop.f32.mrf.mxu0
    %v1573 = vadd.f32 %v1550, %v1572
    %1574 = vdwg.mxu0
    %1575 = vmatpush.msra.mxu0 %v1358
    %1576 = vmatpush.msra.mxu0 %v1357
    %1577 = vmatpush.msra.mxu0 %v1356
    %1578 = vmatpush.msra.mxu0 %v1355
    %1579 = vmatpush.msra.mxu0 %v1354
    %1580 = vmatpush.msra.mxu0 %v1353
    %1581 = vmatpush.msra.mxu0 %v1352
    %1582 = vmatpush.msra.mxu0 %v1351
    %1583 = vmatpush.msra.mxu0 %v1350
    %1584 = vmatpush.msra.mxu0 %v1349
    %1585 = vmatpush.msra.mxu0 %v1348
    %1586 = vmatpush.msra.mxu0 %v1347
    %1587 = vmatpush.msra.mxu0 %v1346
    %1588 = vmatpush.msra.mxu0 %v1345
    %1589 = vmatpush.msra.mxu0 %v1344
    %1590 = vmatpush.msra.mxu0 %v1343
    %1591 = vmatmul.f32.gmra.mxu0 %v947
    %v1592 = vpop.f32.mrf.mxu0
    %v1593 = vadd.f32 %v1570, %v1592
    %1594 = vmatmul.f32.gmra.mxu0 %v948
    %v1595 = vpop.f32.mrf.mxu0
    %v1596 = vadd.f32 %v1573, %v1595
    %1597 = vdwg.mxu0
    %1598 = vmatpush.msra.mxu0 %v1374
    %1599 = vmatpush.msra.mxu0 %v1373
    %1600 = vmatpush.msra.mxu0 %v1372
    %1601 = vmatpush.msra.mxu0 %v1371
    %1602 = vmatpush.msra.mxu0 %v1370
    %1603 = vmatpush.msra.mxu0 %v1369
    %1604 = vmatpush.msra.mxu0 %v1368
    %1605 = vmatpush.msra.mxu0 %v1367
    %1606 = vmatpush.msra.mxu0 %v1366
    %1607 = vmatpush.msra.mxu0 %v1365
    %1608 = vmatpush.msra.mxu0 %v1364
    %1609 = vmatpush.msra.mxu0 %v1363
    %1610 = vmatpush.msra.mxu0 %v1362
    %1611 = vmatpush.msra.mxu0 %v1361
    %1612 = vmatpush.msra.mxu0 %v1360
    %1613 = vmatpush.msra.mxu0 %v1359
    %1614 = vmatmul.f32.gmra.mxu0 %v903
    %v1615 = vpop.f32.mrf.mxu0
    %v1616 = vadd.f32 %v1593, %v1615
    %1617 = vmatmul.f32.gmra.mxu0 %v914
    %v1618 = vpop.f32.mrf.mxu0
    %v1619 = vadd.f32 %v1596, %v1618
    %1620 = vdwg.mxu0
    %1621 = vmatpush.msra.mxu0 %v1390
    %1622 = vmatpush.msra.mxu0 %v1389
    %1623 = vmatpush.msra.mxu0 %v1388
    %1624 = vmatpush.msra.mxu0 %v1387
    %1625 = vmatpush.msra.mxu0 %v1386
    %1626 = vmatpush.msra.mxu0 %v1385
    %1627 = vmatpush.msra.mxu0 %v1384
    %1628 = vmatpush.msra.mxu0 %v1383
    %1629 = vmatpush.msra.mxu0 %v1382
    %1630 = vmatpush.msra.mxu0 %v1381
    %1631 = vmatpush.msra.mxu0 %v1380
    %1632 = vmatpush.msra.mxu0 %v1379
    %1633 = vmatpush.msra.mxu0 %v1378
    %1634 = vmatpush.msra.mxu0 %v1377
    %1635 = vmatpush.msra.mxu0 %v1376
    %1636 = vmatpush.msra.mxu0 %v1375
    %1637 = vmatmul.f32.gmra.mxu0 %v1339
    %v1638 = vpop.f32.mrf.mxu0
    %v1639 = vadd.f32 %v1616, %v1638
    %1640 = vmatmul.f32.gmra.mxu0 %v1340
    %v1641 = vpop.f32.mrf.mxu0
    %v1642 = vadd.f32 %v1619, %v1641
    %1643 = vdwg.mxu0
    %1644 = vmatpush.msra.mxu0 %v1406
    %1645 = vmatpush.msra.mxu0 %v1405
    %1646 = vmatpush.msra.mxu0 %v1404
    %1647 = vmatpush.msra.mxu0 %v1403
    %1648 = vmatpush.msra.mxu0 %v1402
    %1649 = vmatpush.msra.mxu0 %v1401
    %1650 = vmatpush.msra.mxu0 %v1400
    %1651 = vmatpush.msra.mxu0 %v1399
    %1652 = vmatpush.msra.mxu0 %v1398
    %1653 = vmatpush.msra.mxu0 %v1397
    %1654 = vmatpush.msra.mxu0 %v1396
    %1655 = vmatpush.msra.mxu0 %v1395
    %1656 = vmatpush.msra.mxu0 %v1394
    %1657 = vmatpush.msra.mxu0 %v1393
    %1658 = vmatpush.msra.mxu0 %v1392
    %1659 = vmatpush.msra.mxu0 %v1391
    %1660 = vmatmul.f32.gmra.mxu0 %v1315
    %v1661 = vpop.f32.mrf.mxu0
    %v1662 = vadd.f32 %v1639, %v1661
    %1663 = vmatmul.f32.gmra.mxu0 %v1325
    %v1664 = vpop.f32.mrf.mxu0
    %v1665 = vadd.f32 %v1642, %v1664
    %1666 = vdwg.mxu0
    %v1667 = vld [vmem:[%s43] sm:$0xff]
    %v1668 = vld [vmem:[%s43 + $0x8] sm:$0xff]
    %v1669 = vld [vmem:[%s43 + $0x10] sm:$0xff]
    %v1670 = vld [vmem:[%s43 + $0x18] sm:$0xff]
    %v1671 = vld [vmem:[%s45] sm:$0xff]
    %v1672 = vld [vmem:[%s45 + $0x8] sm:$0xff]
    %v1673 = vld [vmem:[%s45 + $0x10] sm:$0xff]
    %v1674 = vld [vmem:[%s45 + $0x18] sm:$0xff]
    %vm1675 = vcmask 130048
    %v1677 = vsel %vm1675, %v1671, 0
    %v1680 = vsel %vm1675, %v1672, 0
    %v1683 = vsel %vm1675, %v1673, 0
    %v1686 = vsel %vm1675, %v1674, 0
    %1688 = vmatpush.msra.mxu0 0.0
    %1689 = vmatpush.msra.mxu0 0.0
    %1690 = vmatpush.msra.mxu0 0.0
    %1691 = vmatpush.msra.mxu0 0.0
    %1692 = vmatpush.msra.mxu0 0.0
    %1693 = vmatpush.msra.mxu0 0.0
    %1694 = vmatpush.msra.mxu0 0.0
    %1695 = vmatpush.msra.mxu0 0.0
    %1696 = vmatpush.msra.mxu0 0.0
    %1697 = vmatpush.msra.mxu0 0.0
    %1698 = vmatpush.msra.mxu0 0.0
    %1699 = vmatpush.msra.mxu0 0.0
    %1700 = vmatpush.msra.mxu0 0.0
    %1701 = vmatpush.msra.mxu0 0.0
    %1702 = vmatpush.msra.mxu0 %v1665
    %1703 = vmatpush.msra.mxu0 %v1662
    %1704 = vmatmul.f32.gmra.mxu0 %v1677
    %v1705 = vpop.f32.mrf.mxu0
    %v1706 = vadd.f32 0.0, %v1705
    %1707 = vmatmul.f32.gmra.mxu0 %v1680
    %v1708 = vpop.f32.mrf.mxu0
    %v1709 = vadd.f32 0.0, %v1708
    %1710 = vmatmul.f32.gmra.mxu0 %v1683
    %v1711 = vpop.f32.mrf.mxu0
    %v1712 = vadd.f32 0.0, %v1711
    %1713 = vmatmul.f32.gmra.mxu0 %v1686
    %v1714 = vpop.f32.mrf.mxu0
    %v1715 = vadd.f32 0.0, %v1714
    %1716 = vdwg.mxu0
    %v1718 = vsel %vm1675, %v1667, 0
    %v1721 = vsel %vm1675, %v1668, 0
    %v1724 = vsel %vm1675, %v1669, 0
    %v1727 = vsel %vm1675, %v1670, 0
    %1729 = vmatpush.msra.mxu0 0.0
    %1730 = vmatpush.msra.mxu0 0.0
    %1731 = vmatpush.msra.mxu0 0.0
    %1732 = vmatpush.msra.mxu0 0.0
    %1733 = vmatpush.msra.mxu0 0.0
    %1734 = vmatpush.msra.mxu0 0.0
    %1735 = vmatpush.msra.mxu0 0.0
    %1736 = vmatpush.msra.mxu0 0.0
    %1737 = vmatpush.msra.mxu0 0.0
    %1738 = vmatpush.msra.mxu0 0.0
    %1739 = vmatpush.msra.mxu0 0.0
    %1740 = vmatpush.msra.mxu0 0.0
    %1741 = vmatpush.msra.mxu0 0.0
    %1742 = vmatpush.msra.mxu0 0.0
    %1743 = vmatpush.msra.mxu0 %v1299
    %1744 = vmatpush.msra.mxu0 %v1296
    %1745 = vmatmul.f32.gmra.mxu0 %v1718
    %v1746 = vpop.f32.mrf.mxu0
    %v1747 = vadd.f32 %v1706, %v1746
    %1748 = vmatmul.f32.gmra.mxu0 %v1721
    %v1749 = vpop.f32.mrf.mxu0
    %v1750 = vadd.f32 %v1709, %v1749
    %1751 = vmatmul.f32.gmra.mxu0 %v1724
    %v1752 = vpop.f32.mrf.mxu0
    %v1753 = vadd.f32 %v1712, %v1752
    %1754 = vmatmul.f32.gmra.mxu0 %v1727
    %v1755 = vpop.f32.mrf.mxu0
    %v1756 = vadd.f32 %v1715, %v1755
    %1757 = vdwg.mxu0
    %v1758 = vld [vmem:[#allocation11] sm:$0xff]
    %v1759 = vld [vmem:[#allocation11 + $0x8] sm:$0xff]
    %v1760 = vld [vmem:[#allocation11 + $0x10] sm:$0xff]
    %v1761 = vld [vmem:[#allocation11 + $0x18] sm:$0xff]
    %v1762 = vadd.f32 %v1747, %v1758
    %v1763 = vadd.f32 %v1750, %v1759
    %v1764 = vadd.f32 %v1753, %v1760
    %v1765 = vadd.f32 %v1756, %v1761
    %vm1766 = vcmp.ge.f32.partialorder %v1762, 0.0
    %vm1767 = vcmp.ge.f32.partialorder %v1763, 0.0
    %vm1768 = vcmp.ge.f32.partialorder %v1764, 0.0
    %vm1769 = vcmp.ge.f32.partialorder %v1765, 0.0
    %v1770 = vmul.f32 %v1762, 0.2
    %v1771 = vmul.f32 %v1763, 0.2
    %v1772 = vmul.f32 %v1764, 0.2
    %v1773 = vmul.f32 %v1765, 0.2
    %v1774 = vsel %vm1766, %v1762, %v1770
    %v1775 = vsel %vm1767, %v1763, %v1771
    %v1776 = vsel %vm1768, %v1764, %v1772
    %v1777 = vsel %vm1769, %v1765, %v1773
    %1778 = vst [vmem:[#allocation4] sm:$0xff] 0.0
    %1779 = vst.msk [vmem:[#allocation4 + $0x8] sm:$0xff] %vm1675, 0.0
    %1780 = vst [vmem:[#allocation4 + $0x10] sm:$0xff] 0.0
    %1781 = vst.msk [vmem:[#allocation4 + $0x18] sm:$0xff] %vm1675, 0.0
    %1782 = vst [vmem:[#allocation4 + $0x20] sm:$0xff] 0.0
    %1783 = vst.msk [vmem:[#allocation4 + $0x28] sm:$0xff] %vm1675, 0.0
    %1784 = vst [vmem:[#allocation4 + $0x30] sm:$0xff] 0.0
    %1785 = vst.msk [vmem:[#allocation4 + $0x38] sm:$0xff] %vm1675, 0.0
    %1786 = vst [vmem:[#allocation4 + $0x40] sm:$0xf] 0.0
    %vm1787 = vcmask 125952
    %1788 = vst.msk [vmem:[#allocation4 + $0x48] sm:$0xf] %vm1787, 0.0
    %vm1791 = vcmask 1040384
    %v1792 = vrot.slane %v1774, 7
    %v1793 = vrot.slane %v1775, 7
    %v1794 = vsel %vm1791, %v1792, %v1793
    %1795 = vrot.lane.b32.xlu0 %v1792, 8
    %v1796 = vpop.permute.xlu0 %1795
    %1797 = vrot.lane.b32.xlu0 %v1794, 8
    %v1798 = vpop.permute.xlu0 %1797
    %1799 = vrot.lane.b32.xlu0 %v1793, 8
    %v1800 = vpop.permute.xlu0 %1799
    %vm1804 = vcmask 1047617
    %1805 = vst.msk [vmem:[#allocation4] sm:$0xfe] %vm1804, %v1796
    %vm1806 = vcmask 64513
    %1807 = vst.msk [vmem:[#allocation4 + $0x8] sm:$0xfe] %vm1806, %v1796
    %vm1808 = vcmask 1047616
    %1809 = vst.msk [vmem:[#allocation4 + $0x10] sm:$0xff] %vm1808, %v1798
    %1810 = vst.msk [vmem:[#allocation4 + $0x18] sm:$0xff] %vm786, %v1798
    %vm1811 = vcmask 1040448
    %1812 = vst.msk [vmem:[#allocation4 + $0x20] sm:$0x1] %vm1811, %v1800
    %vm1813 = vcmask 57344
    %1814 = vst.msk [vmem:[#allocation4 + $0x28] sm:$0x1] %vm1813, %v1800
    %v1817 = vrot.slane %v1776, 5
    %v1818 = vrot.slane %v1777, 5
    %v1819 = vsel %vm311, %v1817, %v1818
    %1820 = vrot.lane.b32.xlu0 %v1817, 8
    %v1821 = vpop.permute.xlu0 %1820
    %1822 = vrot.lane.b32.xlu0 %v1819, 8
    %v1823 = vpop.permute.xlu0 %1822
    %1824 = vrot.lane.b32.xlu0 %v1818, 8
    %v1825 = vpop.permute.xlu0 %1824
    %vm1829 = vcmask 1047619
    %1830 = vst.msk [vmem:[#allocation4 + $0x20] sm:$0xf8] %vm1829, %v1821
    %vm1831 = vcmask 64515
    %1832 = vst.msk [vmem:[#allocation4 + $0x28] sm:$0xf8] %vm1831, %v1821
    %1833 = vst.msk [vmem:[#allocation4 + $0x30] sm:$0xff] %vm1808, %v1823
    %1834 = vst.msk [vmem:[#allocation4 + $0x38] sm:$0xff] %vm786, %v1823
    %vm1835 = vcmask 1042496
    %1836 = vst.msk [vmem:[#allocation4 + $0x40] sm:$0x7] %vm1835, %v1825
    %vm1837 = vcmask 59392
    %1838 = vst.msk [vmem:[#allocation4 + $0x48] sm:$0x7] %vm1837, %v1825
    %v1839 = vld [vmem:[#allocation4] sm:$0xfe]
    %v1840 = vld [vmem:[#allocation4 + $0x8] sm:$0xfe]
    %v1841 = vld [vmem:[#allocation4 + $0x10] sm:$0xff]
    %v1842 = vld [vmem:[#allocation4 + $0x18] sm:$0xff]
    %v1843 = vld [vmem:[#allocation4 + $0x20] sm:$0x1]
    %v1844 = vld [vmem:[#allocation4 + $0x28] sm:$0x1]
    %v1845 = vld [vmem:[#allocation4 + $0x20] sm:$0xf8]
    %v1846 = vld [vmem:[#allocation4 + $0x28] sm:$0xf8]
    %v1847 = vld [vmem:[#allocation4 + $0x30] sm:$0xff]
    %v1848 = vld [vmem:[#allocation4 + $0x38] sm:$0xff]
    %v1849 = vld [vmem:[#allocation4 + $0x40] sm:$0x7]
    %v1850 = vld [vmem:[#allocation4 + $0x48] sm:$0x7]
    %v1857 = vrot.slane %v1839, 1
    %v1858 = vrot.slane %v1841, 1
    %v1859 = vsel %vm900, %v1857, %v1858
    %v1860 = vrot.slane %v1840, 1
    %v1861 = vrot.slane %v1842, 1
    %v1862 = vsel %vm900, %v1860, %v1861
    %v1863 = vrot.slane %v1843, 1
    %v1864 = vsel %vm900, %v1858, %v1863
    %v1865 = vrot.slane %v1844, 1
    %v1866 = vsel %vm900, %v1861, %v1865
    %v1873 = vrot.slane %v1845, 3
    %v1874 = vrot.slane %v1847, 3
    %v1875 = vsel %vm911, %v1873, %v1874
    %v1876 = vrot.slane %v1846, 3
    %v1877 = vrot.slane %v1848, 3
    %v1878 = vsel %vm911, %v1876, %v1877
    %v1879 = vrot.slane %v1849, 3
    %v1880 = vsel %vm911, %v1874, %v1879
    %v1881 = vrot.slane %v1850, 3
    %v1882 = vsel %vm911, %v1877, %v1881
    %v1887 = vld [vmem:[#allocation4] sm:$0xff]
    %v1888 = vld [vmem:[#allocation4 + $0x8] sm:$0xff]
    %v1889 = vld [vmem:[#allocation4 + $0x20] sm:$0xfc]
    %v1890 = vld [vmem:[#allocation4 + $0x28] sm:$0xfc]
    %v1891 = vld [vmem:[#allocation4 + $0x40] sm:$0x3]
    %v1892 = vld [vmem:[#allocation4 + $0x48] sm:$0x3]
    %v1897 = vrot.slane %v1889, 2
    %v1898 = vrot.slane %v1847, 2
    %v1899 = vsel %vm930, %v1897, %v1898
    %v1900 = vrot.slane %v1890, 2
    %v1901 = vrot.slane %v1848, 2
    %v1902 = vsel %vm930, %v1900, %v1901
    %v1903 = vrot.slane %v1891, 2
    %v1904 = vsel %vm930, %v1898, %v1903
    %v1905 = vrot.slane %v1892, 2
    %v1906 = vsel %vm930, %v1901, %v1905
    %1909 = vrot.lane.b32.xlu0 %v1859, 120
    %v1910 = vpop.permute.xlu0 %1909
    %1911 = vrot.lane.b32.xlu0 %v1862, 120
    %v1912 = vpop.permute.xlu0 %1911
    %1913 = vrot.lane.b32.xlu0 %v1864, 120
    %v1914 = vpop.permute.xlu0 %1913
    %1915 = vrot.lane.b32.xlu0 %v1866, 120
    %v1916 = vpop.permute.xlu0 %1915
    %1917 = vrot.lane.b32.xlu0 %v1875, 120
    %v1918 = vpop.permute.xlu0 %1917
    %1919 = vrot.lane.b32.xlu0 %v1878, 120
    %v1920 = vpop.permute.xlu0 %1919
    %1921 = vrot.lane.b32.xlu0 %v1880, 120
    %v1922 = vpop.permute.xlu0 %1921
    %1923 = vrot.lane.b32.xlu0 %v1882, 120
    %v1924 = vpop.permute.xlu0 %1923
    %vm1925 = vcmask 982016
    %v1926 = vsel %vm1925, %v1910, %v1912
    %v1927 = vsel %vm1925, %v1914, %v1916
    %v1928 = vsel %vm1925, %v1918, %v1920
    %v1929 = vsel %vm1925, %v1922, %v1924
    %1936 = vrot.lane.b32.xlu0 %v1887, 120
    %v1937 = vpop.permute.xlu0 %1936
    %1938 = vrot.lane.b32.xlu0 %v1888, 120
    %v1939 = vpop.permute.xlu0 %1938
    %1940 = vrot.lane.b32.xlu0 %v1841, 120
    %v1941 = vpop.permute.xlu0 %1940
    %1942 = vrot.lane.b32.xlu0 %v1842, 120
    %v1943 = vpop.permute.xlu0 %1942
    %1944 = vrot.lane.b32.xlu0 %v1899, 120
    %v1945 = vpop.permute.xlu0 %1944
    %1946 = vrot.lane.b32.xlu0 %v1902, 120
    %v1947 = vpop.permute.xlu0 %1946
    %1948 = vrot.lane.b32.xlu0 %v1904, 120
    %v1949 = vpop.permute.xlu0 %1948
    %1950 = vrot.lane.b32.xlu0 %v1906, 120
    %v1951 = vpop.permute.xlu0 %1950
    %v1952 = vsel %vm1925, %v1937, %v1939
    %v1953 = vsel %vm1925, %v1941, %v1943
    %v1954 = vsel %vm1925, %v1945, %v1947
    %v1955 = vsel %vm1925, %v1949, %v1951
    %v1960 = vld [vmem:[%s49] sm:$0xff]
    %v1961 = vld [vmem:[%s49 + $0x8] sm:$0xff]
    %v1962 = vld [vmem:[%s49 + $0x10] sm:$0xff]
    %v1963 = vld [vmem:[%s49 + $0x18] sm:$0xff]
    %v1964 = vld [vmem:[%s49 + $0x20] sm:$0xff]
    %v1965 = vld [vmem:[%s49 + $0x28] sm:$0xff]
    %v1966 = vld [vmem:[%s49 + $0x30] sm:$0xff]
    %v1967 = vld [vmem:[%s49 + $0x38] sm:$0xff]
    %v1968 = vld [vmem:[%s49 + $0x40] sm:$0xff]
    %v1969 = vld [vmem:[%s49 + $0x48] sm:$0xff]
    %v1970 = vld [vmem:[%s49 + $0x50] sm:$0xff]
    %v1971 = vld [vmem:[%s49 + $0x58] sm:$0xff]
    %v1972 = vld [vmem:[%s49 + $0x60] sm:$0xff]
    %v1973 = vld [vmem:[%s49 + $0x68] sm:$0xff]
    %v1974 = vld [vmem:[%s49 + $0x70] sm:$0xff]
    %v1975 = vld [vmem:[%s49 + $0x78] sm:$0xff]
    %v1976 = vld [vmem:[%s49 + $0x80] sm:$0xff]
    %v1977 = vld [vmem:[%s49 + $0x88] sm:$0xff]
    %v1978 = vld [vmem:[%s49 + $0x90] sm:$0xff]
    %v1979 = vld [vmem:[%s49 + $0x98] sm:$0xff]
    %v1980 = vld [vmem:[%s49 + $0xa0] sm:$0xff]
    %v1981 = vld [vmem:[%s49 + $0xa8] sm:$0xff]
    %v1982 = vld [vmem:[%s49 + $0xb0] sm:$0xff]
    %v1983 = vld [vmem:[%s49 + $0xb8] sm:$0xff]
    %v1984 = vld [vmem:[%s49 + $0xc0] sm:$0xff]
    %v1985 = vld [vmem:[%s49 + $0xc8] sm:$0xff]
    %v1986 = vld [vmem:[%s49 + $0xd0] sm:$0xff]
    %v1987 = vld [vmem:[%s49 + $0xd8] sm:$0xff]
    %v1988 = vld [vmem:[%s49 + $0xe0] sm:$0xff]
    %v1989 = vld [vmem:[%s49 + $0xe8] sm:$0xff]
    %v1990 = vld [vmem:[%s49 + $0xf0] sm:$0xff]
    %v1991 = vld [vmem:[%s49 + $0xf8] sm:$0xff]
    %v1992 = vld [vmem:[%s49 + $0x100] sm:$0xff]
    %v1993 = vld [vmem:[%s49 + $0x108] sm:$0xff]
    %v1994 = vld [vmem:[%s49 + $0x110] sm:$0xff]
    %v1995 = vld [vmem:[%s49 + $0x118] sm:$0xff]
    %v1996 = vld [vmem:[%s49 + $0x120] sm:$0xff]
    %v1997 = vld [vmem:[%s49 + $0x128] sm:$0xff]
    %v1998 = vld [vmem:[%s49 + $0x130] sm:$0xff]
    %v1999 = vld [vmem:[%s49 + $0x138] sm:$0xff]
    %v2000 = vld [vmem:[%s49 + $0x140] sm:$0xff]
    %v2001 = vld [vmem:[%s49 + $0x148] sm:$0xff]
    %v2002 = vld [vmem:[%s49 + $0x150] sm:$0xff]
    %v2003 = vld [vmem:[%s49 + $0x158] sm:$0xff]
    %v2004 = vld [vmem:[%s49 + $0x160] sm:$0xff]
    %v2005 = vld [vmem:[%s49 + $0x168] sm:$0xff]
    %v2006 = vld [vmem:[%s49 + $0x170] sm:$0xff]
    %v2007 = vld [vmem:[%s49 + $0x178] sm:$0xff]
    %v2008 = vld [vmem:[%s49 + $0x180] sm:$0xff]
    %v2009 = vld [vmem:[%s49 + $0x188] sm:$0xff]
    %v2010 = vld [vmem:[%s49 + $0x190] sm:$0xff]
    %v2011 = vld [vmem:[%s49 + $0x198] sm:$0xff]
    %v2012 = vld [vmem:[%s49 + $0x1a0] sm:$0xff]
    %v2013 = vld [vmem:[%s49 + $0x1a8] sm:$0xff]
    %v2014 = vld [vmem:[%s49 + $0x1b0] sm:$0xff]
    %v2015 = vld [vmem:[%s49 + $0x1b8] sm:$0xff]
    %v2016 = vld [vmem:[%s49 + $0x1c0] sm:$0xff]
    %v2017 = vld [vmem:[%s49 + $0x1c8] sm:$0xff]
    %v2018 = vld [vmem:[%s49 + $0x1d0] sm:$0xff]
    %v2019 = vld [vmem:[%s49 + $0x1d8] sm:$0xff]
    %v2020 = vld [vmem:[%s49 + $0x1e0] sm:$0xff]
    %v2021 = vld [vmem:[%s49 + $0x1e8] sm:$0xff]
    %v2022 = vld [vmem:[%s49 + $0x1f0] sm:$0xff]
    %v2023 = vld [vmem:[%s49 + $0x1f8] sm:$0xff]
    %2024 = vrot.lane.b32.xlu0 %v1859, 112
    %v2025 = vpop.permute.xlu0 %2024
    %2026 = vrot.lane.b32.xlu0 %v1862, 112
    %v2027 = vpop.permute.xlu0 %2026
    %2028 = vrot.lane.b32.xlu0 %v1864, 112
    %v2029 = vpop.permute.xlu0 %2028
    %2030 = vrot.lane.b32.xlu0 %v1866, 112
    %v2031 = vpop.permute.xlu0 %2030
    %2032 = vrot.lane.b32.xlu0 %v1875, 112
    %v2033 = vpop.permute.xlu0 %2032
    %2034 = vrot.lane.b32.xlu0 %v1878, 112
    %v2035 = vpop.permute.xlu0 %2034
    %2036 = vrot.lane.b32.xlu0 %v1880, 112
    %v2037 = vpop.permute.xlu0 %2036
    %2038 = vrot.lane.b32.xlu0 %v1882, 112
    %v2039 = vpop.permute.xlu0 %2038
    %v2040 = vsel %vm946, %v2025, %v2027
    %v2041 = vsel %vm946, %v2029, %v2031
    %v2042 = vsel %vm946, %v2033, %v2035
    %v2043 = vsel %vm946, %v2037, %v2039
    %2048 = vrot.lane.b32.xlu0 %v1887, 112
    %v2049 = vpop.permute.xlu0 %2048
    %2050 = vrot.lane.b32.xlu0 %v1888, 112
    %v2051 = vpop.permute.xlu0 %2050
    %2052 = vrot.lane.b32.xlu0 %v1841, 112
    %v2053 = vpop.permute.xlu0 %2052
    %2054 = vrot.lane.b32.xlu0 %v1842, 112
    %v2055 = vpop.permute.xlu0 %2054
    %2056 = vrot.lane.b32.xlu0 %v1899, 112
    %v2057 = vpop.permute.xlu0 %2056
    %2058 = vrot.lane.b32.xlu0 %v1902, 112
    %v2059 = vpop.permute.xlu0 %2058
    %2060 = vrot.lane.b32.xlu0 %v1904, 112
    %v2061 = vpop.permute.xlu0 %2060
    %2062 = vrot.lane.b32.xlu0 %v1906, 112
    %v2063 = vpop.permute.xlu0 %2062
    %v2064 = vsel %vm946, %v2049, %v2051
    %v2065 = vsel %vm946, %v2053, %v2055
    %v2066 = vsel %vm946, %v2057, %v2059
    %v2067 = vsel %vm946, %v2061, %v2063
    %v2072 = vld [vmem:[%s51] sm:$0xff]
    %v2073 = vld [vmem:[%s51 + $0x8] sm:$0xff]
    %v2074 = vld [vmem:[%s51 + $0x10] sm:$0xff]
    %v2075 = vld [vmem:[%s51 + $0x18] sm:$0xff]
    %v2076 = vld [vmem:[%s51 + $0x20] sm:$0xff]
    %v2077 = vld [vmem:[%s51 + $0x28] sm:$0xff]
    %v2078 = vld [vmem:[%s51 + $0x30] sm:$0xff]
    %v2079 = vld [vmem:[%s51 + $0x38] sm:$0xff]
    %v2080 = vld [vmem:[%s51 + $0x40] sm:$0xff]
    %v2081 = vld [vmem:[%s51 + $0x48] sm:$0xff]
    %v2082 = vld [vmem:[%s51 + $0x50] sm:$0xff]
    %v2083 = vld [vmem:[%s51 + $0x58] sm:$0xff]
    %v2084 = vld [vmem:[%s51 + $0x60] sm:$0xff]
    %v2085 = vld [vmem:[%s51 + $0x68] sm:$0xff]
    %v2086 = vld [vmem:[%s51 + $0x70] sm:$0xff]
    %v2087 = vld [vmem:[%s51 + $0x78] sm:$0xff]
    %v2088 = vld [vmem:[%s51 + $0x80] sm:$0xff]
    %v2089 = vld [vmem:[%s51 + $0x88] sm:$0xff]
    %v2090 = vld [vmem:[%s51 + $0x90] sm:$0xff]
    %v2091 = vld [vmem:[%s51 + $0x98] sm:$0xff]
    %v2092 = vld [vmem:[%s51 + $0xa0] sm:$0xff]
    %v2093 = vld [vmem:[%s51 + $0xa8] sm:$0xff]
    %v2094 = vld [vmem:[%s51 + $0xb0] sm:$0xff]
    %v2095 = vld [vmem:[%s51 + $0xb8] sm:$0xff]
    %v2096 = vld [vmem:[%s51 + $0xc0] sm:$0xff]
    %v2097 = vld [vmem:[%s51 + $0xc8] sm:$0xff]
    %v2098 = vld [vmem:[%s51 + $0xd0] sm:$0xff]
    %v2099 = vld [vmem:[%s51 + $0xd8] sm:$0xff]
    %v2100 = vld [vmem:[%s51 + $0xe0] sm:$0xff]
    %v2101 = vld [vmem:[%s51 + $0xe8] sm:$0xff]
    %v2102 = vld [vmem:[%s51 + $0xf0] sm:$0xff]
    %v2103 = vld [vmem:[%s51 + $0xf8] sm:$0xff]
    %v2104 = vld [vmem:[%s51 + $0x100] sm:$0xff]
    %v2105 = vld [vmem:[%s51 + $0x108] sm:$0xff]
    %v2106 = vld [vmem:[%s51 + $0x110] sm:$0xff]
    %v2107 = vld [vmem:[%s51 + $0x118] sm:$0xff]
    %v2108 = vld [vmem:[%s51 + $0x120] sm:$0xff]
    %v2109 = vld [vmem:[%s51 + $0x128] sm:$0xff]
    %v2110 = vld [vmem:[%s51 + $0x130] sm:$0xff]
    %v2111 = vld [vmem:[%s51 + $0x138] sm:$0xff]
    %v2112 = vld [vmem:[%s51 + $0x140] sm:$0xff]
    %v2113 = vld [vmem:[%s51 + $0x148] sm:$0xff]
    %v2114 = vld [vmem:[%s51 + $0x150] sm:$0xff]
    %v2115 = vld [vmem:[%s51 + $0x158] sm:$0xff]
    %v2116 = vld [vmem:[%s51 + $0x160] sm:$0xff]
    %v2117 = vld [vmem:[%s51 + $0x168] sm:$0xff]
    %v2118 = vld [vmem:[%s51 + $0x170] sm:$0xff]
    %v2119 = vld [vmem:[%s51 + $0x178] sm:$0xff]
    %v2120 = vld [vmem:[%s51 + $0x180] sm:$0xff]
    %v2121 = vld [vmem:[%s51 + $0x188] sm:$0xff]
    %v2122 = vld [vmem:[%s51 + $0x190] sm:$0xff]
    %v2123 = vld [vmem:[%s51 + $0x198] sm:$0xff]
    %v2124 = vld [vmem:[%s51 + $0x1a0] sm:$0xff]
    %v2125 = vld [vmem:[%s51 + $0x1a8] sm:$0xff]
    %v2126 = vld [vmem:[%s51 + $0x1b0] sm:$0xff]
    %v2127 = vld [vmem:[%s51 + $0x1b8] sm:$0xff]
    %v2128 = vld [vmem:[%s51 + $0x1c0] sm:$0xff]
    %v2129 = vld [vmem:[%s51 + $0x1c8] sm:$0xff]
    %v2130 = vld [vmem:[%s51 + $0x1d0] sm:$0xff]
    %v2131 = vld [vmem:[%s51 + $0x1d8] sm:$0xff]
    %v2132 = vld [vmem:[%s51 + $0x1e0] sm:$0xff]
    %v2133 = vld [vmem:[%s51 + $0x1e8] sm:$0xff]
    %v2134 = vld [vmem:[%s51 + $0x1f0] sm:$0xff]
    %v2135 = vld [vmem:[%s51 + $0x1f8] sm:$0xff]
    %2136 = vmatpush.msra.mxu0 %v2087
    %2137 = vmatpush.msra.mxu0 %v2086
    %2138 = vmatpush.msra.mxu0 %v2085
    %2139 = vmatpush.msra.mxu0 %v2084
    %2140 = vmatpush.msra.mxu0 %v2083
    %2141 = vmatpush.msra.mxu0 %v2082
    %2142 = vmatpush.msra.mxu0 %v2081
    %2143 = vmatpush.msra.mxu0 %v2080
    %2144 = vmatpush.msra.mxu0 %v2079
    %2145 = vmatpush.msra.mxu0 %v2078
    %2146 = vmatpush.msra.mxu0 %v2077
    %2147 = vmatpush.msra.mxu0 %v2076
    %2148 = vmatpush.msra.mxu0 %v2075
    %2149 = vmatpush.msra.mxu0 %v2074
    %2150 = vmatpush.msra.mxu0 %v2073
    %2151 = vmatpush.msra.mxu0 %v2072
    %2152 = vmatmul.f32.gmra.mxu0 %v1926
    %v2153 = vpop.f32.mrf.mxu0
    %v2154 = vadd.f32 0.0, %v2153
    %2155 = vmatmul.f32.gmra.mxu0 %v1927
    %v2156 = vpop.f32.mrf.mxu0
    %v2157 = vadd.f32 0.0, %v2156
    %2158 = vmatmul.f32.gmra.mxu0 %v1928
    %v2159 = vpop.f32.mrf.mxu0
    %v2160 = vadd.f32 0.0, %v2159
    %2161 = vmatmul.f32.gmra.mxu0 %v1929
    %v2162 = vpop.f32.mrf.mxu0
    %v2163 = vadd.f32 0.0, %v2162
    %2164 = vdwg.mxu0
    %2165 = vmatpush.msra.mxu0 %v2103
    %2166 = vmatpush.msra.mxu0 %v2102
    %2167 = vmatpush.msra.mxu0 %v2101
    %2168 = vmatpush.msra.mxu0 %v2100
    %2169 = vmatpush.msra.mxu0 %v2099
    %2170 = vmatpush.msra.mxu0 %v2098
    %2171 = vmatpush.msra.mxu0 %v2097
    %2172 = vmatpush.msra.mxu0 %v2096
    %2173 = vmatpush.msra.mxu0 %v2095
    %2174 = vmatpush.msra.mxu0 %v2094
    %2175 = vmatpush.msra.mxu0 %v2093
    %2176 = vmatpush.msra.mxu0 %v2092
    %2177 = vmatpush.msra.mxu0 %v2091
    %2178 = vmatpush.msra.mxu0 %v2090
    %2179 = vmatpush.msra.mxu0 %v2089
    %2180 = vmatpush.msra.mxu0 %v2088
    %2181 = vmatmul.f32.gmra.mxu0 %v2040
    %v2182 = vpop.f32.mrf.mxu0
    %v2183 = vadd.f32 %v2154, %v2182
    %2184 = vmatmul.f32.gmra.mxu0 %v2041
    %v2185 = vpop.f32.mrf.mxu0
    %v2186 = vadd.f32 %v2157, %v2185
    %2187 = vmatmul.f32.gmra.mxu0 %v2042
    %v2188 = vpop.f32.mrf.mxu0
    %v2189 = vadd.f32 %v2160, %v2188
    %2190 = vmatmul.f32.gmra.mxu0 %v2043
    %v2191 = vpop.f32.mrf.mxu0
    %v2192 = vadd.f32 %v2163, %v2191
    %2193 = vdwg.mxu0
    %2194 = vmatpush.msra.mxu0 %v2119
    %2195 = vmatpush.msra.mxu0 %v2118
    %2196 = vmatpush.msra.mxu0 %v2117
    %2197 = vmatpush.msra.mxu0 %v2116
    %2198 = vmatpush.msra.mxu0 %v2115
    %2199 = vmatpush.msra.mxu0 %v2114
    %2200 = vmatpush.msra.mxu0 %v2113
    %2201 = vmatpush.msra.mxu0 %v2112
    %2202 = vmatpush.msra.mxu0 %v2111
    %2203 = vmatpush.msra.mxu0 %v2110
    %2204 = vmatpush.msra.mxu0 %v2109
    %2205 = vmatpush.msra.mxu0 %v2108
    %2206 = vmatpush.msra.mxu0 %v2107
    %2207 = vmatpush.msra.mxu0 %v2106
    %2208 = vmatpush.msra.mxu0 %v2105
    %2209 = vmatpush.msra.mxu0 %v2104
    %2210 = vmatmul.f32.gmra.mxu0 %v1952
    %v2211 = vpop.f32.mrf.mxu0
    %v2212 = vadd.f32 %v2183, %v2211
    %2213 = vmatmul.f32.gmra.mxu0 %v1953
    %v2214 = vpop.f32.mrf.mxu0
    %v2215 = vadd.f32 %v2186, %v2214
    %2216 = vmatmul.f32.gmra.mxu0 %v1954
    %v2217 = vpop.f32.mrf.mxu0
    %v2218 = vadd.f32 %v2189, %v2217
    %2219 = vmatmul.f32.gmra.mxu0 %v1955
    %v2220 = vpop.f32.mrf.mxu0
    %v2221 = vadd.f32 %v2192, %v2220
    %2222 = vdwg.mxu0
    %2223 = vmatpush.msra.mxu0 %v2135
    %2224 = vmatpush.msra.mxu0 %v2134
    %2225 = vmatpush.msra.mxu0 %v2133
    %2226 = vmatpush.msra.mxu0 %v2132
    %2227 = vmatpush.msra.mxu0 %v2131
    %2228 = vmatpush.msra.mxu0 %v2130
    %2229 = vmatpush.msra.mxu0 %v2129
    %2230 = vmatpush.msra.mxu0 %v2128
    %2231 = vmatpush.msra.mxu0 %v2127
    %2232 = vmatpush.msra.mxu0 %v2126
    %2233 = vmatpush.msra.mxu0 %v2125
    %2234 = vmatpush.msra.mxu0 %v2124
    %2235 = vmatpush.msra.mxu0 %v2123
    %2236 = vmatpush.msra.mxu0 %v2122
    %2237 = vmatpush.msra.mxu0 %v2121
    %2238 = vmatpush.msra.mxu0 %v2120
    %2239 = vmatmul.f32.gmra.mxu0 %v2064
    %v2240 = vpop.f32.mrf.mxu0
    %v2241 = vadd.f32 %v2212, %v2240
    %2242 = vmatmul.f32.gmra.mxu0 %v2065
    %v2243 = vpop.f32.mrf.mxu0
    %v2244 = vadd.f32 %v2215, %v2243
    %2245 = vmatmul.f32.gmra.mxu0 %v2066
    %v2246 = vpop.f32.mrf.mxu0
    %v2247 = vadd.f32 %v2218, %v2246
    %2248 = vmatmul.f32.gmra.mxu0 %v2067
    %v2249 = vpop.f32.mrf.mxu0
    %v2250 = vadd.f32 %v2221, %v2249
    %2251 = vdwg.mxu0
    %2252 = vmatpush.msra.mxu0 %v1975
    %2253 = vmatpush.msra.mxu0 %v1974
    %2254 = vmatpush.msra.mxu0 %v1973
    %2255 = vmatpush.msra.mxu0 %v1972
    %2256 = vmatpush.msra.mxu0 %v1971
    %2257 = vmatpush.msra.mxu0 %v1970
    %2258 = vmatpush.msra.mxu0 %v1969
    %2259 = vmatpush.msra.mxu0 %v1968
    %2260 = vmatpush.msra.mxu0 %v1967
    %2261 = vmatpush.msra.mxu0 %v1966
    %2262 = vmatpush.msra.mxu0 %v1965
    %2263 = vmatpush.msra.mxu0 %v1964
    %2264 = vmatpush.msra.mxu0 %v1963
    %2265 = vmatpush.msra.mxu0 %v1962
    %2266 = vmatpush.msra.mxu0 %v1961
    %2267 = vmatpush.msra.mxu0 %v1960
    %2268 = vmatmul.f32.gmra.mxu0 %v1926
    %v2269 = vpop.f32.mrf.mxu0
    %v2270 = vadd.f32 %v2241, %v2269
    %2271 = vmatmul.f32.gmra.mxu0 %v1927
    %v2272 = vpop.f32.mrf.mxu0
    %v2273 = vadd.f32 %v2244, %v2272
    %2274 = vmatmul.f32.gmra.mxu0 %v1928
    %v2275 = vpop.f32.mrf.mxu0
    %v2276 = vadd.f32 %v2247, %v2275
    %2277 = vmatmul.f32.gmra.mxu0 %v1929
    %v2278 = vpop.f32.mrf.mxu0
    %v2279 = vadd.f32 %v2250, %v2278
    %2280 = vdwg.mxu0
    %2281 = vmatpush.msra.mxu0 %v1991
    %2282 = vmatpush.msra.mxu0 %v1990
    %2283 = vmatpush.msra.mxu0 %v1989
    %2284 = vmatpush.msra.mxu0 %v1988
    %2285 = vmatpush.msra.mxu0 %v1987
    %2286 = vmatpush.msra.mxu0 %v1986
    %2287 = vmatpush.msra.mxu0 %v1985
    %2288 = vmatpush.msra.mxu0 %v1984
    %2289 = vmatpush.msra.mxu0 %v1983
    %2290 = vmatpush.msra.mxu0 %v1982
    %2291 = vmatpush.msra.mxu0 %v1981
    %2292 = vmatpush.msra.mxu0 %v1980
    %2293 = vmatpush.msra.mxu0 %v1979
    %2294 = vmatpush.msra.mxu0 %v1978
    %2295 = vmatpush.msra.mxu0 %v1977
    %2296 = vmatpush.msra.mxu0 %v1976
    %2297 = vmatmul.f32.gmra.mxu0 %v1859
    %v2298 = vpop.f32.mrf.mxu0
    %v2299 = vadd.f32 %v2270, %v2298
    %2300 = vmatmul.f32.gmra.mxu0 %v1864
    %v2301 = vpop.f32.mrf.mxu0
    %v2302 = vadd.f32 %v2273, %v2301
    %2303 = vmatmul.f32.gmra.mxu0 %v1875
    %v2304 = vpop.f32.mrf.mxu0
    %v2305 = vadd.f32 %v2276, %v2304
    %2306 = vmatmul.f32.gmra.mxu0 %v1880
    %v2307 = vpop.f32.mrf.mxu0
    %v2308 = vadd.f32 %v2279, %v2307
    %2309 = vdwg.mxu0
    %2310 = vmatpush.msra.mxu0 %v2007
    %2311 = vmatpush.msra.mxu0 %v2006
    %2312 = vmatpush.msra.mxu0 %v2005
    %2313 = vmatpush.msra.mxu0 %v2004
    %2314 = vmatpush.msra.mxu0 %v2003
    %2315 = vmatpush.msra.mxu0 %v2002
    %2316 = vmatpush.msra.mxu0 %v2001
    %2317 = vmatpush.msra.mxu0 %v2000
    %2318 = vmatpush.msra.mxu0 %v1999
    %2319 = vmatpush.msra.mxu0 %v1998
    %2320 = vmatpush.msra.mxu0 %v1997
    %2321 = vmatpush.msra.mxu0 %v1996
    %2322 = vmatpush.msra.mxu0 %v1995
    %2323 = vmatpush.msra.mxu0 %v1994
    %2324 = vmatpush.msra.mxu0 %v1993
    %2325 = vmatpush.msra.mxu0 %v1992
    %2326 = vmatmul.f32.gmra.mxu0 %v1952
    %v2327 = vpop.f32.mrf.mxu0
    %v2328 = vadd.f32 %v2299, %v2327
    %2329 = vmatmul.f32.gmra.mxu0 %v1953
    %v2330 = vpop.f32.mrf.mxu0
    %v2331 = vadd.f32 %v2302, %v2330
    %2332 = vmatmul.f32.gmra.mxu0 %v1954
    %v2333 = vpop.f32.mrf.mxu0
    %v2334 = vadd.f32 %v2305, %v2333
    %2335 = vmatmul.f32.gmra.mxu0 %v1955
    %v2336 = vpop.f32.mrf.mxu0
    %v2337 = vadd.f32 %v2308, %v2336
    %2338 = vdwg.mxu0
    %2339 = vmatpush.msra.mxu0 %v2023
    %2340 = vmatpush.msra.mxu0 %v2022
    %2341 = vmatpush.msra.mxu0 %v2021
    %2342 = vmatpush.msra.mxu0 %v2020
    %2343 = vmatpush.msra.mxu0 %v2019
    %2344 = vmatpush.msra.mxu0 %v2018
    %2345 = vmatpush.msra.mxu0 %v2017
    %2346 = vmatpush.msra.mxu0 %v2016
    %2347 = vmatpush.msra.mxu0 %v2015
    %2348 = vmatpush.msra.mxu0 %v2014
    %2349 = vmatpush.msra.mxu0 %v2013
    %2350 = vmatpush.msra.mxu0 %v2012
    %2351 = vmatpush.msra.mxu0 %v2011
    %2352 = vmatpush.msra.mxu0 %v2010
    %2353 = vmatpush.msra.mxu0 %v2009
    %2354 = vmatpush.msra.mxu0 %v2008
    %2355 = vmatmul.f32.gmra.mxu0 %v1887
    %v2356 = vpop.f32.mrf.mxu0
    %v2357 = vadd.f32 %v2328, %v2356
    %2358 = vmatmul.f32.gmra.mxu0 %v1841
    %v2359 = vpop.f32.mrf.mxu0
    %v2360 = vadd.f32 %v2331, %v2359
    %2361 = vmatmul.f32.gmra.mxu0 %v1899
    %v2362 = vpop.f32.mrf.mxu0
    %v2363 = vadd.f32 %v2334, %v2362
    %2364 = vmatmul.f32.gmra.mxu0 %v1904
    %v2365 = vpop.f32.mrf.mxu0
    %v2366 = vadd.f32 %v2337, %v2365
    %2367 = vdwg.mxu0
    %v2368 = vld [vmem:[#allocation4] sm:$0xfc]
    %v2369 = vld [vmem:[#allocation4 + $0x8] sm:$0xfc]
    %v2370 = vld [vmem:[#allocation4 + $0x20] sm:$0x3]
    %v2371 = vld [vmem:[#allocation4 + $0x28] sm:$0x3]
    %v2372 = vld [vmem:[#allocation4 + $0x20] sm:$0xf0]
    %v2373 = vld [vmem:[#allocation4 + $0x28] sm:$0xf0]
    %v2374 = vld [vmem:[#allocation4 + $0x40] sm:$0xf]
    %v2375 = vld [vmem:[#allocation4 + $0x48] sm:$0xf]
    %v2380 = vrot.slane %v2368, 2
    %v2381 = vrot.slane %v1841, 2
    %v2382 = vsel %vm930, %v2380, %v2381
    %v2383 = vrot.slane %v2369, 2
    %v2384 = vrot.slane %v1842, 2
    %v2385 = vsel %vm930, %v2383, %v2384
    %v2386 = vrot.slane %v2370, 2
    %v2387 = vsel %vm930, %v2381, %v2386
    %v2388 = vrot.slane %v2371, 2
    %v2389 = vsel %vm930, %v2384, %v2388
    %v2394 = vrot.slane %v2372, 4
    %v2395 = vrot.slane %v1847, 4
    %v2396 = vsel %vm443, %v2394, %v2395
    %v2397 = vrot.slane %v2373, 4
    %v2398 = vrot.slane %v1848, 4
    %v2399 = vsel %vm443, %v2397, %v2398
    %v2400 = vrot.slane %v2374, 4
    %v2401 = vsel %vm443, %v2395, %v2400
    %v2402 = vrot.slane %v2375, 4
    %v2403 = vsel %vm443, %v2398, %v2402
    %2408 = vrot.lane.b32.xlu0 %v2382, 120
    %v2409 = vpop.permute.xlu0 %2408
    %2410 = vrot.lane.b32.xlu0 %v2385, 120
    %v2411 = vpop.permute.xlu0 %2410
    %2412 = vrot.lane.b32.xlu0 %v2387, 120
    %v2413 = vpop.permute.xlu0 %2412
    %2414 = vrot.lane.b32.xlu0 %v2389, 120
    %v2415 = vpop.permute.xlu0 %2414
    %2416 = vrot.lane.b32.xlu0 %v2396, 120
    %v2417 = vpop.permute.xlu0 %2416
    %2418 = vrot.lane.b32.xlu0 %v2399, 120
    %v2419 = vpop.permute.xlu0 %2418
    %2420 = vrot.lane.b32.xlu0 %v2401, 120
    %v2421 = vpop.permute.xlu0 %2420
    %2422 = vrot.lane.b32.xlu0 %v2403, 120
    %v2423 = vpop.permute.xlu0 %2422
    %v2424 = vsel %vm1925, %v2409, %v2411
    %v2425 = vsel %vm1925, %v2413, %v2415
    %v2426 = vsel %vm1925, %v2417, %v2419
    %v2427 = vsel %vm1925, %v2421, %v2423
    %v2432 = vld [vmem:[%s53] sm:$0xff]
    %v2433 = vld [vmem:[%s53 + $0x8] sm:$0xff]
    %v2434 = vld [vmem:[%s53 + $0x10] sm:$0xff]
    %v2435 = vld [vmem:[%s53 + $0x18] sm:$0xff]
    %v2436 = vld [vmem:[%s53 + $0x20] sm:$0xff]
    %v2437 = vld [vmem:[%s53 + $0x28] sm:$0xff]
    %v2438 = vld [vmem:[%s53 + $0x30] sm:$0xff]
    %v2439 = vld [vmem:[%s53 + $0x38] sm:$0xff]
    %v2440 = vld [vmem:[%s53 + $0x40] sm:$0xff]
    %v2441 = vld [vmem:[%s53 + $0x48] sm:$0xff]
    %v2442 = vld [vmem:[%s53 + $0x50] sm:$0xff]
    %v2443 = vld [vmem:[%s53 + $0x58] sm:$0xff]
    %v2444 = vld [vmem:[%s53 + $0x60] sm:$0xff]
    %v2445 = vld [vmem:[%s53 + $0x68] sm:$0xff]
    %v2446 = vld [vmem:[%s53 + $0x70] sm:$0xff]
    %v2447 = vld [vmem:[%s53 + $0x78] sm:$0xff]
    %v2448 = vld [vmem:[%s53 + $0x80] sm:$0xff]
    %v2449 = vld [vmem:[%s53 + $0x88] sm:$0xff]
    %v2450 = vld [vmem:[%s53 + $0x90] sm:$0xff]
    %v2451 = vld [vmem:[%s53 + $0x98] sm:$0xff]
    %v2452 = vld [vmem:[%s53 + $0xa0] sm:$0xff]
    %v2453 = vld [vmem:[%s53 + $0xa8] sm:$0xff]
    %v2454 = vld [vmem:[%s53 + $0xb0] sm:$0xff]
    %v2455 = vld [vmem:[%s53 + $0xb8] sm:$0xff]
    %v2456 = vld [vmem:[%s53 + $0xc0] sm:$0xff]
    %v2457 = vld [vmem:[%s53 + $0xc8] sm:$0xff]
    %v2458 = vld [vmem:[%s53 + $0xd0] sm:$0xff]
    %v2459 = vld [vmem:[%s53 + $0xd8] sm:$0xff]
    %v2460 = vld [vmem:[%s53 + $0xe0] sm:$0xff]
    %v2461 = vld [vmem:[%s53 + $0xe8] sm:$0xff]
    %v2462 = vld [vmem:[%s53 + $0xf0] sm:$0xff]
    %v2463 = vld [vmem:[%s53 + $0xf8] sm:$0xff]
    %v2464 = vld [vmem:[%s53 + $0x100] sm:$0xff]
    %v2465 = vld [vmem:[%s53 + $0x108] sm:$0xff]
    %v2466 = vld [vmem:[%s53 + $0x110] sm:$0xff]
    %v2467 = vld [vmem:[%s53 + $0x118] sm:$0xff]
    %v2468 = vld [vmem:[%s53 + $0x120] sm:$0xff]
    %v2469 = vld [vmem:[%s53 + $0x128] sm:$0xff]
    %v2470 = vld [vmem:[%s53 + $0x130] sm:$0xff]
    %v2471 = vld [vmem:[%s53 + $0x138] sm:$0xff]
    %v2472 = vld [vmem:[%s53 + $0x140] sm:$0xff]
    %v2473 = vld [vmem:[%s53 + $0x148] sm:$0xff]
    %v2474 = vld [vmem:[%s53 + $0x150] sm:$0xff]
    %v2475 = vld [vmem:[%s53 + $0x158] sm:$0xff]
    %v2476 = vld [vmem:[%s53 + $0x160] sm:$0xff]
    %v2477 = vld [vmem:[%s53 + $0x168] sm:$0xff]
    %v2478 = vld [vmem:[%s53 + $0x170] sm:$0xff]
    %v2479 = vld [vmem:[%s53 + $0x178] sm:$0xff]
    %v2480 = vld [vmem:[%s53 + $0x180] sm:$0xff]
    %v2481 = vld [vmem:[%s53 + $0x188] sm:$0xff]
    %v2482 = vld [vmem:[%s53 + $0x190] sm:$0xff]
    %v2483 = vld [vmem:[%s53 + $0x198] sm:$0xff]
    %v2484 = vld [vmem:[%s53 + $0x1a0] sm:$0xff]
    %v2485 = vld [vmem:[%s53 + $0x1a8] sm:$0xff]
    %v2486 = vld [vmem:[%s53 + $0x1b0] sm:$0xff]
    %v2487 = vld [vmem:[%s53 + $0x1b8] sm:$0xff]
    %v2488 = vld [vmem:[%s53 + $0x1c0] sm:$0xff]
    %v2489 = vld [vmem:[%s53 + $0x1c8] sm:$0xff]
    %v2490 = vld [vmem:[%s53 + $0x1d0] sm:$0xff]
    %v2491 = vld [vmem:[%s53 + $0x1d8] sm:$0xff]
    %v2492 = vld [vmem:[%s53 + $0x1e0] sm:$0xff]
    %v2493 = vld [vmem:[%s53 + $0x1e8] sm:$0xff]
    %v2494 = vld [vmem:[%s53 + $0x1f0] sm:$0xff]
    %v2495 = vld [vmem:[%s53 + $0x1f8] sm:$0xff]
    %2496 = vrot.lane.b32.xlu0 %v2382, 112
    %v2497 = vpop.permute.xlu0 %2496
    %2498 = vrot.lane.b32.xlu0 %v2385, 112
    %v2499 = vpop.permute.xlu0 %2498
    %2500 = vrot.lane.b32.xlu0 %v2387, 112
    %v2501 = vpop.permute.xlu0 %2500
    %2502 = vrot.lane.b32.xlu0 %v2389, 112
    %v2503 = vpop.permute.xlu0 %2502
    %2504 = vrot.lane.b32.xlu0 %v2396, 112
    %v2505 = vpop.permute.xlu0 %2504
    %2506 = vrot.lane.b32.xlu0 %v2399, 112
    %v2507 = vpop.permute.xlu0 %2506
    %2508 = vrot.lane.b32.xlu0 %v2401, 112
    %v2509 = vpop.permute.xlu0 %2508
    %2510 = vrot.lane.b32.xlu0 %v2403, 112
    %v2511 = vpop.permute.xlu0 %2510
    %v2512 = vsel %vm946, %v2497, %v2499
    %v2513 = vsel %vm946, %v2501, %v2503
    %v2514 = vsel %vm946, %v2505, %v2507
    %v2515 = vsel %vm946, %v2509, %v2511
    %v2520 = vld [vmem:[%s55] sm:$0xff]
    %v2521 = vld [vmem:[%s55 + $0x8] sm:$0xff]
    %v2522 = vld [vmem:[%s55 + $0x10] sm:$0xff]
    %v2523 = vld [vmem:[%s55 + $0x18] sm:$0xff]
    %v2524 = vld [vmem:[%s55 + $0x20] sm:$0xff]
    %v2525 = vld [vmem:[%s55 + $0x28] sm:$0xff]
    %v2526 = vld [vmem:[%s55 + $0x30] sm:$0xff]
    %v2527 = vld [vmem:[%s55 + $0x38] sm:$0xff]
    %v2528 = vld [vmem:[%s55 + $0x40] sm:$0xff]
    %v2529 = vld [vmem:[%s55 + $0x48] sm:$0xff]
    %v2530 = vld [vmem:[%s55 + $0x50] sm:$0xff]
    %v2531 = vld [vmem:[%s55 + $0x58] sm:$0xff]
    %v2532 = vld [vmem:[%s55 + $0x60] sm:$0xff]
    %v2533 = vld [vmem:[%s55 + $0x68] sm:$0xff]
    %v2534 = vld [vmem:[%s55 + $0x70] sm:$0xff]
    %v2535 = vld [vmem:[%s55 + $0x78] sm:$0xff]
    %v2536 = vld [vmem:[%s55 + $0x80] sm:$0xff]
    %v2537 = vld [vmem:[%s55 + $0x88] sm:$0xff]
    %v2538 = vld [vmem:[%s55 + $0x90] sm:$0xff]
    %v2539 = vld [vmem:[%s55 + $0x98] sm:$0xff]
    %v2540 = vld [vmem:[%s55 + $0xa0] sm:$0xff]
    %v2541 = vld [vmem:[%s55 + $0xa8] sm:$0xff]
    %v2542 = vld [vmem:[%s55 + $0xb0] sm:$0xff]
    %v2543 = vld [vmem:[%s55 + $0xb8] sm:$0xff]
    %v2544 = vld [vmem:[%s55 + $0xc0] sm:$0xff]
    %v2545 = vld [vmem:[%s55 + $0xc8] sm:$0xff]
    %v2546 = vld [vmem:[%s55 + $0xd0] sm:$0xff]
    %v2547 = vld [vmem:[%s55 + $0xd8] sm:$0xff]
    %v2548 = vld [vmem:[%s55 + $0xe0] sm:$0xff]
    %v2549 = vld [vmem:[%s55 + $0xe8] sm:$0xff]
    %v2550 = vld [vmem:[%s55 + $0xf0] sm:$0xff]
    %v2551 = vld [vmem:[%s55 + $0xf8] sm:$0xff]
    %v2552 = vld [vmem:[%s55 + $0x100] sm:$0xff]
    %v2553 = vld [vmem:[%s55 + $0x108] sm:$0xff]
    %v2554 = vld [vmem:[%s55 + $0x110] sm:$0xff]
    %v2555 = vld [vmem:[%s55 + $0x118] sm:$0xff]
    %v2556 = vld [vmem:[%s55 + $0x120] sm:$0xff]
    %v2557 = vld [vmem:[%s55 + $0x128] sm:$0xff]
    %v2558 = vld [vmem:[%s55 + $0x130] sm:$0xff]
    %v2559 = vld [vmem:[%s55 + $0x138] sm:$0xff]
    %v2560 = vld [vmem:[%s55 + $0x140] sm:$0xff]
    %v2561 = vld [vmem:[%s55 + $0x148] sm:$0xff]
    %v2562 = vld [vmem:[%s55 + $0x150] sm:$0xff]
    %v2563 = vld [vmem:[%s55 + $0x158] sm:$0xff]
    %v2564 = vld [vmem:[%s55 + $0x160] sm:$0xff]
    %v2565 = vld [vmem:[%s55 + $0x168] sm:$0xff]
    %v2566 = vld [vmem:[%s55 + $0x170] sm:$0xff]
    %v2567 = vld [vmem:[%s55 + $0x178] sm:$0xff]
    %v2568 = vld [vmem:[%s55 + $0x180] sm:$0xff]
    %v2569 = vld [vmem:[%s55 + $0x188] sm:$0xff]
    %v2570 = vld [vmem:[%s55 + $0x190] sm:$0xff]
    %v2571 = vld [vmem:[%s55 + $0x198] sm:$0xff]
    %v2572 = vld [vmem:[%s55 + $0x1a0] sm:$0xff]
    %v2573 = vld [vmem:[%s55 + $0x1a8] sm:$0xff]
    %v2574 = vld [vmem:[%s55 + $0x1b0] sm:$0xff]
    %v2575 = vld [vmem:[%s55 + $0x1b8] sm:$0xff]
    %v2576 = vld [vmem:[%s55 + $0x1c0] sm:$0xff]
    %v2577 = vld [vmem:[%s55 + $0x1c8] sm:$0xff]
    %v2578 = vld [vmem:[%s55 + $0x1d0] sm:$0xff]
    %v2579 = vld [vmem:[%s55 + $0x1d8] sm:$0xff]
    %v2580 = vld [vmem:[%s55 + $0x1e0] sm:$0xff]
    %v2581 = vld [vmem:[%s55 + $0x1e8] sm:$0xff]
    %v2582 = vld [vmem:[%s55 + $0x1f0] sm:$0xff]
    %v2583 = vld [vmem:[%s55 + $0x1f8] sm:$0xff]
    %2584 = vmatpush.msra.mxu0 %v2535
    %2585 = vmatpush.msra.mxu0 %v2534
    %2586 = vmatpush.msra.mxu0 %v2533
    %2587 = vmatpush.msra.mxu0 %v2532
    %2588 = vmatpush.msra.mxu0 %v2531
    %2589 = vmatpush.msra.mxu0 %v2530
    %2590 = vmatpush.msra.mxu0 %v2529
    %2591 = vmatpush.msra.mxu0 %v2528
    %2592 = vmatpush.msra.mxu0 %v2527
    %2593 = vmatpush.msra.mxu0 %v2526
    %2594 = vmatpush.msra.mxu0 %v2525
    %2595 = vmatpush.msra.mxu0 %v2524
    %2596 = vmatpush.msra.mxu0 %v2523
    %2597 = vmatpush.msra.mxu0 %v2522
    %2598 = vmatpush.msra.mxu0 %v2521
    %2599 = vmatpush.msra.mxu0 %v2520
    %2600 = vmatmul.f32.gmra.mxu0 %v1926
    %v2601 = vpop.f32.mrf.mxu0
    %v2602 = vadd.f32 0.0, %v2601
    %2603 = vmatmul.f32.gmra.mxu0 %v1927
    %v2604 = vpop.f32.mrf.mxu0
    %v2605 = vadd.f32 0.0, %v2604
    %2606 = vmatmul.f32.gmra.mxu0 %v1928
    %v2607 = vpop.f32.mrf.mxu0
    %v2608 = vadd.f32 0.0, %v2607
    %2609 = vmatmul.f32.gmra.mxu0 %v1929
    %v2610 = vpop.f32.mrf.mxu0
    %v2611 = vadd.f32 0.0, %v2610
    %2612 = vdwg.mxu0
    %2613 = vmatpush.msra.mxu0 %v2551
    %2614 = vmatpush.msra.mxu0 %v2550
    %2615 = vmatpush.msra.mxu0 %v2549
    %2616 = vmatpush.msra.mxu0 %v2548
    %2617 = vmatpush.msra.mxu0 %v2547
    %2618 = vmatpush.msra.mxu0 %v2546
    %2619 = vmatpush.msra.mxu0 %v2545
    %2620 = vmatpush.msra.mxu0 %v2544
    %2621 = vmatpush.msra.mxu0 %v2543
    %2622 = vmatpush.msra.mxu0 %v2542
    %2623 = vmatpush.msra.mxu0 %v2541
    %2624 = vmatpush.msra.mxu0 %v2540
    %2625 = vmatpush.msra.mxu0 %v2539
    %2626 = vmatpush.msra.mxu0 %v2538
    %2627 = vmatpush.msra.mxu0 %v2537
    %2628 = vmatpush.msra.mxu0 %v2536
    %2629 = vmatmul.f32.gmra.mxu0 %v2040
    %v2630 = vpop.f32.mrf.mxu0
    %v2631 = vadd.f32 %v2602, %v2630
    %2632 = vmatmul.f32.gmra.mxu0 %v2041
    %v2633 = vpop.f32.mrf.mxu0
    %v2634 = vadd.f32 %v2605, %v2633
    %2635 = vmatmul.f32.gmra.mxu0 %v2042
    %v2636 = vpop.f32.mrf.mxu0
    %v2637 = vadd.f32 %v2608, %v2636
    %2638 = vmatmul.f32.gmra.mxu0 %v2043
    %v2639 = vpop.f32.mrf.mxu0
    %v2640 = vadd.f32 %v2611, %v2639
    %2641 = vdwg.mxu0
    %2642 = vmatpush.msra.mxu0 %v2567
    %2643 = vmatpush.msra.mxu0 %v2566
    %2644 = vmatpush.msra.mxu0 %v2565
    %2645 = vmatpush.msra.mxu0 %v2564
    %2646 = vmatpush.msra.mxu0 %v2563
    %2647 = vmatpush.msra.mxu0 %v2562
    %2648 = vmatpush.msra.mxu0 %v2561
    %2649 = vmatpush.msra.mxu0 %v2560
    %2650 = vmatpush.msra.mxu0 %v2559
    %2651 = vmatpush.msra.mxu0 %v2558
    %2652 = vmatpush.msra.mxu0 %v2557
    %2653 = vmatpush.msra.mxu0 %v2556
    %2654 = vmatpush.msra.mxu0 %v2555
    %2655 = vmatpush.msra.mxu0 %v2554
    %2656 = vmatpush.msra.mxu0 %v2553
    %2657 = vmatpush.msra.mxu0 %v2552
    %2658 = vmatmul.f32.gmra.mxu0 %v2424
    %v2659 = vpop.f32.mrf.mxu0
    %v2660 = vadd.f32 %v2631, %v2659
    %2661 = vmatmul.f32.gmra.mxu0 %v2425
    %v2662 = vpop.f32.mrf.mxu0
    %v2663 = vadd.f32 %v2634, %v2662
    %2664 = vmatmul.f32.gmra.mxu0 %v2426
    %v2665 = vpop.f32.mrf.mxu0
    %v2666 = vadd.f32 %v2637, %v2665
    %2667 = vmatmul.f32.gmra.mxu0 %v2427
    %v2668 = vpop.f32.mrf.mxu0
    %v2669 = vadd.f32 %v2640, %v2668
    %2670 = vdwg.mxu0
    %2671 = vmatpush.msra.mxu0 %v2583
    %2672 = vmatpush.msra.mxu0 %v2582
    %2673 = vmatpush.msra.mxu0 %v2581
    %2674 = vmatpush.msra.mxu0 %v2580
    %2675 = vmatpush.msra.mxu0 %v2579
    %2676 = vmatpush.msra.mxu0 %v2578
    %2677 = vmatpush.msra.mxu0 %v2577
    %2678 = vmatpush.msra.mxu0 %v2576
    %2679 = vmatpush.msra.mxu0 %v2575
    %2680 = vmatpush.msra.mxu0 %v2574
    %2681 = vmatpush.msra.mxu0 %v2573
    %2682 = vmatpush.msra.mxu0 %v2572
    %2683 = vmatpush.msra.mxu0 %v2571
    %2684 = vmatpush.msra.mxu0 %v2570
    %2685 = vmatpush.msra.mxu0 %v2569
    %2686 = vmatpush.msra.mxu0 %v2568
    %2687 = vmatmul.f32.gmra.mxu0 %v2512
    %v2688 = vpop.f32.mrf.mxu0
    %v2689 = vadd.f32 %v2660, %v2688
    %2690 = vmatmul.f32.gmra.mxu0 %v2513
    %v2691 = vpop.f32.mrf.mxu0
    %v2692 = vadd.f32 %v2663, %v2691
    %2693 = vmatmul.f32.gmra.mxu0 %v2514
    %v2694 = vpop.f32.mrf.mxu0
    %v2695 = vadd.f32 %v2666, %v2694
    %2696 = vmatmul.f32.gmra.mxu0 %v2515
    %v2697 = vpop.f32.mrf.mxu0
    %v2698 = vadd.f32 %v2669, %v2697
    %2699 = vdwg.mxu0
    %2700 = vmatpush.msra.mxu0 %v2447
    %2701 = vmatpush.msra.mxu0 %v2446
    %2702 = vmatpush.msra.mxu0 %v2445
    %2703 = vmatpush.msra.mxu0 %v2444
    %2704 = vmatpush.msra.mxu0 %v2443
    %2705 = vmatpush.msra.mxu0 %v2442
    %2706 = vmatpush.msra.mxu0 %v2441
    %2707 = vmatpush.msra.mxu0 %v2440
    %2708 = vmatpush.msra.mxu0 %v2439
    %2709 = vmatpush.msra.mxu0 %v2438
    %2710 = vmatpush.msra.mxu0 %v2437
    %2711 = vmatpush.msra.mxu0 %v2436
    %2712 = vmatpush.msra.mxu0 %v2435
    %2713 = vmatpush.msra.mxu0 %v2434
    %2714 = vmatpush.msra.mxu0 %v2433
    %2715 = vmatpush.msra.mxu0 %v2432
    %2716 = vmatmul.f32.gmra.mxu0 %v1926
    %v2717 = vpop.f32.mrf.mxu0
    %v2718 = vadd.f32 %v2689, %v2717
    %2719 = vmatmul.f32.gmra.mxu0 %v1927
    %v2720 = vpop.f32.mrf.mxu0
    %v2721 = vadd.f32 %v2692, %v2720
    %2722 = vmatmul.f32.gmra.mxu0 %v1928
    %v2723 = vpop.f32.mrf.mxu0
    %v2724 = vadd.f32 %v2695, %v2723
    %2725 = vmatmul.f32.gmra.mxu0 %v1929
    %v2726 = vpop.f32.mrf.mxu0
    %v2727 = vadd.f32 %v2698, %v2726
    %2728 = vdwg.mxu0
    %2729 = vmatpush.msra.mxu0 %v2463
    %2730 = vmatpush.msra.mxu0 %v2462
    %2731 = vmatpush.msra.mxu0 %v2461
    %2732 = vmatpush.msra.mxu0 %v2460
    %2733 = vmatpush.msra.mxu0 %v2459
    %2734 = vmatpush.msra.mxu0 %v2458
    %2735 = vmatpush.msra.mxu0 %v2457
    %2736 = vmatpush.msra.mxu0 %v2456
    %2737 = vmatpush.msra.mxu0 %v2455
    %2738 = vmatpush.msra.mxu0 %v2454
    %2739 = vmatpush.msra.mxu0 %v2453
    %2740 = vmatpush.msra.mxu0 %v2452
    %2741 = vmatpush.msra.mxu0 %v2451
    %2742 = vmatpush.msra.mxu0 %v2450
    %2743 = vmatpush.msra.mxu0 %v2449
    %2744 = vmatpush.msra.mxu0 %v2448
    %2745 = vmatmul.f32.gmra.mxu0 %v1859
    %v2746 = vpop.f32.mrf.mxu0
    %v2747 = vadd.f32 %v2718, %v2746
    %2748 = vmatmul.f32.gmra.mxu0 %v1864
    %v2749 = vpop.f32.mrf.mxu0
    %v2750 = vadd.f32 %v2721, %v2749
    %2751 = vmatmul.f32.gmra.mxu0 %v1875
    %v2752 = vpop.f32.mrf.mxu0
    %v2753 = vadd.f32 %v2724, %v2752
    %2754 = vmatmul.f32.gmra.mxu0 %v1880
    %v2755 = vpop.f32.mrf.mxu0
    %v2756 = vadd.f32 %v2727, %v2755
    %2757 = vdwg.mxu0
    %2758 = vmatpush.msra.mxu0 %v2479
    %2759 = vmatpush.msra.mxu0 %v2478
    %2760 = vmatpush.msra.mxu0 %v2477
    %2761 = vmatpush.msra.mxu0 %v2476
    %2762 = vmatpush.msra.mxu0 %v2475
    %2763 = vmatpush.msra.mxu0 %v2474
    %2764 = vmatpush.msra.mxu0 %v2473
    %2765 = vmatpush.msra.mxu0 %v2472
    %2766 = vmatpush.msra.mxu0 %v2471
    %2767 = vmatpush.msra.mxu0 %v2470
    %2768 = vmatpush.msra.mxu0 %v2469
    %2769 = vmatpush.msra.mxu0 %v2468
    %2770 = vmatpush.msra.mxu0 %v2467
    %2771 = vmatpush.msra.mxu0 %v2466
    %2772 = vmatpush.msra.mxu0 %v2465
    %2773 = vmatpush.msra.mxu0 %v2464
    %2774 = vmatmul.f32.gmra.mxu0 %v2424
    %v2775 = vpop.f32.mrf.mxu0
    %v2776 = vadd.f32 %v2747, %v2775
    %2777 = vmatmul.f32.gmra.mxu0 %v2425
    %v2778 = vpop.f32.mrf.mxu0
    %v2779 = vadd.f32 %v2750, %v2778
    %2780 = vmatmul.f32.gmra.mxu0 %v2426
    %v2781 = vpop.f32.mrf.mxu0
    %v2782 = vadd.f32 %v2753, %v2781
    %2783 = vmatmul.f32.gmra.mxu0 %v2427
    %v2784 = vpop.f32.mrf.mxu0
    %v2785 = vadd.f32 %v2756, %v2784
    %2786 = vdwg.mxu0
    %2787 = vmatpush.msra.mxu0 %v2495
    %2788 = vmatpush.msra.mxu0 %v2494
    %2789 = vmatpush.msra.mxu0 %v2493
    %2790 = vmatpush.msra.mxu0 %v2492
    %2791 = vmatpush.msra.mxu0 %v2491
    %2792 = vmatpush.msra.mxu0 %v2490
    %2793 = vmatpush.msra.mxu0 %v2489
    %2794 = vmatpush.msra.mxu0 %v2488
    %2795 = vmatpush.msra.mxu0 %v2487
    %2796 = vmatpush.msra.mxu0 %v2486
    %2797 = vmatpush.msra.mxu0 %v2485
    %2798 = vmatpush.msra.mxu0 %v2484
    %2799 = vmatpush.msra.mxu0 %v2483
    %2800 = vmatpush.msra.mxu0 %v2482
    %2801 = vmatpush.msra.mxu0 %v2481
    %2802 = vmatpush.msra.mxu0 %v2480
    %2803 = vmatmul.f32.gmra.mxu0 %v2382
    %v2804 = vpop.f32.mrf.mxu0
    %v2805 = vadd.f32 %v2776, %v2804
    %2806 = vmatmul.f32.gmra.mxu0 %v2387
    %v2807 = vpop.f32.mrf.mxu0
    %v2808 = vadd.f32 %v2779, %v2807
    %2809 = vmatmul.f32.gmra.mxu0 %v2396
    %v2810 = vpop.f32.mrf.mxu0
    %v2811 = vadd.f32 %v2782, %v2810
    %2812 = vmatmul.f32.gmra.mxu0 %v2401
    %v2813 = vpop.f32.mrf.mxu0
    %v2814 = vadd.f32 %v2785, %v2813
    %2815 = vdwg.mxu0
    %v2816 = vld [vmem:[%s57] sm:$0xff]
    %v2817 = vld [vmem:[%s57 + $0x8] sm:$0xff]
    %v2818 = vld [vmem:[%s57 + $0x10] sm:$0xff]
    %v2819 = vld [vmem:[%s57 + $0x18] sm:$0xff]
    %v2820 = vld [vmem:[%s57 + $0x20] sm:$0xff]
    %v2821 = vld [vmem:[%s57 + $0x28] sm:$0xff]
    %v2822 = vld [vmem:[%s57 + $0x30] sm:$0xff]
    %v2823 = vld [vmem:[%s57 + $0x38] sm:$0xff]
    %v2824 = vld [vmem:[%s59] sm:$0xff]
    %v2825 = vld [vmem:[%s59 + $0x8] sm:$0xff]
    %v2826 = vld [vmem:[%s59 + $0x10] sm:$0xff]
    %v2827 = vld [vmem:[%s59 + $0x18] sm:$0xff]
    %v2828 = vld [vmem:[%s59 + $0x20] sm:$0xff]
    %v2829 = vld [vmem:[%s59 + $0x28] sm:$0xff]
    %v2830 = vld [vmem:[%s59 + $0x30] sm:$0xff]
    %v2831 = vld [vmem:[%s59 + $0x38] sm:$0xff]
    %v2833 = vsel %vm244, %v2824, 0
    %v2836 = vsel %vm244, %v2825, 0
    %v2839 = vsel %vm244, %v2826, 0
    %v2842 = vsel %vm244, %v2827, 0
    %v2845 = vsel %vm244, %v2828, 0
    %v2848 = vsel %vm244, %v2829, 0
    %v2851 = vsel %vm244, %v2830, 0
    %v2854 = vsel %vm244, %v2831, 0
    %2856 = vmatpush.msra.mxu0 0.0
    %2857 = vmatpush.msra.mxu0 0.0
    %2858 = vmatpush.msra.mxu0 0.0
    %2859 = vmatpush.msra.mxu0 0.0
    %2860 = vmatpush.msra.mxu0 0.0
    %2861 = vmatpush.msra.mxu0 0.0
    %2862 = vmatpush.msra.mxu0 0.0
    %2863 = vmatpush.msra.mxu0 0.0
    %2864 = vmatpush.msra.mxu0 0.0
    %2865 = vmatpush.msra.mxu0 0.0
    %2866 = vmatpush.msra.mxu0 0.0
    %2867 = vmatpush.msra.mxu0 0.0
    %2868 = vmatpush.msra.mxu0 %v2814
    %2869 = vmatpush.msra.mxu0 %v2811
    %2870 = vmatpush.msra.mxu0 %v2808
    %2871 = vmatpush.msra.mxu0 %v2805
    %2872 = vmatmul.f32.gmra.mxu0 %v2833
    %v2873 = vpop.f32.mrf.mxu0
    %v2874 = vadd.f32 0.0, %v2873
    %2875 = vmatmul.f32.gmra.mxu0 %v2836
    %v2876 = vpop.f32.mrf.mxu0
    %v2877 = vadd.f32 0.0, %v2876
    %2878 = vmatmul.f32.gmra.mxu0 %v2839
    %v2879 = vpop.f32.mrf.mxu0
    %v2880 = vadd.f32 0.0, %v2879
    %2881 = vmatmul.f32.gmra.mxu0 %v2842
    %v2882 = vpop.f32.mrf.mxu0
    %v2883 = vadd.f32 0.0, %v2882
    %2884 = vmatmul.f32.gmra.mxu0 %v2845
    %v2885 = vpop.f32.mrf.mxu0
    %v2886 = vadd.f32 0.0, %v2885
    %2887 = vmatmul.f32.gmra.mxu0 %v2848
    %v2888 = vpop.f32.mrf.mxu0
    %v2889 = vadd.f32 0.0, %v2888
    %2890 = vmatmul.f32.gmra.mxu0 %v2851
    %v2891 = vpop.f32.mrf.mxu0
    %v2892 = vadd.f32 0.0, %v2891
    %2893 = vmatmul.f32.gmra.mxu0 %v2854
    %v2894 = vpop.f32.mrf.mxu0
    %v2895 = vadd.f32 0.0, %v2894
    %2896 = vdwg.mxu0
    %v2898 = vsel %vm244, %v2816, 0
    %v2901 = vsel %vm244, %v2817, 0
    %v2904 = vsel %vm244, %v2818, 0
    %v2907 = vsel %vm244, %v2819, 0
    %v2910 = vsel %vm244, %v2820, 0
    %v2913 = vsel %vm244, %v2821, 0
    %v2916 = vsel %vm244, %v2822, 0
    %v2919 = vsel %vm244, %v2823, 0
    %2921 = vmatpush.msra.mxu0 0.0
    %2922 = vmatpush.msra.mxu0 0.0
    %2923 = vmatpush.msra.mxu0 0.0
    %2924 = vmatpush.msra.mxu0 0.0
    %2925 = vmatpush.msra.mxu0 0.0
    %2926 = vmatpush.msra.mxu0 0.0
    %2927 = vmatpush.msra.mxu0 0.0
    %2928 = vmatpush.msra.mxu0 0.0
    %2929 = vmatpush.msra.mxu0 0.0
    %2930 = vmatpush.msra.mxu0 0.0
    %2931 = vmatpush.msra.mxu0 0.0
    %2932 = vmatpush.msra.mxu0 0.0
    %2933 = vmatpush.msra.mxu0 %v2366
    %2934 = vmatpush.msra.mxu0 %v2363
    %2935 = vmatpush.msra.mxu0 %v2360
    %2936 = vmatpush.msra.mxu0 %v2357
    %2937 = vmatmul.f32.gmra.mxu0 %v2898
    %v2938 = vpop.f32.mrf.mxu0
    %v2939 = vadd.f32 %v2874, %v2938
    %2940 = vmatmul.f32.gmra.mxu0 %v2901
    %v2941 = vpop.f32.mrf.mxu0
    %v2942 = vadd.f32 %v2877, %v2941
    %2943 = vmatmul.f32.gmra.mxu0 %v2904
    %v2944 = vpop.f32.mrf.mxu0
    %v2945 = vadd.f32 %v2880, %v2944
    %2946 = vmatmul.f32.gmra.mxu0 %v2907
    %v2947 = vpop.f32.mrf.mxu0
    %v2948 = vadd.f32 %v2883, %v2947
    %2949 = vmatmul.f32.gmra.mxu0 %v2910
    %v2950 = vpop.f32.mrf.mxu0
    %v2951 = vadd.f32 %v2886, %v2950
    %2952 = vmatmul.f32.gmra.mxu0 %v2913
    %v2953 = vpop.f32.mrf.mxu0
    %v2954 = vadd.f32 %v2889, %v2953
    %2955 = vmatmul.f32.gmra.mxu0 %v2916
    %v2956 = vpop.f32.mrf.mxu0
    %v2957 = vadd.f32 %v2892, %v2956
    %2958 = vmatmul.f32.gmra.mxu0 %v2919
    %v2959 = vpop.f32.mrf.mxu0
    %v2960 = vadd.f32 %v2895, %v2959
    %2961 = vdwg.mxu0
    %v2962 = vld [vmem:[#allocation13] sm:$0xff]
    %v2963 = vld [vmem:[#allocation13 + $0x8] sm:$0xff]
    %v2964 = vld [vmem:[#allocation13 + $0x10] sm:$0xff]
    %v2965 = vld [vmem:[#allocation13 + $0x18] sm:$0xff]
    %v2966 = vld [vmem:[#allocation13 + $0x20] sm:$0xff]
    %v2967 = vld [vmem:[#allocation13 + $0x28] sm:$0xff]
    %v2968 = vld [vmem:[#allocation13 + $0x30] sm:$0xff]
    %v2969 = vld [vmem:[#allocation13 + $0x38] sm:$0xff]
    %v2970 = vadd.f32 %v2939, %v2962
    %v2971 = vadd.f32 %v2942, %v2963
    %v2972 = vadd.f32 %v2945, %v2964
    %v2973 = vadd.f32 %v2948, %v2965
    %v2974 = vadd.f32 %v2951, %v2966
    %v2975 = vadd.f32 %v2954, %v2967
    %v2976 = vadd.f32 %v2957, %v2968
    %v2977 = vadd.f32 %v2960, %v2969
    %v2978 = vld [vmem:[#allocation14] sm:$0xff]
    %v2979 = vld [vmem:[#allocation14 + $0x8] sm:$0xff]
    %v2980 = vld [vmem:[#allocation14 + $0x10] sm:$0xff]
    %v2981 = vld [vmem:[#allocation14 + $0x18] sm:$0xff]
    %v2982 = vld [vmem:[#allocation14 + $0x20] sm:$0xff]
    %v2983 = vld [vmem:[#allocation14 + $0x28] sm:$0xff]
    %v2984 = vld [vmem:[#allocation14 + $0x30] sm:$0xff]
    %v2985 = vld [vmem:[#allocation14 + $0x38] sm:$0xff]
    %v2986 = vadd.f32 %v2970, %v2978
    %v2987 = vadd.f32 %v2971, %v2979
    %v2988 = vadd.f32 %v2972, %v2980
    %v2989 = vadd.f32 %v2973, %v2981
    %v2990 = vadd.f32 %v2974, %v2982
    %v2991 = vadd.f32 %v2975, %v2983
    %v2992 = vadd.f32 %v2976, %v2984
    %v2993 = vadd.f32 %v2977, %v2985
    %v2994 = vadd.f32 %v2986, 0.5
    %v2995 = vadd.f32 %v2987, 0.5
    %v2996 = vadd.f32 %v2988, 0.5
    %v2997 = vadd.f32 %v2989, 0.5
    %v2998 = vadd.f32 %v2990, 0.5
    %v2999 = vadd.f32 %v2991, 0.5
    %v3000 = vadd.f32 %v2992, 0.5
    %v3001 = vadd.f32 %v2993, 0.5
    %v3002 = vmul.f32 %v2994, 255.0
    %v3003 = vmul.f32 %v2995, 255.0
    %v3004 = vmul.f32 %v2996, 255.0
    %v3005 = vmul.f32 %v2997, 255.0
    %v3006 = vmul.f32 %v2998, 255.0
    %v3007 = vmul.f32 %v2999, 255.0
    %v3008 = vmul.f32 %v3000, 255.0
    %v3009 = vmul.f32 %v3001, 255.0
    %3010 = vst.msk [vmem:[#allocation16] sm:$0xff] %vm244, %v2970
    %3011 = vst.msk [vmem:[#allocation16 + $0x8] sm:$0xff] %vm244, %v2971
    %3012 = vst.msk [vmem:[#allocation16 + $0x10] sm:$0xff] %vm244, %v2972
    %3013 = vst.msk [vmem:[#allocation16 + $0x18] sm:$0xff] %vm244, %v2973
    %3014 = vst.msk [vmem:[#allocation17] sm:$0xff] %vm244, %v3002
    %3015 = vst.msk [vmem:[#allocation17 + $0x8] sm:$0xff] %vm244, %v3003
    %3016 = vst.msk [vmem:[#allocation17 + $0x10] sm:$0xff] %vm244, %v3004
    %3017 = vst.msk [vmem:[#allocation17 + $0x18] sm:$0xff] %vm244, %v3005
    %3022 = vrot.lane.b32.xlu0 %v2970, 96
    %v3023 = vpop.permute.xlu0 %3022
    %3024 = vrot.lane.b32.xlu0 %v2971, 96
    %v3025 = vpop.permute.xlu0 %3024
    %3026 = vrot.lane.b32.xlu0 %v2972, 96
    %v3027 = vpop.permute.xlu0 %3026
    %3028 = vrot.lane.b32.xlu0 %v2973, 96
    %v3029 = vpop.permute.xlu0 %3028
    %s3034 = scalar_lea.vmem [#allocation16], 32
    %3035 = vst.msk [vmem:[%s3034] sm:$0xff] %vm244, %v3023
    %3036 = vst.msk [vmem:[%s3034 + $0x8] sm:$0xff] %vm244, %v3025
    %3037 = vst.msk [vmem:[%s3034 + $0x10] sm:$0xff] %vm244, %v3027
    %3038 = vst.msk [vmem:[%s3034 + $0x18] sm:$0xff] %vm244, %v3029
    %3043 = vrot.lane.b32.xlu0 %v3002, 96
    %v3044 = vpop.permute.xlu0 %3043
    %3045 = vrot.lane.b32.xlu0 %v3003, 96
    %v3046 = vpop.permute.xlu0 %3045
    %3047 = vrot.lane.b32.xlu0 %v3004, 96
    %v3048 = vpop.permute.xlu0 %3047
    %3049 = vrot.lane.b32.xlu0 %v3005, 96
    %v3050 = vpop.permute.xlu0 %3049
    %s3055 = scalar_lea.vmem [#allocation17], 32
    %3056 = vst.msk [vmem:[%s3055] sm:$0xff] %vm244, %v3044
    %3057 = vst.msk [vmem:[%s3055 + $0x8] sm:$0xff] %vm244, %v3046
    %3058 = vst.msk [vmem:[%s3055 + $0x10] sm:$0xff] %vm244, %v3048
    %3059 = vst.msk [vmem:[%s3055 + $0x18] sm:$0xff] %vm244, %v3050
    %3060 = vrot.lane.b32.xlu0 %v2970, 64
    %v3061 = vpop.permute.xlu0 %3060
    %3062 = vrot.lane.b32.xlu0 %v2971, 64
    %v3063 = vpop.permute.xlu0 %3062
    %3064 = vrot.lane.b32.xlu0 %v2972, 64
    %v3065 = vpop.permute.xlu0 %3064
    %3066 = vrot.lane.b32.xlu0 %v2973, 64
    %v3067 = vpop.permute.xlu0 %3066
    %s3072 = scalar_lea.vmem [#allocation16], 64
    %3073 = vst.msk [vmem:[%s3072] sm:$0xff] %vm244, %v3061
    %3074 = vst.msk [vmem:[%s3072 + $0x8] sm:$0xff] %vm244, %v3063
    %3075 = vst.msk [vmem:[%s3072 + $0x10] sm:$0xff] %vm244, %v3065
    %3076 = vst.msk [vmem:[%s3072 + $0x18] sm:$0xff] %vm244, %v3067
    %3077 = vrot.lane.b32.xlu0 %v3002, 64
    %v3078 = vpop.permute.xlu0 %3077
    %3079 = vrot.lane.b32.xlu0 %v3003, 64
    %v3080 = vpop.permute.xlu0 %3079
    %3081 = vrot.lane.b32.xlu0 %v3004, 64
    %v3082 = vpop.permute.xlu0 %3081
    %3083 = vrot.lane.b32.xlu0 %v3005, 64
    %v3084 = vpop.permute.xlu0 %3083
    %s3089 = scalar_lea.vmem [#allocation17], 64
    %3090 = vst.msk [vmem:[%s3089] sm:$0xff] %vm244, %v3078
    %3091 = vst.msk [vmem:[%s3089 + $0x8] sm:$0xff] %vm244, %v3080
    %3092 = vst.msk [vmem:[%s3089 + $0x10] sm:$0xff] %vm244, %v3082
    %3093 = vst.msk [vmem:[%s3089 + $0x18] sm:$0xff] %vm244, %v3084
    %s3094 = scalar_lea.vmem [#allocation16], 96
    %3095 = vst.msk [vmem:[%s3094] sm:$0xff] %vm244, %v2974
    %3096 = vst.msk [vmem:[%s3094 + $0x8] sm:$0xff] %vm244, %v2975
    %3097 = vst.msk [vmem:[%s3094 + $0x10] sm:$0xff] %vm244, %v2976
    %3098 = vst.msk [vmem:[%s3094 + $0x18] sm:$0xff] %vm244, %v2977
    %s3099 = scalar_lea.vmem [#allocation17], 96
    %3100 = vst.msk [vmem:[%s3099] sm:$0xff] %vm244, %v3006
    %3101 = vst.msk [vmem:[%s3099 + $0x8] sm:$0xff] %vm244, %v3007
    %3102 = vst.msk [vmem:[%s3099 + $0x10] sm:$0xff] %vm244, %v3008
    %3103 = vst.msk [vmem:[%s3099 + $0x18] sm:$0xff] %vm244, %v3009
    %3108 = vrot.lane.b32.xlu0 %v2974, 96
    %v3109 = vpop.permute.xlu0 %3108
    %3110 = vrot.lane.b32.xlu0 %v2975, 96
    %v3111 = vpop.permute.xlu0 %3110
    %3112 = vrot.lane.b32.xlu0 %v2976, 96
    %v3113 = vpop.permute.xlu0 %3112
    %3114 = vrot.lane.b32.xlu0 %v2977, 96
    %v3115 = vpop.permute.xlu0 %3114
    %s3120 = scalar_lea.vmem [#allocation16], 128
    %3121 = vst.msk [vmem:[%s3120] sm:$0xff] %vm244, %v3109
    %3122 = vst.msk [vmem:[%s3120 + $0x8] sm:$0xff] %vm244, %v3111
    %3123 = vst.msk [vmem:[%s3120 + $0x10] sm:$0xff] %vm244, %v3113
    %3124 = vst.msk [vmem:[%s3120 + $0x18] sm:$0xff] %vm244, %v3115
    %3129 = vrot.lane.b32.xlu0 %v3006, 96
    %v3130 = vpop.permute.xlu0 %3129
    %3131 = vrot.lane.b32.xlu0 %v3007, 96
    %v3132 = vpop.permute.xlu0 %3131
    %3133 = vrot.lane.b32.xlu0 %v3008, 96
    %v3134 = vpop.permute.xlu0 %3133
    %3135 = vrot.lane.b32.xlu0 %v3009, 96
    %v3136 = vpop.permute.xlu0 %3135
    %s3141 = scalar_lea.vmem [#allocation17], 128
    %3142 = vst.msk [vmem:[%s3141] sm:$0xff] %vm244, %v3130
    %3143 = vst.msk [vmem:[%s3141 + $0x8] sm:$0xff] %vm244, %v3132
    %3144 = vst.msk [vmem:[%s3141 + $0x10] sm:$0xff] %vm244, %v3134
    %3145 = vst.msk [vmem:[%s3141 + $0x18] sm:$0xff] %vm244, %v3136
    %3146 = vrot.lane.b32.xlu0 %v2974, 64
    %v3147 = vpop.permute.xlu0 %3146
    %3148 = vrot.lane.b32.xlu0 %v2975, 64
    %v3149 = vpop.permute.xlu0 %3148
    %3150 = vrot.lane.b32.xlu0 %v2976, 64
    %v3151 = vpop.permute.xlu0 %3150
    %3152 = vrot.lane.b32.xlu0 %v2977, 64
    %v3153 = vpop.permute.xlu0 %3152
    %s3158 = scalar_lea.vmem [#allocation16], 160
    %3159 = vst.msk [vmem:[%s3158] sm:$0xff] %vm244, %v3147
    %3160 = vst.msk [vmem:[%s3158 + $0x8] sm:$0xff] %vm244, %v3149
    %3161 = vst.msk [vmem:[%s3158 + $0x10] sm:$0xff] %vm244, %v3151
    %3162 = vst.msk [vmem:[%s3158 + $0x18] sm:$0xff] %vm244, %v3153
    %3163 = vrot.lane.b32.xlu0 %v3006, 64
    %v3164 = vpop.permute.xlu0 %3163
    %3165 = vrot.lane.b32.xlu0 %v3007, 64
    %v3166 = vpop.permute.xlu0 %3165
    %3167 = vrot.lane.b32.xlu0 %v3008, 64
    %v3168 = vpop.permute.xlu0 %3167
    %3169 = vrot.lane.b32.xlu0 %v3009, 64
    %v3170 = vpop.permute.xlu0 %3169
    %s3175 = scalar_lea.vmem [#allocation17], 160
    %3176 = vst.msk [vmem:[%s3175] sm:$0xff] %vm244, %v3164
    %3177 = vst.msk [vmem:[%s3175 + $0x8] sm:$0xff] %vm244, %v3166
    %3178 = vst.msk [vmem:[%s3175 + $0x10] sm:$0xff] %vm244, %v3168
    %3179 = vst.msk [vmem:[%s3175 + $0x18] sm:$0xff] %vm244, %v3170
    // Predicated region
    $region154: #{face_decoder_frontal.1} parent=1 // pred_check
      _
    $region155: #{face_decoder_frontal.1} parent=1 // pred_check_branch
      %3181 = sbr.rel (0) target = $region157
    $region156: #{face_decoder_frontal.1} parent=1 // pred_region
      _
    $region157: #{face_decoder_frontal.1} parent=1 // pred_fallthru
      _
    // Predicated region
    $region158: #{face_decoder_frontal.1} parent=1 // pred_check
      _
    $region159: #{face_decoder_frontal.1} parent=1 // pred_check_branch
      %3183 = sbr.rel (0) target = $region161
    $region160: #{face_decoder_frontal.1} parent=1 // pred_region
      %3185 = vsyncadd [#allocation7], 0
      %s3186 = sshll.u32 [#allocation16], 4
      %s3187 = int_to_ptr.vmem [resolvable:$true] %s3186
      %s3188 = sshll.u32 %s67, 4
      %s3189 = int_to_ptr.hbm [resolvable:$true] %s3188
      %3194 = dma.vmem_to_hbm [thread:$0]  %s3187, 3072, %s3189, [#allocation7], 128, 128, 8
    $region161: #{face_decoder_frontal.1} parent=1 // pred_fallthru
      _
    // Predicated region
    $region162: #{face_decoder_frontal.1} parent=1 // pred_check
      _
    $region163: #{face_decoder_frontal.1} parent=1 // pred_check_branch
      %3196 = sbr.rel (0) target = $region165
    $region164: #{face_decoder_frontal.1} parent=1 // pred_region
      %3198 = vsyncadd [#allocation18], 0
      %s3199 = sshll.u32 [#allocation17], 4
      %s3200 = int_to_ptr.vmem [resolvable:$true] %s3199
      %s3201 = sshll.u32 %s69, 4
      %s3202 = int_to_ptr.hbm [resolvable:$true] %s3201
      %3207 = dma.vmem_to_hbm [thread:$0]  %s3200, 3072, %s3202, [#allocation18], 128, 128, 8
    $region165: #{face_decoder_frontal.1} parent=1 // pred_fallthru
      _
    // Predicated region
    $region166: #{face_decoder_frontal.1} parent=1 // pred_check
      _
    $region167: #{face_decoder_frontal.1} parent=1 // pred_check_branch
      %3209 = sbr.rel (0) target = $region169
    $region168: #{face_decoder_frontal.1} parent=1 // pred_region
      _
    $region169: #{face_decoder_frontal.1} parent=1 // pred_fallthru
      _
    // Predicated region
    $region170: #{face_decoder_frontal.1} parent=1 // pred_check
      _
    $region171: #{face_decoder_frontal.1} parent=1 // pred_check_branch
      %3211 = sbr.rel (0) target = $region173
    $region172: #{face_decoder_frontal.1} parent=1 // pred_region
      %3213 = dma.done [#allocation7], 3072
    $region173: #{face_decoder_frontal.1} parent=1 // pred_fallthru
      _
    // Predicated region
    $region174: #{face_decoder_frontal.1} parent=1 // pred_check
      _
    $region175: #{face_decoder_frontal.1} parent=1 // pred_check_branch
      %3215 = sbr.rel (0) target = $region177
    $region176: #{face_decoder_frontal.1} parent=1 // pred_region
      %3217 = dma.done [#allocation18], 3072
    $region177: #{face_decoder_frontal.1} parent=1 // pred_fallthru
      _
    %3218 = vsyncpa [#allocation6], 1
    %3219 = vsyncpa [#allocation9], 1
    %3220 = vsyncpa [#allocation12], 1
    %3221 = vsyncpa [#allocation15], 1
    %3222 = vsyncpa [#allocation7], 1
    %3223 = vsyncpa [#allocation18], 1

</llo_original>
